<compile_context>
chip_gen: v7x
topology: tpu7x:2x2x1
jax: 0.10.0
libtpu: 0.0.40
codegen_flags: <defaults>
</compile_context>

<pallas_src>
import functools

import jax
import jax.numpy as jnp
from jax.experimental import pallas as pl
from jax.experimental.pallas import tpu as pltpu

BN_EPS = 1e-5


def _tile(dim, candidates):
    """Largest candidate tile that exactly divides dim, else the full dim."""
    for c in candidates:
        if c <= dim and dim % c == 0:
            return c
    return dim


# ----------------------- tiled matmul (+bias +ReLU) kernel ------------------

def _mm_kernel(x_ref, w_ref, b_ref, o_ref, acc_ref, *, relu):
    @pl.when(pl.program_id(2) == 0)
    def _():
        acc_ref[...] = jnp.zeros_like(acc_ref)

    acc_ref[...] += jnp.dot(x_ref[...], w_ref[...],
                            preferred_element_type=jnp.float32)

    @pl.when(pl.program_id(2) == pl.num_programs(2) - 1)
    def _():
        y = acc_ref[...] + b_ref[...]
        if relu:
            y = jnp.maximum(y, 0.0)
        o_ref[...] = y.astype(o_ref.dtype)


def pallas_matmul(x, w, b, *, relu=False, out_dtype=jnp.float32):
    """Tiled (1x1-conv-as-matmul) + bias + optional ReLU. bf16 operands, f32 acc."""
    M, K = x.shape
    N = w.shape[1]
    TM = _tile(M, (256, 128))
    TN = _tile(N, (256, 128))
    TK = _tile(K, (512, 256, 128))
    grid = (M // TM, N // TN, K // TK)
    kern = functools.partial(_mm_kernel, relu=relu)
    bytes_acc = 2 * (M * K + K * N) + M * N * jnp.dtype(out_dtype).itemsize + 4 * N
    return pl.pallas_call(
        kern,
        out_shape=jax.ShapeDtypeStruct((M, N), out_dtype),
        grid=grid,
        in_specs=[pl.BlockSpec((TM, TK), lambda i, j, k: (i, k)),
                  pl.BlockSpec((TK, TN), lambda i, j, k: (k, j)),
                  pl.BlockSpec((1, TN), lambda i, j, k: (0, j))],
        out_specs=pl.BlockSpec((TM, TN), lambda i, j, k: (i, j)),
        scratch_shapes=[pltpu.VMEM((TM, TN), jnp.float32)],
        compiler_params=pltpu.CompilerParams(
            dimension_semantics=("parallel", "parallel", "arbitrary"),
            vmem_limit_bytes=64 * 1024 * 1024),
        cost_estimate=pl.CostEstimate(flops=2 * M * N * K, transcendentals=0,
                                      bytes_accessed=int(bytes_acc)),
    )(x.astype(jnp.bfloat16), w.astype(jnp.bfloat16),
      b.reshape(1, N).astype(jnp.float32))


# --------------------- fused f_pixel (two conv1x1+BN+ReLU) ------------------

def _fpixel_kernel(x_ref, w1_ref, b1_ref, w2_ref, b2_ref, o_ref):
    h = jnp.dot(x_ref[...], w1_ref[...], preferred_element_type=jnp.float32)
    h = jnp.maximum(h + b1_ref[...], 0.0)
    q = jnp.dot(h.astype(w2_ref.dtype), w2_ref[...],
                preferred_element_type=jnp.float32)
    q = jnp.maximum(q + b2_ref[...], 0.0)
    o_ref[...] = q.astype(o_ref.dtype)


def pallas_f_pixel(x2d, w1, b1, w2, b2):
    """x2d: [B*HW, Cin] -> query [B*HW, kc] (bf16), both 1x1 convs fused."""
    M, Cin = x2d.shape
    kc = w1.shape[1]
    TM = _tile(M, (256, 128))
    return pl.pallas_call(
        _fpixel_kernel,
        out_shape=jax.ShapeDtypeStruct((M, kc), jnp.bfloat16),
        grid=(M // TM,),
        in_specs=[pl.BlockSpec((TM, Cin), lambda i: (i, 0)),
                  pl.BlockSpec((Cin, kc), lambda i: (0, 0)),
                  pl.BlockSpec((1, kc), lambda i: (0, 0)),
                  pl.BlockSpec((kc, kc), lambda i: (0, 0)),
                  pl.BlockSpec((1, kc), lambda i: (0, 0))],
        out_specs=pl.BlockSpec((TM, kc), lambda i: (i, 0)),
        compiler_params=pltpu.CompilerParams(
            dimension_semantics=("parallel",),
            vmem_limit_bytes=64 * 1024 * 1024),
        cost_estimate=pl.CostEstimate(flops=2 * M * kc * (Cin + kc),
                                      transcendentals=0,
                                      bytes_accessed=int(2 * M * (Cin + kc))),
    )(x2d.astype(jnp.bfloat16), w1.astype(jnp.bfloat16),
      b1.reshape(1, kc).astype(jnp.float32),
      w2.astype(jnp.bfloat16), b2.reshape(1, kc).astype(jnp.float32))


# ------------- object attention (fused f_object/f_down + QK^T softmax @V) ---

def _attn_kernel(q_ref, pr_ref, fo_ref, fd_ref, o_ref, *, scale):
    q = q_ref[0]                                  # [HW, kc]  bf16
    pr = pr_ref[0]                                # [Kp, Cin] bf16
    # f_object / f_down fused in-kernel (proxy is tiny).
    k = jnp.dot(pr, fo_ref[...], preferred_element_type=jnp.float32)   # [Kp, kc]
    v = jnp.dot(pr, fd_ref[...], preferred_element_type=jnp.float32)   # [Kp, kc]
    # Hoist the kc**-0.5 scale onto the tiny K matrix.
    k = (k * scale).astype(jnp.bfloat16)
    # Transposed scores [Kp, HW]: torch's softmax(dim=1)==pixel dim is now the
    # lane (last) axis -> lane-dense reduction, HW lane-dense throughout.
    s = jax.lax.dot_general(k, q, (((1,), (1,)), ((), ())),
                            preferred_element_type=jnp.float32)        # [Kp, HW]
    m = jnp.max(s, axis=-1, keepdims=True)
    e = jnp.exp(s - m)
    l = jnp.sum(e, axis=-1, keepdims=True)
    # Fold 1/l into V (EUP reciprocal; avoids a full [Kp,HW] VPU multiply).
    v_scaled = v * pl.reciprocal(l, approx=True)                       # [Kp, kc]
    ctx = jax.lax.dot_general(e.astype(jnp.bfloat16),
                              v_scaled.astype(jnp.bfloat16),
                              (((0,), (0,)), ((), ())),
                              preferred_element_type=jnp.float32)      # [HW, kc]
    o_ref[0] = ctx.astype(o_ref.dtype)


def pallas_attention(q, proxy_cl, fo_w, fd_w, key_channels):
    """q: [B, HW, kc]; proxy_cl: [B, Kp, Cin] -> context [B, HW, kc] (bf16)."""
    B, HW, kc = q.shape
    Kp, Cin = proxy_cl.shape[1], proxy_cl.shape[2]
    kern = functools.partial(_attn_kernel, scale=float(key_channels) ** -0.5)
    return pl.pallas_call(
        kern,
        out_shape=jax.ShapeDtypeStruct((B, HW, kc), jnp.bfloat16),
        grid=(B,),
        in_specs=[pl.BlockSpec((1, HW, kc), lambda b: (b, 0, 0)),
                  pl.BlockSpec((1, Kp, Cin), lambda b: (b, 0, 0)),
                  pl.BlockSpec((Cin, kc), lambda b: (0, 0)),
                  pl.BlockSpec((Cin, kc), lambda b: (0, 0))],
        out_specs=pl.BlockSpec((1, HW, kc), lambda b: (b, 0, 0)),
        compiler_params=pltpu.CompilerParams(
            dimension_semantics=("parallel",),
            vmem_limit_bytes=64 * 1024 * 1024),
        cost_estimate=pl.CostEstimate(
            flops=int(2 * B * (2 * Kp * Cin * kc + 2 * HW * Kp * kc)),
            transcendentals=int(B * Kp * HW),
            bytes_accessed=int(2 * (2 * B * HW * kc + B * Kp * Cin + 2 * Cin * kc))),
    )(q.astype(jnp.bfloat16), proxy_cl.astype(jnp.bfloat16),
      fo_w.astype(jnp.bfloat16), fd_w.astype(jnp.bfloat16))


# ------------------------------ module forward ------------------------------

def object_attention_forward(x_nchw, proxy_nchw, P, key_channels):
    """ObjectAttentionBlock.forward (scale=1). x: [B,Cin,H,W], proxy: [B,Cin,K,1]."""
    B, Cin, H, W = x_nchw.shape
    Kp = proxy_nchw.shape[2] * proxy_nchw.shape[3]
    HW = H * W
    kc = key_channels

    x_cl = jnp.transpose(x_nchw, (0, 2, 3, 1)).reshape(B * HW, Cin)       # channel-last
    proxy_cl = proxy_nchw.reshape(B, Cin, Kp).transpose(0, 2, 1)          # [B, Kp, Cin]

    # query = f_pixel(x)  (two 1x1 conv + BN + ReLU, fused)
    q2d = pallas_f_pixel(x_cl, P['fp1_w'], P['fp1_b'], P['fp2_w'], P['fp2_b'])

    # key/value + sim_map + softmax(dim=pixel) + @value (fused per batch)
    ctx = pallas_attention(q2d.reshape(B, HW, kc), proxy_cl,
                           P['fo_w'], P['fd_w'], kc)                      # [B, HW, kc]

    # f_up: conv1x1(no bias) + BN + ReLU, tiled matmul
    ctx_up = pallas_matmul(ctx.reshape(B * HW, kc), P['fu_w'], P['fu_b'],
                           relu=True, out_dtype=jnp.float32)              # [B*HW, Cin]

    return ctx_up.reshape(B, H, W, Cin).transpose(0, 3, 1, 2)             # NCHW


# --------------------------- pure-JAX f32 reference -------------------------

def ref_forward(x_nchw, proxy_nchw, P, key_channels):
    B, Cin, H, W = x_nchw.shape
    Kp = proxy_nchw.shape[2] * proxy_nchw.shape[3]
    HW = H * W
    x_cl = jnp.transpose(x_nchw, (0, 2, 3, 1)).reshape(B, HW, Cin)
    pr = proxy_nchw.reshape(B, Cin, Kp).transpose(0, 2, 1)
    q = jnp.maximum(x_cl @ P['fp1_w'] + P['fp1_b'], 0.0)
    q = jnp.maximum(q @ P['fp2_w'] + P['fp2_b'], 0.0)
    k = pr @ P['fo_w']
    v = pr @ P['fd_w']
    s = jnp.einsum('bnc,bkc->bnk', q, k) * float(key_channels) ** -0.5
    p = jax.nn.softmax(s, axis=1)          # softmax over pixel dim, as in torch
    ctx = jnp.einsum('bnk,bkc->bnc', p, v)
    up = jnp.maximum(ctx @ P['fu_w'] + P['fu_b'], 0.0)
    return up.reshape(B, H, W, Cin).transpose(0, 3, 1, 2)


# ------------------------- deterministic parameters -------------------------

def fold_bn(w, gamma, beta, mean, var):
    """Fold eval-mode BatchNorm into a preceding bias-free conv ([in,out] weight)."""
    s = gamma / jnp.sqrt(var + BN_EPS)
    return w * s[None, :], beta - mean * s


def init_params(key, in_channels, key_channels):
    keys = iter(jax.random.split(key, 32))

    def nrm(shape, sc=0.1):
        return sc * jax.random.normal(next(keys), shape, jnp.float32)

    def bn(c):
        gamma = 1.0 + 0.1 * jax.random.normal(next(keys), (c,), jnp.float32)
        beta = 0.05 * jax.random.normal(next(keys), (c,), jnp.float32)
        mean = 0.05 * jax.random.normal(next(keys), (c,), jnp.float32)
        var = 0.5 + jnp.abs(jax.random.normal(next(keys), (c,), jnp.float32))
        return gamma, beta, mean, var

    P = {}
    # f_pixel: 2 x (Conv1x1 no-bias + BN + ReLU)
    P['fp1_w'], P['fp1_b'] = fold_bn(nrm((in_channels, key_channels)), *bn(key_channels))
    P['fp2_w'], P['fp2_b'] = fold_bn(nrm((key_channels, key_channels)), *bn(key_channels))
    # f_object / f_down: Conv1x1, no bias, no BN
    P['fo_w'] = nrm((in_channels, key_channels))
    P['fd_w'] = nrm((in_channels, key_channels))
    # f_up: Conv1x1 no-bias + BN + ReLU
    P['fu_w'], P['fu_b'] = fold_bn(nrm((key_channels, in_channels)), *bn(in_channels))
    return P


# ----------------------------------- main ------------------------------------

if __name__ == "__main__":
    B, Cin, H, W = 2, 32, 16, 16       # in_channels=32 -> key_channels=16
    kc = Cin // 2
    Kp = 8                             # number of object-region proxies: proxy [B,Cin,Kp,1]

    key = jax.random.PRNGKey(0)
    kx, kpr, kpar = jax.random.split(key, 3)
    x = jax.random.normal(kx, (B, Cin, H, W), jnp.float32)        # NCHW like PyTorch
    proxy = jax.random.normal(kpr, (B, Cin, Kp, 1), jnp.float32)  # [B, C, K, 1]
    P = init_params(kpar, Cin, kc)

    fwd = jax.jit(lambda xx, pp, params: object_attention_forward(xx, pp, params, kc))
    out = jax.block_until_ready(fwd(x, proxy, P))

    # sanity check against a pure-f32 JAX reference of the same math
    ref = ref_forward(x, proxy, P, kc)
    assert out.shape == (B, Cin, H, W)
    assert jnp.allclose(out, ref, atol=2e-2, rtol=2e-2), \
        float(jnp.max(jnp.abs(out - ref)))

    print("KERNEL_OK")
</pallas_src>

<mosaic_0001>
module attributes {stable_mosaic.version = 11 : i64} {
  func.func @_fpixel_kernel(%arg0: i32, %arg1: memref<256x32xbf16, #tpu.memory_space<vmem>>, %arg2: memref<32x16xbf16, #tpu.memory_space<vmem>>, %arg3: memref<1x16xf32, #tpu.memory_space<vmem>>, %arg4: memref<16x16xbf16, #tpu.memory_space<vmem>>, %arg5: memref<1x16xf32, #tpu.memory_space<vmem>>, %arg6: memref<256x16xbf16, #tpu.memory_space<vmem>>) attributes {dimension_semantics = [#tpu.dimension_semantics<parallel>], iteration_bounds = array<i64: 2>, scalar_prefetch = 0 : i64, scratch_operands = 0 : i64, tpu.core_type = #tpu.core_type<tc>, window_params = [{transform_indices = @transform_0, window_bounds = array<i64: 256, 32>}, {pipeline_mode = #tpu.pipeline_mode<synchronous>, transform_indices = @transform_1, window_bounds = array<i64: 32, 16>}, {pipeline_mode = #tpu.pipeline_mode<synchronous>, transform_indices = @transform_2, window_bounds = array<i64: 1, 16>}, {pipeline_mode = #tpu.pipeline_mode<synchronous>, transform_indices = @transform_3, window_bounds = array<i64: 16, 16>}, {pipeline_mode = #tpu.pipeline_mode<synchronous>, transform_indices = @transform_4, window_bounds = array<i64: 1, 16>}, {transform_indices = @transform_5, window_bounds = array<i64: 256, 16>}]} {
    %c0 = arith.constant 0 : index
    %c0_0 = arith.constant 0 : index
    %0 = vector.load %arg1[%c0, %c0_0] : memref<256x32xbf16, #tpu.memory_space<vmem>>, vector<256x32xbf16>
    %c0_1 = arith.constant 0 : index
    %c0_2 = arith.constant 0 : index
    %1 = vector.load %arg2[%c0_1, %c0_2] : memref<32x16xbf16, #tpu.memory_space<vmem>>, vector<32x16xbf16>
    %cst = arith.constant dense<0.000000e+00> : vector<256x16xf32>
    %2 = tpu.matmul %0, %1, %cst {dimension_numbers = #tpu.dot_dimension_numbers<[1], [0], [0], [1], [0, 0, 1, 1], [], []>} : vector<256x32xbf16>, vector<32x16xbf16>, vector<256x16xf32> -> vector<256x16xf32>
    %c0_3 = arith.constant 0 : index
    %c0_4 = arith.constant 0 : index
    %3 = vector.load %arg3[%c0_3, %c0_4] : memref<1x16xf32, #tpu.memory_space<vmem>>, vector<1x16xf32>
    %4 = vector.broadcast %3 : vector<1x16xf32> to vector<256x16xf32>
    %5 = arith.addf %2, %4 : vector<256x16xf32>
    %cst_5 = arith.constant 0.000000e+00 : f32
    %6 = vector.broadcast %cst_5 : f32 to vector<256x16xf32>
    %7 = arith.maximumf %5, %6 : vector<256x16xf32>
    %8 = arith.truncf %7 : vector<256x16xf32> to vector<256x16xbf16>
    %c0_6 = arith.constant 0 : index
    %c0_7 = arith.constant 0 : index
    %9 = vector.load %arg4[%c0_6, %c0_7] : memref<16x16xbf16, #tpu.memory_space<vmem>>, vector<16x16xbf16>
    %cst_8 = arith.constant dense<0.000000e+00> : vector<256x16xf32>
    %10 = tpu.matmul %8, %9, %cst_8 {dimension_numbers = #tpu.dot_dimension_numbers<[1], [0], [0], [1], [0, 0, 1, 1], [], []>} : vector<256x16xbf16>, vector<16x16xbf16>, vector<256x16xf32> -> vector<256x16xf32>
    %c0_9 = arith.constant 0 : index
    %c0_10 = arith.constant 0 : index
    %11 = vector.load %arg5[%c0_9, %c0_10] : memref<1x16xf32, #tpu.memory_space<vmem>>, vector<1x16xf32>
    %12 = vector.broadcast %11 : vector<1x16xf32> to vector<256x16xf32>
    %13 = arith.addf %10, %12 : vector<256x16xf32>
    %cst_11 = arith.constant 0.000000e+00 : f32
    %14 = vector.broadcast %cst_11 : f32 to vector<256x16xf32>
    %15 = arith.maximumf %13, %14 : vector<256x16xf32>
    %16 = arith.truncf %15 : vector<256x16xf32> to vector<256x16xbf16>
    %c0_12 = arith.constant 0 : index
    %c0_13 = arith.constant 0 : index
    %17 = vector.load %arg6[%c0_12, %c0_13] : memref<256x16xbf16, #tpu.memory_space<vmem>>, vector<256x16xbf16>
    tpu.vector_store %arg6[%c0_12, %c0_13], %16 {strides = array<i32>} : memref<256x16xbf16, #tpu.memory_space<vmem>>, vector<256x16xbf16>,
    return
  }
  func.func @transform_0(%arg0: i32) -> (i32, i32) {
    %c0_i32 = arith.constant 0 : i32
    %c0_i32_0 = arith.constant 0 : i32
    return %arg0, %c0_i32 : i32, i32
  }
  func.func @transform_1(%arg0: i32) -> (i32, i32) {
    %c0_i32 = arith.constant 0 : i32
    %c0_i32_0 = arith.constant 0 : i32
    %c0_i32_1 = arith.constant 0 : i32
    return %c0_i32, %c0_i32_0 : i32, i32
  }
  func.func @transform_2(%arg0: i32) -> (i32, i32) {
    %c0_i32 = arith.constant 0 : i32
    %c0_i32_0 = arith.constant 0 : i32
    %c0_i32_1 = arith.constant 0 : i32
    return %c0_i32, %c0_i32_0 : i32, i32
  }
  func.func @transform_3(%arg0: i32) -> (i32, i32) {
    %c0_i32 = arith.constant 0 : i32
    %c0_i32_0 = arith.constant 0 : i32
    %c0_i32_1 = arith.constant 0 : i32
    return %c0_i32, %c0_i32_0 : i32, i32
  }
  func.func @transform_4(%arg0: i32) -> (i32, i32) {
    %c0_i32 = arith.constant 0 : i32
    %c0_i32_0 = arith.constant 0 : i32
    %c0_i32_1 = arith.constant 0 : i32
    return %c0_i32, %c0_i32_0 : i32, i32
  }
  func.func @transform_5(%arg0: i32) -> (i32, i32) {
    %c0_i32 = arith.constant 0 : i32
    %c0_i32_0 = arith.constant 0 : i32
    return %arg0, %c0_i32 : i32, i32
  }
}

module attributes {stable_mosaic.version = 11 : i64} {
  func.func @_mm_kernel(%arg0: i32, %arg1: i32, %arg2: i32, %arg3: memref<256x16xbf16, #tpu.memory_space<vmem>>, %arg4: memref<16x32xbf16, #tpu.memory_space<vmem>>, %arg5: memref<1x32xf32, #tpu.memory_space<vmem>>, %arg6: memref<256x32xf32, #tpu.memory_space<vmem>>, %arg7: memref<256x32xf32, #tpu.memory_space<vmem>>) attributes {dimension_semantics = [#tpu.dimension_semantics<parallel>, #tpu.dimension_semantics<parallel>, #tpu.dimension_semantics<arbitrary>], iteration_bounds = array<i64: 2, 1, 1>, scalar_prefetch = 0 : i64, scratch_operands = 1 : i64, tpu.core_type = #tpu.core_type<tc>, window_params = [{transform_indices = @transform_0, window_bounds = array<i64: 256, 16>}, {transform_indices = @transform_1, window_bounds = array<i64: 16, 32>}, {transform_indices = @transform_2, window_bounds = array<i64: 1, 32>}, {transform_indices = @transform_3, window_bounds = array<i64: 256, 32>}]} {
    %c0_i32 = arith.constant 0 : i32
    %0 = arith.cmpi eq, %arg2, %c0_i32 : i32
    %1 = arith.extui %0 : i1 to i32
    %c0_i32_0 = arith.constant 0 : i32
    %2 = arith.cmpi ne, %1, %c0_i32_0 : i32
    scf.if %2 {
      %cst_10 = arith.constant 0.000000e+00 : f32
      %12 = vector.broadcast %cst_10 : f32 to vector<256x32xf32>
      %c0_11 = arith.constant 0 : index
      %c0_12 = arith.constant 0 : index
      %13 = vector.load %arg7[%c0_11, %c0_12] : memref<256x32xf32, #tpu.memory_space<vmem>>, vector<256x32xf32>
      tpu.vector_store %arg7[%c0_11, %c0_12], %12 {strides = array<i32>} : memref<256x32xf32, #tpu.memory_space<vmem>>, vector<256x32xf32>,
    } else {
    }
    %c0 = arith.constant 0 : index
    %c0_1 = arith.constant 0 : index
    %3 = vector.load %arg7[%c0, %c0_1] : memref<256x32xf32, #tpu.memory_space<vmem>>, vector<256x32xf32>
    %c0_2 = arith.constant 0 : index
    %c0_3 = arith.constant 0 : index
    %4 = vector.load %arg3[%c0_2, %c0_3] : memref<256x16xbf16, #tpu.memory_space<vmem>>, vector<256x16xbf16>
    %c0_4 = arith.constant 0 : index
    %c0_5 = arith.constant 0 : index
    %5 = vector.load %arg4[%c0_4, %c0_5] : memref<16x32xbf16, #tpu.memory_space<vmem>>, vector<16x32xbf16>
    %cst = arith.constant dense<0.000000e+00> : vector<256x32xf32>
    %6 = tpu.matmul %4, %5, %cst {dimension_numbers = #tpu.dot_dimension_numbers<[1], [0], [0], [1], [0, 0, 1, 1], [], []>} : vector<256x16xbf16>, vector<16x32xbf16>, vector<256x32xf32> -> vector<256x32xf32>
    %7 = arith.addf %3, %6 : vector<256x32xf32>
    %c0_6 = arith.constant 0 : index
    %c0_7 = arith.constant 0 : index
    %8 = vector.load %arg7[%c0_6, %c0_7] : memref<256x32xf32, #tpu.memory_space<vmem>>, vector<256x32xf32>
    tpu.vector_store %arg7[%c0_6, %c0_7], %7 {strides = array<i32>} : memref<256x32xf32, #tpu.memory_space<vmem>>, vector<256x32xf32>,
    %c0_i32_8 = arith.constant 0 : i32
    %9 = arith.cmpi eq, %arg2, %c0_i32_8 : i32
    %10 = arith.extui %9 : i1 to i32
    %c0_i32_9 = arith.constant 0 : i32
    %11 = arith.cmpi ne, %10, %c0_i32_9 : i32
    scf.if %11 {
      %c0_10 = arith.constant 0 : index
      %c0_11 = arith.constant 0 : index
      %12 = vector.load %arg7[%c0_10, %c0_11] : memref<256x32xf32, #tpu.memory_space<vmem>>, vector<256x32xf32>
      %c0_12 = arith.constant 0 : index
      %c0_13 = arith.constant 0 : index
      %13 = vector.load %arg5[%c0_12, %c0_13] : memref<1x32xf32, #tpu.memory_space<vmem>>, vector<1x32xf32>
      %14 = vector.broadcast %13 : vector<1x32xf32> to vector<256x32xf32>
      %15 = arith.addf %12, %14 : vector<256x32xf32>
      %cst_14 = arith.constant 0.000000e+00 : f32
      %16 = vector.broadcast %cst_14 : f32 to vector<256x32xf32>
      %17 = arith.maximumf %15, %16 : vector<256x32xf32>
      %c0_15 = arith.constant 0 : index
      %c0_16 = arith.constant 0 : index
      %18 = vector.load %arg6[%c0_15, %c0_16] : memref<256x32xf32, #tpu.memory_space<vmem>>, vector<256x32xf32>
      tpu.vector_store %arg6[%c0_15, %c0_16], %17 {strides = array<i32>} : memref<256x32xf32, #tpu.memory_space<vmem>>, vector<256x32xf32>,
    } else {
    }
    return
  }
  func.func @transform_0(%arg0: i32, %arg1: i32, %arg2: i32) -> (i32, i32) {
    %c0_i32 = arith.constant 0 : i32
    return %arg0, %arg2 : i32, i32
  }
  func.func @transform_1(%arg0: i32, %arg1: i32, %arg2: i32) -> (i32, i32) {
    %c0_i32 = arith.constant 0 : i32
    return %arg2, %arg1 : i32, i32
  }
  func.func @transform_2(%arg0: i32, %arg1: i32, %arg2: i32) -> (i32, i32) {
    %c0_i32 = arith.constant 0 : i32
    %c0_i32_0 = arith.constant 0 : i32
    return %c0_i32, %arg1 : i32, i32
  }
  func.func @transform_3(%arg0: i32, %arg1: i32, %arg2: i32) -> (i32, i32) {
    %c0_i32 = arith.constant 0 : i32
    return %arg0, %arg1 : i32, i32
  }
}

module attributes {stable_mosaic.version = 11 : i64} {
  func.func @_attn_kernel(%arg0: i32, %arg1: memref<1x256x16xbf16, #tpu.memory_space<vmem>>, %arg2: memref<1x8x32xbf16, #tpu.memory_space<vmem>>, %arg3: memref<32x16xbf16, #tpu.memory_space<vmem>>, %arg4: memref<32x16xbf16, #tpu.memory_space<vmem>>, %arg5: memref<1x256x16xbf16, #tpu.memory_space<vmem>>) attributes {dimension_semantics = [#tpu.dimension_semantics<parallel>], iteration_bounds = array<i64: 2>, scalar_prefetch = 0 : i64, scratch_operands = 0 : i64, tpu.core_type = #tpu.core_type<tc>, window_params = [{transform_indices = @transform_0, window_bounds = array<i64: 1, 256, 16>}, {transform_indices = @transform_1, window_bounds = array<i64: 1, 8, 32>}, {pipeline_mode = #tpu.pipeline_mode<synchronous>, transform_indices = @transform_2, window_bounds = array<i64: 32, 16>}, {pipeline_mode = #tpu.pipeline_mode<synchronous>, transform_indices = @transform_3, window_bounds = array<i64: 32, 16>}, {transform_indices = @transform_4, window_bounds = array<i64: 1, 256, 16>}]} {
    %c0 = arith.constant 0 : index
    %c0_0 = arith.constant 0 : index
    %c0_1 = arith.constant 0 : index
    %0 = vector.load %arg1[%c0, %c0_0, %c0_1] : memref<1x256x16xbf16, #tpu.memory_space<vmem>>, vector<1x256x16xbf16>
    %1 = vector.shape_cast %0 : vector<1x256x16xbf16> to vector<256x16xbf16>
    %c0_2 = arith.constant 0 : index
    %c0_3 = arith.constant 0 : index
    %c0_4 = arith.constant 0 : index
    %2 = vector.load %arg2[%c0_2, %c0_3, %c0_4] : memref<1x8x32xbf16, #tpu.memory_space<vmem>>, vector<1x8x32xbf16>
    %3 = vector.shape_cast %2 : vector<1x8x32xbf16> to vector<8x32xbf16>
    %c0_5 = arith.constant 0 : index
    %c0_6 = arith.constant 0 : index
    %4 = vector.load %arg3[%c0_5, %c0_6] : memref<32x16xbf16, #tpu.memory_space<vmem>>, vector<32x16xbf16>
    %cst = arith.constant dense<0.000000e+00> : vector<8x16xf32>
    %5 = tpu.matmul %3, %4, %cst {dimension_numbers = #tpu.dot_dimension_numbers<[1], [0], [0], [1], [0, 0, 1, 1], [], []>} : vector<8x32xbf16>, vector<32x16xbf16>, vector<8x16xf32> -> vector<8x16xf32>
    %c0_7 = arith.constant 0 : index
    %c0_8 = arith.constant 0 : index
    %6 = vector.load %arg4[%c0_7, %c0_8] : memref<32x16xbf16, #tpu.memory_space<vmem>>, vector<32x16xbf16>
    %cst_9 = arith.constant dense<0.000000e+00> : vector<8x16xf32>
    %7 = tpu.matmul %3, %6, %cst_9 {dimension_numbers = #tpu.dot_dimension_numbers<[1], [0], [0], [1], [0, 0, 1, 1], [], []>} : vector<8x32xbf16>, vector<32x16xbf16>, vector<8x16xf32> -> vector<8x16xf32>
    %cst_10 = arith.constant 2.500000e-01 : f32
    %8 = vector.broadcast %cst_10 : f32 to vector<8x16xf32>
    %9 = arith.mulf %5, %8 : vector<8x16xf32>
    %10 = arith.truncf %9 : vector<8x16xf32> to vector<8x16xbf16>
    %cst_11 = arith.constant dense<0.000000e+00> : vector<8x256xf32>
    %11 = tpu.matmul %10, %1, %cst_11 {dimension_numbers = #tpu.dot_dimension_numbers<[1], [1], [0], [0], [0, 0, 1, 0], [], []>} : vector<8x16xbf16>, vector<256x16xbf16>, vector<8x256xf32> -> vector<8x256xf32>
    %cst_12 = arith.constant dense<0xFF800000> : vector<8xf32>
    %12 = vector.multi_reduction <maximumf>, %11, %cst_12 [1] : vector<8x256xf32> to vector<8xf32>
    %13 = vector.shape_cast %12 : vector<8xf32> to vector<8x1xf32>
    %14 = vector.broadcast %13 : vector<8x1xf32> to vector<8x256xf32>
    %15 = arith.subf %11, %14 : vector<8x256xf32>
    %16 = math.exp %15 : vector<8x256xf32>
    %cst_13 = arith.constant dense<0.000000e+00> : vector<8xf32>
    %17 = vector.multi_reduction <add>, %16, %cst_13 [1] : vector<8x256xf32> to vector<8xf32>
    %18 = vector.shape_cast %17 : vector<8xf32> to vector<8x1xf32>
    %19 = tpu.reciprocal %18 {approx = true} : vector<8x1xf32> -> vector<8x1xf32>
    %20 = vector.broadcast %19 : vector<8x1xf32> to vector<8x16xf32>
    %21 = arith.mulf %7, %20 : vector<8x16xf32>
    %22 = arith.truncf %16 : vector<8x256xf32> to vector<8x256xbf16>
    %23 = arith.truncf %21 : vector<8x16xf32> to vector<8x16xbf16>
    %cst_14 = arith.constant dense<0.000000e+00> : vector<256x16xf32>
    %24 = tpu.matmul %22, %23, %cst_14 {dimension_numbers = #tpu.dot_dimension_numbers<[0], [0], [1], [1], [0, 1, 1, 1], [], []>} : vector<8x256xbf16>, vector<8x16xbf16>, vector<256x16xf32> -> vector<256x16xf32>
    %25 = arith.truncf %24 : vector<256x16xf32> to vector<256x16xbf16>
    %c0_15 = arith.constant 0 : index
    %c0_16 = arith.constant 0 : index
    %c0_17 = arith.constant 0 : index
    %26 = vector.load %arg5[%c0_15, %c0_16, %c0_17] : memref<1x256x16xbf16, #tpu.memory_space<vmem>>, vector<1x256x16xbf16>
    %27 = vector.shape_cast %26 : vector<1x256x16xbf16> to vector<256x16xbf16>
    %28 = vector.shape_cast %25 : vector<256x16xbf16> to vector<1x256x16xbf16>
    tpu.vector_store %arg5[%c0_15, %c0_16, %c0_17], %28 {strides = array<i32>} : memref<1x256x16xbf16, #tpu.memory_space<vmem>>, vector<1x256x16xbf16>,
    return
  }
  func.func @transform_0(%arg0: i32) -> (i32, i32, i32) {
    %c0_i32 = arith.constant 0 : i32
    %c0_i32_0 = arith.constant 0 : i32
    %c0_i32_1 = arith.constant 0 : i32
    return %arg0, %c0_i32, %c0_i32_0 : i32, i32, i32
  }
  func.func @transform_1(%arg0: i32) -> (i32, i32, i32) {
    %c0_i32 = arith.constant 0 : i32
    %c0_i32_0 = arith.constant 0 : i32
    %c0_i32_1 = arith.constant 0 : i32
    return %arg0, %c0_i32, %c0_i32_0 : i32, i32, i32
  }
  func.func @transform_2(%arg0: i32) -> (i32, i32) {
    %c0_i32 = arith.constant 0 : i32
    %c0_i32_0 = arith.constant 0 : i32
    %c0_i32_1 = arith.constant 0 : i32
    return %c0_i32, %c0_i32_0 : i32, i32
  }
  func.func @transform_3(%arg0: i32) -> (i32, i32) {
    %c0_i32 = arith.constant 0 : i32
    %c0_i32_0 = arith.constant 0 : i32
    %c0_i32_1 = arith.constant 0 : i32
    return %c0_i32, %c0_i32_0 : i32, i32
  }
  func.func @transform_4(%arg0: i32) -> (i32, i32, i32) {
    %c0_i32 = arith.constant 0 : i32
    %c0_i32_0 = arith.constant 0 : i32
    %c0_i32_1 = arith.constant 0 : i32
    return %arg0, %c0_i32, %c0_i32_0 : i32, i32, i32
  }
}

</mosaic_0001>

<llo_original>
// kernel: _lambda_.5
$region0: #{_lambda_.5}
  #allocation0 [shape = 'u32[]', space=smem, size = 0x4, offset = 0x4, fixed_abs, tag = 'smem constant byte address 0x4 - core index']
  #allocation1 [shape = 'u32[144,128]{1,0:T(1,128)}', space=vmem, size = 0x12000, scoped, tag = 'internal scratch']
  #allocation2 [shape = 'f32[256,32]{1,0:T(8,128)}', space=vmem, size = 0x20000, scoped, tag = 'scratch operand']
  %s0 = inlined_call_operand.hbm [shape: bf16[512,16], index: 0, kind: input, shape index: {}]
  %s1 = inlined_call_operand.hbm [shape: bf16[16,32], index: 1, kind: input, shape index: {}]
  %s2 = inlined_call_operand.hbm [shape: f32[1,32], index: 2, kind: input, shape index: {}]
  %s3 = inlined_call_operand.hbm [shape: f32[512,32], index: 3, kind: output, shape index: {}]
  %s4 = sld [smem:[#allocation0]]
  $region65: #{_lambda_.5} parent=0
    _
  %s6 = ssub.s32 1, %s4
  %s7 = scalar_select 0, %s6, %s4
  $region1: #{_lambda_.5} parent=0
    #allocation3 [shape = 'u8[131072]{0}', space=vmem, size = 0x20000, scoped, tag = 'input window, operand 0']
    #allocation4 [shape = 's32[2]{0}', space=sflag, size = 0x8, scoped, tag = 'scoped memory for _lambda_.5']
    #allocation5 [shape = 's32[2]{0}', space=sflag, size = 0x8, scoped, tag = 'scoped memory for _lambda_.5']
    #allocation6 [shape = 'u8[4096]{0}', space=vmem, size = 0x1000, scoped, tag = 'input window, operand 1, single buffered']
    #allocation7 [shape = 's32[1]{0}', space=sflag, size = 0x4, scoped, tag = 'scoped memory for _lambda_.5']
    #allocation8 [shape = 'u8[512]{0}', space=vmem, size = 0x400, scoped, tag = 'input window, operand 2, single buffered']
    #allocation9 [shape = 'u8[262144]{0}', space=vmem, size = 0x40000, scoped, tag = 'output window, operand 0']
    %8 = vsyncpa [#allocation4], 0
    %s9 = scalar_lea.sflag [#allocation4], 1
    %10 = vsyncpa %s9, 0
    %11 = vsyncpa [#allocation7], 0
    %12 = vsyncpa [#allocation5], 0
    %s13 = scalar_lea.sflag [#allocation5], 1
    %14 = vsyncpa %s13, 0
    loop: start=0, step=1, limit=4
    $region2: #{_lambda_.5} parent=1 // loop_pre_header
      _
    $region3: #{_lambda_.5} parent=1 // loop_header
      %s16 = sphi 0, %s20
      %p17 = scmp.ge.s32.totalorder %s16, 4
      %s23 = sphi 0, %s42
      %s24 = sphi 0, %s38
      %s25 = sphi 0, %s34
      %s26 = sphi 0, %s23
      %s27 = sphi 0, %s24
      %s28 = sphi 0, %s25
      %s29 = sphi 0, %s26
      %s30 = sphi 0, %s27
      %s31 = sphi 0, %s28
      %s47 = sphi 0, %s49
      %s50 = sphi 0, %s47
      %s51 = sphi 0, %s50
      %s67 = sphi 0, %s51
      %s75 = sphi 0, %s77
      %s78 = sphi 0, %s75
      %s79 = sphi 0, %s78
      %s95 = sphi 0, %s79
      %s101 = sphi 0, %s103
      %s104 = sphi 0, %s101
      %s105 = sphi 0, %s104
      %s121 = sphi 0, %s105
      %s129 = sphi 0, %s131
      %s132 = sphi 0, %s129
      %s133 = sphi 0, %s132
      %s149 = sphi 0, %s133
    $region4: #{_lambda_.5} parent=1 // loop_header_branch
      %19 = sbr.rel (%p17) target = $region8
    $region5: #{_lambda_.5} parent=1 // loop_body
      %s21 = ssub.s32 %s16, 1
      %s22 = ssub.s32 %s16, 2
      %s32 = sadd.s32 1, %s25
      %p33 = scmp.ge.s32.totalorder %s32, 1
      %s34 = scalar_select %p33, 0, %s32
      %s35 = sadd.s32 1, %s24
      %s36 = scalar_select %p33, %s35, %s24
      %p37 = scmp.ge.s32.totalorder %s36, 1
      %s38 = scalar_select %p37, 0, %s36
      %s39 = sadd.s32 1, %s23
      %s40 = scalar_select %p37, %s39, %s23
      %p41 = scmp.ge.s32.totalorder %s40, 2
      %s42 = scalar_select %p41, 0, %s40
      %s43 = ssub.s32 %s23, %s42
      %s44 = ssub.s32 %s25, %s34
      %s45 = sor.u32 %s43, %s44
      %p46 = scmp.eq.s32.totalorder %s45, 0
      %s48 = sadd.s32 %s47, 1
      %s49 = scalar_select %p46, %s47, %s48
      %p52 = pneg %p46
      %p53 = scmp.eq.s32.totalorder %s16, 1
      %p54 = por %p52, %p53
      %p55 = scmp.ne.s32.totalorder %s47, %s50
      %p56 = scmp.eq.s32.totalorder %s16, 0
      %p57 = por %p55, %p56
      %p58 = scmp.ne.s32.totalorder %s47, %s50
      %p59 = scmp.eq.s32.totalorder %s21, 1
      %p60 = por %p58, %p59
      %p61 = scmp.ne.s32.totalorder %s50, %s51
      %p62 = scmp.eq.s32.totalorder %s21, 0
      %p63 = por %p61, %p62
      %p64 = scmp.ne.s32.totalorder %s50, %s51
      %p65 = scmp.eq.s32.totalorder %s22, 1
      %p66 = por %p64, %p65
      %p68 = scmp.ne.s32.totalorder %s51, %s67
      %p69 = scmp.eq.s32.totalorder %s22, 0
      %p70 = por %p68, %p69
      %s71 = ssub.s32 %s25, %s34
      %s72 = ssub.s32 %s24, %s38
      %s73 = sor.u32 %s71, %s72
      %p74 = scmp.eq.s32.totalorder %s73, 0
      %s76 = sadd.s32 %s75, 1
      %s77 = scalar_select %p74, %s75, %s76
      %p80 = pneg %p74
      %p81 = scmp.eq.s32.totalorder %s16, 1
      %p82 = por %p80, %p81
      %p83 = scmp.ne.s32.totalorder %s75, %s78
      %p84 = scmp.eq.s32.totalorder %s16, 0
      %p85 = por %p83, %p84
      %p86 = scmp.ne.s32.totalorder %s75, %s78
      %p87 = scmp.eq.s32.totalorder %s21, 1
      %p88 = por %p86, %p87
      %p89 = scmp.ne.s32.totalorder %s78, %s79
      %p90 = scmp.eq.s32.totalorder %s21, 0
      %p91 = por %p89, %p90
      %p92 = scmp.ne.s32.totalorder %s78, %s79
      %p93 = scmp.eq.s32.totalorder %s22, 1
      %p94 = por %p92, %p93
      %p96 = scmp.ne.s32.totalorder %s79, %s95
      %p97 = scmp.eq.s32.totalorder %s22, 0
      %p98 = por %p96, %p97
      %s99 = ssub.s32 %s24, %s38
      %p100 = scmp.eq.s32.totalorder %s99, 0
      %s102 = sadd.s32 %s101, 1
      %s103 = scalar_select %p100, %s101, %s102
      %p106 = pneg %p100
      %p107 = scmp.eq.s32.totalorder %s16, 1
      %p108 = por %p106, %p107
      %p109 = scmp.ne.s32.totalorder %s101, %s104
      %p110 = scmp.eq.s32.totalorder %s16, 0
      %p111 = por %p109, %p110
      %p112 = scmp.ne.s32.totalorder %s101, %s104
      %p113 = scmp.eq.s32.totalorder %s21, 1
      %p114 = por %p112, %p113
      %p115 = scmp.ne.s32.totalorder %s104, %s105
      %p116 = scmp.eq.s32.totalorder %s21, 0
      %p117 = por %p115, %p116
      %p118 = scmp.ne.s32.totalorder %s104, %s105
      %p119 = scmp.eq.s32.totalorder %s22, 1
      %p120 = por %p118, %p119
      %p122 = scmp.ne.s32.totalorder %s105, %s121
      %p123 = scmp.eq.s32.totalorder %s22, 0
      %p124 = por %p122, %p123
      %s125 = ssub.s32 %s23, %s42
      %s126 = ssub.s32 %s24, %s38
      %s127 = sor.u32 %s125, %s126
      %p128 = scmp.eq.s32.totalorder %s127, 0
      %s130 = sadd.s32 %s129, 1
      %s131 = scalar_select %p128, %s129, %s130
      %p134 = pneg %p128
      %p135 = scmp.eq.s32.totalorder %s16, 1
      %p136 = por %p134, %p135
      %p137 = scmp.ne.s32.totalorder %s129, %s132
      %p138 = scmp.eq.s32.totalorder %s16, 0
      %p139 = por %p137, %p138
      %p140 = scmp.ne.s32.totalorder %s129, %s132
      %p141 = scmp.eq.s32.totalorder %s21, 1
      %p142 = por %p140, %p141
      %p143 = scmp.ne.s32.totalorder %s132, %s133
      %p144 = scmp.eq.s32.totalorder %s21, 0
      %p145 = por %p143, %p144
      %p146 = scmp.ne.s32.totalorder %s132, %s133
      %p147 = scmp.eq.s32.totalorder %s22, 1
      %p148 = por %p146, %p147
      %p150 = scmp.ne.s32.totalorder %s133, %s149
      %p151 = scmp.eq.s32.totalorder %s22, 0
      %p152 = por %p150, %p151
      %p153 = scmp.le.s32.totalorder 1, %s16
      %p154 = scmp.lt.s32.totalorder %s16, 3
      %p155 = pnand %p153, %p154
      %p156 = pneg %p155
      // Predicated region
      $region9: #{_lambda_.5} parent=5 // pred_check
        _
      $region10: #{_lambda_.5} parent=5 // pred_check_branch
        %158 = sbr.rel (%p155) target = $region12
      $region11: #{_lambda_.5} parent=5 // pred_region
        %s159 = ssub.s32 %s16, 1
        // Predicated region
        $region13: #{_lambda_.5} parent=11 // pred_check
          %p160 = pneg %p91
        $region14: #{_lambda_.5} parent=11 // pred_check_branch
          %162 = sbr.rel (%p160) target = $region16
        $region15: #{_lambda_.5} parent=11 // pred_region
          %s163 = smul.u32 2, %s28
          %s165 = ssub.s32 128, 128
          %166 = vsyncadd [#allocation7], %s165
          %s167 = sadd.s32 %s27, %s163
          %s168 = smul.addr %s167, 64
          %s169 = scalar_lea.hbm %s1, %s168
          %s170 = sshll.u32 [#allocation6], 4
          %s171 = int_to_ptr.vmem [resolvable:$true] %s170
          %176 = dma.hbm_to_vmem [thread:$0]  %s169, 128, %s171, [#allocation7], 64, 64, 4
        $region16: #{_lambda_.5} parent=11 // pred_fallthru
          _
        // Predicated region
        $region17: #{_lambda_.5} parent=11 // pred_check
          %p177 = pneg %p117
        $region18: #{_lambda_.5} parent=11 // pred_check_branch
          %179 = sbr.rel (%p177) target = $region20
        $region19: #{_lambda_.5} parent=11 // pred_region
          %s181 = ssub.s32 16, 16
          %182 = vsyncadd [#allocation7], %s181
          %s183 = smul.addr %s27, 16
          %s184 = scalar_lea.hbm %s2, %s183
          %s186 = sshll.u32 [#allocation8], 4
          %s187 = int_to_ptr.vmem [resolvable:$true] %s186
          %189 = dma.hbm_to_vmem [thread:$0]  %s184, 16, %s187, [#allocation7]
        $region20: #{_lambda_.5} parent=11 // pred_fallthru
          _
      $region12: #{_lambda_.5} parent=5 // pred_fallthru
        _
      %p190 = scmp.lt.s32.totalorder %s16, 2
      // Predicated region
      $region21: #{_lambda_.5} parent=5 // pred_check
        %p191 = pneg %p190
      $region22: #{_lambda_.5} parent=5 // pred_check_branch
        %193 = sbr.rel (%p191) target = $region24
      $region23: #{_lambda_.5} parent=5 // pred_region
        // Predicated region
        $region25: #{_lambda_.5} parent=23 // pred_check
          %p194 = pneg %p57
        $region26: #{_lambda_.5} parent=23 // pred_check_branch
          %196 = sbr.rel (%p194) target = $region28
        $region27: #{_lambda_.5} parent=23 // pred_region
          %s197 = sand.u32 %s47, 1
          %s198 = scalar_lea.sflag [#allocation4], %s197
          %s199 = sand.u32 %s47, 1
          %s200 = smul.addr %s199, 128
          %s201 = scalar_lea.vmem [#allocation3], %s200
          %s202 = smul.u32 32, %s23
          %s204 = ssub.s32 2048, 2048
          %205 = vsyncadd %s198, %s204
          %s206 = sadd.s32 %s25, %s202
          %s207 = smul.addr %s206, 64
          %s208 = scalar_lea.hbm %s0, %s207
          %s209 = sshll.u32 %s201, 4
          %s210 = int_to_ptr.vmem [resolvable:$true] %s209
          %215 = dma.hbm_to_vmem [thread:$0]  %s208, 2048, %s210, %s198, 64, 64, 4
        $region28: #{_lambda_.5} parent=23 // pred_fallthru
          _
      $region24: #{_lambda_.5} parent=5 // pred_fallthru
        _
      %p216 = scmp.le.s32.totalorder 1, %s16
      %p217 = scmp.lt.s32.totalorder %s16, 3
      %p218 = pnand %p216, %p217
      %p219 = pneg %p218
      // Predicated region
      $region29: #{_lambda_.5} parent=5 // pred_check
        _
      $region30: #{_lambda_.5} parent=5 // pred_check_branch
        %221 = sbr.rel (%p218) target = $region32
      $region31: #{_lambda_.5} parent=5 // pred_region
        %s222 = ssub.s32 %s16, 1
        %s223 = sand.u32 %s50, 1
        %s224 = scalar_lea.sflag [#allocation4], %s223
        %s225 = sand.u32 %s50, 1
        %s226 = smul.addr %s225, 128
        %s227 = scalar_lea.vmem [#allocation3], %s226
        // Predicated region
        $region33: #{_lambda_.5} parent=31 // pred_check
          %p228 = pneg %p63
        $region34: #{_lambda_.5} parent=31 // pred_check_branch
          %230 = sbr.rel (%p228) target = $region36
        $region35: #{_lambda_.5} parent=31 // pred_region
          %231 = dma.done %s224, 2048
        $region36: #{_lambda_.5} parent=31 // pred_fallthru
          _
        // Predicated region
        $region37: #{_lambda_.5} parent=31 // pred_check
          %p232 = pneg %p91
        $region38: #{_lambda_.5} parent=31 // pred_check_branch
          %234 = sbr.rel (%p232) target = $region40
        $region39: #{_lambda_.5} parent=31 // pred_region
          %235 = dma.done [#allocation7], 128
        $region40: #{_lambda_.5} parent=31 // pred_fallthru
          _
        // Predicated region
        $region41: #{_lambda_.5} parent=31 // pred_check
          %p236 = pneg %p117
        $region42: #{_lambda_.5} parent=31 // pred_check_branch
          %238 = sbr.rel (%p236) target = $region44
        $region43: #{_lambda_.5} parent=31 // pred_region
          %239 = dma.done [#allocation7], 16
        $region44: #{_lambda_.5} parent=31 // pred_fallthru
          _
        %s240 = sand.u32 %s50, 1
        %s241 = scalar_lea.sflag [#allocation4], %s240
        %s242 = sand.u32 %s50, 1
        %s243 = smul.addr %s242, 128
        %s244 = scalar_lea.vmem [#allocation3], %s243
        %p245 = pneg %p63
        %p246 = pneg %p60
        %p247 = pneg %p91
        %p248 = pneg %p88
        %p249 = pneg %p117
        %p250 = pneg %p114
        %p251 = pneg %p145
        %p252 = pneg %p142
        %s253 = sand.u32 %s132, 1
        %s254 = scalar_lea.sflag [#allocation5], %s253
        %s255 = sand.u32 %s132, 1
        %s256 = smul.addr %s255, 256
        %s257 = scalar_lea.vmem [#allocation9], %s256
        %s258 = smul.u32 32, %s26
        %s259 = smul.u32 2, %s28
        %s260 = smul.u32 32, %s26
        %p262 = scmp.eq.s32.totalorder %s28, 0
        // Predicated region
        $region45: #{_lambda_.5} parent=31 // pred_check
          %p263 = pneg %p262
        $region46: #{_lambda_.5} parent=31 // pred_check_branch
          %265 = sbr.rel (%p263) target = $region48
        $region47: #{_lambda_.5} parent=31 // pred_region
          %vm266 = vcmask 261120
          %267 = vst.msk [vmem:[#allocation2] sm:$0xff] %vm266, 0.0
          %268 = vst.msk [vmem:[#allocation2 + $0x8] sm:$0xff] %vm266, 0.0
          %269 = vst.msk [vmem:[#allocation2 + $0x10] sm:$0xff] %vm266, 0.0
          %270 = vst.msk [vmem:[#allocation2 + $0x18] sm:$0xff] %vm266, 0.0
          %271 = vst.msk [vmem:[#allocation2 + $0x20] sm:$0xff] %vm266, 0.0
          %272 = vst.msk [vmem:[#allocation2 + $0x28] sm:$0xff] %vm266, 0.0
          %273 = vst.msk [vmem:[#allocation2 + $0x30] sm:$0xff] %vm266, 0.0
          %274 = vst.msk [vmem:[#allocation2 + $0x38] sm:$0xff] %vm266, 0.0
          %275 = vst.msk [vmem:[#allocation2 + $0x40] sm:$0xff] %vm266, 0.0
          %276 = vst.msk [vmem:[#allocation2 + $0x48] sm:$0xff] %vm266, 0.0
          %277 = vst.msk [vmem:[#allocation2 + $0x50] sm:$0xff] %vm266, 0.0
          %278 = vst.msk [vmem:[#allocation2 + $0x58] sm:$0xff] %vm266, 0.0
          %279 = vst.msk [vmem:[#allocation2 + $0x60] sm:$0xff] %vm266, 0.0
          %280 = vst.msk [vmem:[#allocation2 + $0x68] sm:$0xff] %vm266, 0.0
          %281 = vst.msk [vmem:[#allocation2 + $0x70] sm:$0xff] %vm266, 0.0
          %282 = vst.msk [vmem:[#allocation2 + $0x78] sm:$0xff] %vm266, 0.0
          %283 = vst.msk [vmem:[#allocation2 + $0x80] sm:$0xff] %vm266, 0.0
          %284 = vst.msk [vmem:[#allocation2 + $0x88] sm:$0xff] %vm266, 0.0
          %285 = vst.msk [vmem:[#allocation2 + $0x90] sm:$0xff] %vm266, 0.0
          %286 = vst.msk [vmem:[#allocation2 + $0x98] sm:$0xff] %vm266, 0.0
          %287 = vst.msk [vmem:[#allocation2 + $0xa0] sm:$0xff] %vm266, 0.0
          %288 = vst.msk [vmem:[#allocation2 + $0xa8] sm:$0xff] %vm266, 0.0
          %289 = vst.msk [vmem:[#allocation2 + $0xb0] sm:$0xff] %vm266, 0.0
          %290 = vst.msk [vmem:[#allocation2 + $0xb8] sm:$0xff] %vm266, 0.0
          %291 = vst.msk [vmem:[#allocation2 + $0xc0] sm:$0xff] %vm266, 0.0
          %292 = vst.msk [vmem:[#allocation2 + $0xc8] sm:$0xff] %vm266, 0.0
          %293 = vst.msk [vmem:[#allocation2 + $0xd0] sm:$0xff] %vm266, 0.0
          %294 = vst.msk [vmem:[#allocation2 + $0xd8] sm:$0xff] %vm266, 0.0
          %295 = vst.msk [vmem:[#allocation2 + $0xe0] sm:$0xff] %vm266, 0.0
          %296 = vst.msk [vmem:[#allocation2 + $0xe8] sm:$0xff] %vm266, 0.0
          %297 = vst.msk [vmem:[#allocation2 + $0xf0] sm:$0xff] %vm266, 0.0
          %298 = vst.msk [vmem:[#allocation2 + $0xf8] sm:$0xff] %vm266, 0.0
        $region48: #{_lambda_.5} parent=31 // pred_fallthru
          _
        %v299 = vld [vmem:[#allocation2] sm:$0xff]
        %v300 = vld [vmem:[#allocation2 + $0x8] sm:$0xff]
        %v301 = vld [vmem:[#allocation2 + $0x10] sm:$0xff]
        %v302 = vld [vmem:[#allocation2 + $0x18] sm:$0xff]
        %v303 = vld [vmem:[#allocation2 + $0x20] sm:$0xff]
        %v304 = vld [vmem:[#allocation2 + $0x28] sm:$0xff]
        %v305 = vld [vmem:[#allocation2 + $0x30] sm:$0xff]
        %v306 = vld [vmem:[#allocation2 + $0x38] sm:$0xff]
        %v307 = vld [vmem:[#allocation2 + $0x40] sm:$0xff]
        %v308 = vld [vmem:[#allocation2 + $0x48] sm:$0xff]
        %v309 = vld [vmem:[#allocation2 + $0x50] sm:$0xff]
        %v310 = vld [vmem:[#allocation2 + $0x58] sm:$0xff]
        %v311 = vld [vmem:[#allocation2 + $0x60] sm:$0xff]
        %v312 = vld [vmem:[#allocation2 + $0x68] sm:$0xff]
        %v313 = vld [vmem:[#allocation2 + $0x70] sm:$0xff]
        %v314 = vld [vmem:[#allocation2 + $0x78] sm:$0xff]
        %v315 = vld [vmem:[#allocation2 + $0x80] sm:$0xff]
        %v316 = vld [vmem:[#allocation2 + $0x88] sm:$0xff]
        %v317 = vld [vmem:[#allocation2 + $0x90] sm:$0xff]
        %v318 = vld [vmem:[#allocation2 + $0x98] sm:$0xff]
        %v319 = vld [vmem:[#allocation2 + $0xa0] sm:$0xff]
        %v320 = vld [vmem:[#allocation2 + $0xa8] sm:$0xff]
        %v321 = vld [vmem:[#allocation2 + $0xb0] sm:$0xff]
        %v322 = vld [vmem:[#allocation2 + $0xb8] sm:$0xff]
        %v323 = vld [vmem:[#allocation2 + $0xc0] sm:$0xff]
        %v324 = vld [vmem:[#allocation2 + $0xc8] sm:$0xff]
        %v325 = vld [vmem:[#allocation2 + $0xd0] sm:$0xff]
        %v326 = vld [vmem:[#allocation2 + $0xd8] sm:$0xff]
        %v327 = vld [vmem:[#allocation2 + $0xe0] sm:$0xff]
        %v328 = vld [vmem:[#allocation2 + $0xe8] sm:$0xff]
        %v329 = vld [vmem:[#allocation2 + $0xf0] sm:$0xff]
        %v330 = vld [vmem:[#allocation2 + $0xf8] sm:$0xff]
        %v331 = vld [vmem:[%s227] sm:$0xf]
        %v332 = vld [vmem:[%s227 + $0x4] sm:$0xf]
        %v333 = vld [vmem:[%s227 + $0x8] sm:$0xf]
        %v334 = vld [vmem:[%s227 + $0xc] sm:$0xf]
        %v335 = vld [vmem:[%s227 + $0x10] sm:$0xf]
        %v336 = vld [vmem:[%s227 + $0x14] sm:$0xf]
        %v337 = vld [vmem:[%s227 + $0x18] sm:$0xf]
        %v338 = vld [vmem:[%s227 + $0x1c] sm:$0xf]
        %v339 = vld [vmem:[%s227 + $0x20] sm:$0xf]
        %v340 = vld [vmem:[%s227 + $0x24] sm:$0xf]
        %v341 = vld [vmem:[%s227 + $0x28] sm:$0xf]
        %v342 = vld [vmem:[%s227 + $0x2c] sm:$0xf]
        %v343 = vld [vmem:[%s227 + $0x30] sm:$0xf]
        %v344 = vld [vmem:[%s227 + $0x34] sm:$0xf]
        %v345 = vld [vmem:[%s227 + $0x38] sm:$0xf]
        %v346 = vld [vmem:[%s227 + $0x3c] sm:$0xf]
        %v347 = vld [vmem:[%s227 + $0x40] sm:$0xf]
        %v348 = vld [vmem:[%s227 + $0x44] sm:$0xf]
        %v349 = vld [vmem:[%s227 + $0x48] sm:$0xf]
        %v350 = vld [vmem:[%s227 + $0x4c] sm:$0xf]
        %v351 = vld [vmem:[%s227 + $0x50] sm:$0xf]
        %v352 = vld [vmem:[%s227 + $0x54] sm:$0xf]
        %v353 = vld [vmem:[%s227 + $0x58] sm:$0xf]
        %v354 = vld [vmem:[%s227 + $0x5c] sm:$0xf]
        %v355 = vld [vmem:[%s227 + $0x60] sm:$0xf]
        %v356 = vld [vmem:[%s227 + $0x64] sm:$0xf]
        %v357 = vld [vmem:[%s227 + $0x68] sm:$0xf]
        %v358 = vld [vmem:[%s227 + $0x6c] sm:$0xf]
        %v359 = vld [vmem:[%s227 + $0x70] sm:$0xf]
        %v360 = vld [vmem:[%s227 + $0x74] sm:$0xf]
        %v361 = vld [vmem:[%s227 + $0x78] sm:$0xf]
        %v362 = vld [vmem:[%s227 + $0x7c] sm:$0xf]
        %v363 = vld [vmem:[#allocation6] sm:$0xf]
        %v364 = vld [vmem:[#allocation6 + $0x4] sm:$0xf]
        %v397 = vunpack.c.l.b16 %v331
        %v398 = vunpack.c.l.b16 %v332
        %v399 = vunpack.c.l.b16 %v333
        %v400 = vunpack.c.l.b16 %v334
        %v401 = vunpack.c.l.b16 %v335
        %v402 = vunpack.c.l.b16 %v336
        %v403 = vunpack.c.l.b16 %v337
        %v404 = vunpack.c.l.b16 %v338
        %v405 = vunpack.c.l.b16 %v339
        %v406 = vunpack.c.l.b16 %v340
        %v407 = vunpack.c.l.b16 %v341
        %v408 = vunpack.c.l.b16 %v342
        %v409 = vunpack.c.l.b16 %v343
        %v410 = vunpack.c.l.b16 %v344
        %v411 = vunpack.c.l.b16 %v345
        %v412 = vunpack.c.l.b16 %v346
        %v413 = vunpack.c.l.b16 %v347
        %v414 = vunpack.c.l.b16 %v348
        %v415 = vunpack.c.l.b16 %v349
        %v416 = vunpack.c.l.b16 %v350
        %v417 = vunpack.c.l.b16 %v351
        %v418 = vunpack.c.l.b16 %v352
        %v419 = vunpack.c.l.b16 %v353
        %v420 = vunpack.c.l.b16 %v354
        %v421 = vunpack.c.l.b16 %v355
        %v422 = vunpack.c.l.b16 %v356
        %v423 = vunpack.c.l.b16 %v357
        %v424 = vunpack.c.l.b16 %v358
        %v425 = vunpack.c.l.b16 %v359
        %v426 = vunpack.c.l.b16 %v360
        %v427 = vunpack.c.l.b16 %v361
        %v428 = vunpack.c.l.b16 %v362
        %v429 = vpack.c.b16 %v398, %v397
        %v430 = vpack.c.b16 %v400, %v399
        %v431 = vpack.c.b16 %v402, %v401
        %v432 = vpack.c.b16 %v404, %v403
        %v433 = vpack.c.b16 %v406, %v405
        %v434 = vpack.c.b16 %v408, %v407
        %v435 = vpack.c.b16 %v410, %v409
        %v436 = vpack.c.b16 %v412, %v411
        %v437 = vpack.c.b16 %v414, %v413
        %v438 = vpack.c.b16 %v416, %v415
        %v439 = vpack.c.b16 %v418, %v417
        %v440 = vpack.c.b16 %v420, %v419
        %v441 = vpack.c.b16 %v422, %v421
        %v442 = vpack.c.b16 %v424, %v423
        %v443 = vpack.c.b16 %v426, %v425
        %v444 = vpack.c.b16 %v428, %v427
        %v447 = vunpack.c.l.b16 %v363
        %v448 = vunpack.c.l.b16 %v364
        %v449 = vpack.c.b16 %v448, %v447
        %vm451 = vcmask 130048
        %v453 = vsel %vm451, %v429, 0
        %v456 = vsel %vm451, %v430, 0
        %v459 = vsel %vm451, %v431, 0
        %v462 = vsel %vm451, %v432, 0
        %v465 = vsel %vm451, %v433, 0
        %v468 = vsel %vm451, %v434, 0
        %v471 = vsel %vm451, %v435, 0
        %v474 = vsel %vm451, %v436, 0
        %v477 = vsel %vm451, %v437, 0
        %v480 = vsel %vm451, %v438, 0
        %v483 = vsel %vm451, %v439, 0
        %v486 = vsel %vm451, %v440, 0
        %v489 = vsel %vm451, %v441, 0
        %v492 = vsel %vm451, %v442, 0
        %v495 = vsel %vm451, %v443, 0
        %v498 = vsel %vm451, %v444, 0
        %500 = vmatprep.subr.bf16.mxu0 0
        %501 = vmatpush1.bf16.msra.mxu0 %v449
        %502 = vmatprep.subr.bf16.mxu0 0
        %503 = vmatpush1.bf16.msra.mxu0 0
        %504 = vmatprep.subr.bf16.mxu0 0
        %505 = vmatpush1.bf16.msra.mxu0 0
        %506 = vmatprep.subr.bf16.mxu0 0
        %507 = vmatpush1.bf16.msra.mxu0 0
        %508 = vmatprep.subr.bf16.mxu0 0
        %509 = vmatpush1.bf16.msra.mxu0 0
        %510 = vmatprep.subr.bf16.mxu0 0
        %511 = vmatpush1.bf16.msra.mxu0 0
        %512 = vmatprep.subr.bf16.mxu0 0
        %513 = vmatpush1.bf16.msra.mxu0 0
        %514 = vmatprep.subr.bf16.mxu0 0
        %515 = vmatpush1.bf16.msra.mxu0 0
        %516 = vmatprep.subr.bf16.mxu0 0
        %517 = vmatpush1.bf16.msra.mxu0 0
        %518 = vmatprep.subr.bf16.mxu0 0
        %519 = vmatpush1.bf16.msra.mxu0 0
        %520 = vmatprep.subr.bf16.mxu0 0
        %521 = vmatpush1.bf16.msra.mxu0 0
        %522 = vmatprep.subr.bf16.mxu0 0
        %523 = vmatpush1.bf16.msra.mxu0 0
        %524 = vmatprep.subr.bf16.mxu0 0
        %525 = vmatpush1.bf16.msra.mxu0 0
        %526 = vmatprep.subr.bf16.mxu0 0
        %527 = vmatpush1.bf16.msra.mxu0 0
        %528 = vmatprep.subr.bf16.mxu0 0
        %529 = vmatpush1.bf16.msra.mxu0 0
        %530 = vmatprep.subr.bf16.mxu0 0
        %531 = vmatpush1.bf16.msra.mxu0 0
        %532 = vmatprep.mubr.bf16.mxu0 0
        %533 = vmatmul.mubr.bf16.gmra.mrb[0].mxu0 %v453
        %v534 = vpop.f32.mrb[0].mxu0
        %v535 = vadd.f32 0.0, %v534
        %v536 = vpop.f32.mrb[0].mxu0
        %v537 = vpop.f32.mrb[0].mxu0
        %v538 = vadd.f32 0.0, %v537
        %v539 = vpop.f32.mrb[0].mxu0
        %540 = vmatprep.mubr.bf16.mxu0 0
        %541 = vmatmul.mubr.bf16.gmra.mrb[0].mxu0 %v456
        %v542 = vpop.f32.mrb[0].mxu0
        %v543 = vadd.f32 0.0, %v542
        %v544 = vpop.f32.mrb[0].mxu0
        %v545 = vpop.f32.mrb[0].mxu0
        %v546 = vadd.f32 0.0, %v545
        %v547 = vpop.f32.mrb[0].mxu0
        %548 = vmatprep.mubr.bf16.mxu0 0
        %549 = vmatmul.mubr.bf16.gmra.mrb[0].mxu0 %v459
        %v550 = vpop.f32.mrb[0].mxu0
        %v551 = vadd.f32 0.0, %v550
        %v552 = vpop.f32.mrb[0].mxu0
        %v553 = vpop.f32.mrb[0].mxu0
        %v554 = vadd.f32 0.0, %v553
        %v555 = vpop.f32.mrb[0].mxu0
        %556 = vmatprep.mubr.bf16.mxu0 0
        %557 = vmatmul.mubr.bf16.gmra.mrb[0].mxu0 %v462
        %v558 = vpop.f32.mrb[0].mxu0
        %v559 = vadd.f32 0.0, %v558
        %v560 = vpop.f32.mrb[0].mxu0
        %v561 = vpop.f32.mrb[0].mxu0
        %v562 = vadd.f32 0.0, %v561
        %v563 = vpop.f32.mrb[0].mxu0
        %564 = vmatprep.mubr.bf16.mxu0 0
        %565 = vmatmul.mubr.bf16.gmra.mrb[0].mxu0 %v465
        %v566 = vpop.f32.mrb[0].mxu0
        %v567 = vadd.f32 0.0, %v566
        %v568 = vpop.f32.mrb[0].mxu0
        %v569 = vpop.f32.mrb[0].mxu0
        %v570 = vadd.f32 0.0, %v569
        %v571 = vpop.f32.mrb[0].mxu0
        %572 = vmatprep.mubr.bf16.mxu0 0
        %573 = vmatmul.mubr.bf16.gmra.mrb[0].mxu0 %v468
        %v574 = vpop.f32.mrb[0].mxu0
        %v575 = vadd.f32 0.0, %v574
        %v576 = vpop.f32.mrb[0].mxu0
        %v577 = vpop.f32.mrb[0].mxu0
        %v578 = vadd.f32 0.0, %v577
        %v579 = vpop.f32.mrb[0].mxu0
        %580 = vmatprep.mubr.bf16.mxu0 0
        %581 = vmatmul.mubr.bf16.gmra.mrb[0].mxu0 %v471
        %v582 = vpop.f32.mrb[0].mxu0
        %v583 = vadd.f32 0.0, %v582
        %v584 = vpop.f32.mrb[0].mxu0
        %v585 = vpop.f32.mrb[0].mxu0
        %v586 = vadd.f32 0.0, %v585
        %v587 = vpop.f32.mrb[0].mxu0
        %588 = vmatprep.mubr.bf16.mxu0 0
        %589 = vmatmul.mubr.bf16.gmra.mrb[0].mxu0 %v474
        %v590 = vpop.f32.mrb[0].mxu0
        %v591 = vadd.f32 0.0, %v590
        %v592 = vpop.f32.mrb[0].mxu0
        %v593 = vpop.f32.mrb[0].mxu0
        %v594 = vadd.f32 0.0, %v593
        %v595 = vpop.f32.mrb[0].mxu0
        %596 = vmatprep.mubr.bf16.mxu0 0
        %597 = vmatmul.mubr.bf16.gmra.mrb[0].mxu0 %v477
        %v598 = vpop.f32.mrb[0].mxu0
        %v599 = vadd.f32 0.0, %v598
        %v600 = vpop.f32.mrb[0].mxu0
        %v601 = vpop.f32.mrb[0].mxu0
        %v602 = vadd.f32 0.0, %v601
        %v603 = vpop.f32.mrb[0].mxu0
        %604 = vmatprep.mubr.bf16.mxu0 0
        %605 = vmatmul.mubr.bf16.gmra.mrb[0].mxu0 %v480
        %v606 = vpop.f32.mrb[0].mxu0
        %v607 = vadd.f32 0.0, %v606
        %v608 = vpop.f32.mrb[0].mxu0
        %v609 = vpop.f32.mrb[0].mxu0
        %v610 = vadd.f32 0.0, %v609
        %v611 = vpop.f32.mrb[0].mxu0
        %612 = vmatprep.mubr.bf16.mxu0 0
        %613 = vmatmul.mubr.bf16.gmra.mrb[0].mxu0 %v483
        %v614 = vpop.f32.mrb[0].mxu0
        %v615 = vadd.f32 0.0, %v614
        %v616 = vpop.f32.mrb[0].mxu0
        %v617 = vpop.f32.mrb[0].mxu0
        %v618 = vadd.f32 0.0, %v617
        %v619 = vpop.f32.mrb[0].mxu0
        %620 = vmatprep.mubr.bf16.mxu0 0
        %621 = vmatmul.mubr.bf16.gmra.mrb[0].mxu0 %v486
        %v622 = vpop.f32.mrb[0].mxu0
        %v623 = vadd.f32 0.0, %v622
        %v624 = vpop.f32.mrb[0].mxu0
        %v625 = vpop.f32.mrb[0].mxu0
        %v626 = vadd.f32 0.0, %v625
        %v627 = vpop.f32.mrb[0].mxu0
        %628 = vmatprep.mubr.bf16.mxu0 0
        %629 = vmatmul.mubr.bf16.gmra.mrb[0].mxu0 %v489
        %v630 = vpop.f32.mrb[0].mxu0
        %v631 = vadd.f32 0.0, %v630
        %v632 = vpop.f32.mrb[0].mxu0
        %v633 = vpop.f32.mrb[0].mxu0
        %v634 = vadd.f32 0.0, %v633
        %v635 = vpop.f32.mrb[0].mxu0
        %636 = vmatprep.mubr.bf16.mxu0 0
        %637 = vmatmul.mubr.bf16.gmra.mrb[0].mxu0 %v492
        %v638 = vpop.f32.mrb[0].mxu0
        %v639 = vadd.f32 0.0, %v638
        %v640 = vpop.f32.mrb[0].mxu0
        %v641 = vpop.f32.mrb[0].mxu0
        %v642 = vadd.f32 0.0, %v641
        %v643 = vpop.f32.mrb[0].mxu0
        %644 = vmatprep.mubr.bf16.mxu0 0
        %645 = vmatmul.mubr.bf16.gmra.mrb[0].mxu0 %v495
        %v646 = vpop.f32.mrb[0].mxu0
        %v647 = vadd.f32 0.0, %v646
        %v648 = vpop.f32.mrb[0].mxu0
        %v649 = vpop.f32.mrb[0].mxu0
        %v650 = vadd.f32 0.0, %v649
        %v651 = vpop.f32.mrb[0].mxu0
        %652 = vmatprep.mubr.bf16.mxu0 0
        %653 = vmatmul.mubr.bf16.gmra.mrb[0].mxu0 %v498
        %v654 = vpop.f32.mrb[0].mxu0
        %v655 = vadd.f32 0.0, %v654
        %v656 = vpop.f32.mrb[0].mxu0
        %v657 = vpop.f32.mrb[0].mxu0
        %v658 = vadd.f32 0.0, %v657
        %v659 = vpop.f32.mrb[0].mxu0
        %660 = vdwg.mxu0
        %v661 = vadd.f32 %v299, %v535
        %v662 = vadd.f32 %v300, %v538
        %v663 = vadd.f32 %v301, %v543
        %v664 = vadd.f32 %v302, %v546
        %v665 = vadd.f32 %v303, %v551
        %v666 = vadd.f32 %v304, %v554
        %v667 = vadd.f32 %v305, %v559
        %v668 = vadd.f32 %v306, %v562
        %v669 = vadd.f32 %v307, %v567
        %v670 = vadd.f32 %v308, %v570
        %v671 = vadd.f32 %v309, %v575
        %v672 = vadd.f32 %v310, %v578
        %v673 = vadd.f32 %v311, %v583
        %v674 = vadd.f32 %v312, %v586
        %v675 = vadd.f32 %v313, %v591
        %v676 = vadd.f32 %v314, %v594
        %v677 = vadd.f32 %v315, %v599
        %v678 = vadd.f32 %v316, %v602
        %v679 = vadd.f32 %v317, %v607
        %v680 = vadd.f32 %v318, %v610
        %v681 = vadd.f32 %v319, %v615
        %v682 = vadd.f32 %v320, %v618
        %v683 = vadd.f32 %v321, %v623
        %v684 = vadd.f32 %v322, %v626
        %v685 = vadd.f32 %v323, %v631
        %v686 = vadd.f32 %v324, %v634
        %v687 = vadd.f32 %v325, %v639
        %v688 = vadd.f32 %v326, %v642
        %v689 = vadd.f32 %v327, %v647
        %v690 = vadd.f32 %v328, %v650
        %v691 = vadd.f32 %v329, %v655
        %v692 = vadd.f32 %v330, %v658
        %vm693 = vcmask 261120
        %694 = vst.msk [vmem:[#allocation2] sm:$0xff] %vm693, %v661
        %695 = vst.msk [vmem:[#allocation2 + $0x8] sm:$0xff] %vm693, %v662
        %696 = vst.msk [vmem:[#allocation2 + $0x10] sm:$0xff] %vm693, %v663
        %697 = vst.msk [vmem:[#allocation2 + $0x18] sm:$0xff] %vm693, %v664
        %698 = vst.msk [vmem:[#allocation2 + $0x20] sm:$0xff] %vm693, %v665
        %699 = vst.msk [vmem:[#allocation2 + $0x28] sm:$0xff] %vm693, %v666
        %700 = vst.msk [vmem:[#allocation2 + $0x30] sm:$0xff] %vm693, %v667
        %701 = vst.msk [vmem:[#allocation2 + $0x38] sm:$0xff] %vm693, %v668
        %702 = vst.msk [vmem:[#allocation2 + $0x40] sm:$0xff] %vm693, %v669
        %703 = vst.msk [vmem:[#allocation2 + $0x48] sm:$0xff] %vm693, %v670
        %704 = vst.msk [vmem:[#allocation2 + $0x50] sm:$0xff] %vm693, %v671
        %705 = vst.msk [vmem:[#allocation2 + $0x58] sm:$0xff] %vm693, %v672
        %706 = vst.msk [vmem:[#allocation2 + $0x60] sm:$0xff] %vm693, %v673
        %707 = vst.msk [vmem:[#allocation2 + $0x68] sm:$0xff] %vm693, %v674
        %708 = vst.msk [vmem:[#allocation2 + $0x70] sm:$0xff] %vm693, %v675
        %709 = vst.msk [vmem:[#allocation2 + $0x78] sm:$0xff] %vm693, %v676
        %710 = vst.msk [vmem:[#allocation2 + $0x80] sm:$0xff] %vm693, %v677
        %711 = vst.msk [vmem:[#allocation2 + $0x88] sm:$0xff] %vm693, %v678
        %712 = vst.msk [vmem:[#allocation2 + $0x90] sm:$0xff] %vm693, %v679
        %713 = vst.msk [vmem:[#allocation2 + $0x98] sm:$0xff] %vm693, %v680
        %714 = vst.msk [vmem:[#allocation2 + $0xa0] sm:$0xff] %vm693, %v681
        %715 = vst.msk [vmem:[#allocation2 + $0xa8] sm:$0xff] %vm693, %v682
        %716 = vst.msk [vmem:[#allocation2 + $0xb0] sm:$0xff] %vm693, %v683
        %717 = vst.msk [vmem:[#allocation2 + $0xb8] sm:$0xff] %vm693, %v684
        %718 = vst.msk [vmem:[#allocation2 + $0xc0] sm:$0xff] %vm693, %v685
        %719 = vst.msk [vmem:[#allocation2 + $0xc8] sm:$0xff] %vm693, %v686
        %720 = vst.msk [vmem:[#allocation2 + $0xd0] sm:$0xff] %vm693, %v687
        %721 = vst.msk [vmem:[#allocation2 + $0xd8] sm:$0xff] %vm693, %v688
        %722 = vst.msk [vmem:[#allocation2 + $0xe0] sm:$0xff] %vm693, %v689
        %723 = vst.msk [vmem:[#allocation2 + $0xe8] sm:$0xff] %vm693, %v690
        %724 = vst.msk [vmem:[#allocation2 + $0xf0] sm:$0xff] %vm693, %v691
        %725 = vst.msk [vmem:[#allocation2 + $0xf8] sm:$0xff] %vm693, %v692
        // Predicated region
        $region49: #{_lambda_.5} parent=31 // pred_check
          %p726 = pneg %p262
        $region50: #{_lambda_.5} parent=31 // pred_check_branch
          %728 = sbr.rel (%p726) target = $region52
        $region51: #{_lambda_.5} parent=31 // pred_region
          %v729 = vld [vmem:[#allocation2] sm:$0xff]
          %v730 = vld [vmem:[#allocation2 + $0x8] sm:$0xff]
          %v731 = vld [vmem:[#allocation2 + $0x10] sm:$0xff]
          %v732 = vld [vmem:[#allocation2 + $0x18] sm:$0xff]
          %v733 = vld [vmem:[#allocation2 + $0x20] sm:$0xff]
          %v734 = vld [vmem:[#allocation2 + $0x28] sm:$0xff]
          %v735 = vld [vmem:[#allocation2 + $0x30] sm:$0xff]
          %v736 = vld [vmem:[#allocation2 + $0x38] sm:$0xff]
          %v737 = vld [vmem:[#allocation2 + $0x40] sm:$0xff]
          %v738 = vld [vmem:[#allocation2 + $0x48] sm:$0xff]
          %v739 = vld [vmem:[#allocation2 + $0x50] sm:$0xff]
          %v740 = vld [vmem:[#allocation2 + $0x58] sm:$0xff]
          %v741 = vld [vmem:[#allocation2 + $0x60] sm:$0xff]
          %v742 = vld [vmem:[#allocation2 + $0x68] sm:$0xff]
          %v743 = vld [vmem:[#allocation2 + $0x70] sm:$0xff]
          %v744 = vld [vmem:[#allocation2 + $0x78] sm:$0xff]
          %v745 = vld [vmem:[#allocation2 + $0x80] sm:$0xff]
          %v746 = vld [vmem:[#allocation2 + $0x88] sm:$0xff]
          %v747 = vld [vmem:[#allocation2 + $0x90] sm:$0xff]
          %v748 = vld [vmem:[#allocation2 + $0x98] sm:$0xff]
          %v749 = vld [vmem:[#allocation2 + $0xa0] sm:$0xff]
          %v750 = vld [vmem:[#allocation2 + $0xa8] sm:$0xff]
          %v751 = vld [vmem:[#allocation2 + $0xb0] sm:$0xff]
          %v752 = vld [vmem:[#allocation2 + $0xb8] sm:$0xff]
          %v753 = vld [vmem:[#allocation2 + $0xc0] sm:$0xff]
          %v754 = vld [vmem:[#allocation2 + $0xc8] sm:$0xff]
          %v755 = vld [vmem:[#allocation2 + $0xd0] sm:$0xff]
          %v756 = vld [vmem:[#allocation2 + $0xd8] sm:$0xff]
          %v757 = vld [vmem:[#allocation2 + $0xe0] sm:$0xff]
          %v758 = vld [vmem:[#allocation2 + $0xe8] sm:$0xff]
          %v759 = vld [vmem:[#allocation2 + $0xf0] sm:$0xff]
          %v760 = vld [vmem:[#allocation2 + $0xf8] sm:$0xff]
          %v761 = vld [vmem:[#allocation8] sm:$0x1]
          %v763 = vlaneseq
          %v764 = vshrl.u32 %v763, 7
          %v765 = vsub.s32 0, %v764
          %v766 = vrot.slane %v761, %v765
          %v768 = vadd.f32 %v729, %v766
          %v769 = vadd.f32 %v730, %v766
          %v770 = vadd.f32 %v731, %v766
          %v771 = vadd.f32 %v732, %v766
          %v772 = vadd.f32 %v733, %v766
          %v773 = vadd.f32 %v734, %v766
          %v774 = vadd.f32 %v735, %v766
          %v775 = vadd.f32 %v736, %v766
          %v776 = vadd.f32 %v737, %v766
          %v777 = vadd.f32 %v738, %v766
          %v778 = vadd.f32 %v739, %v766
          %v779 = vadd.f32 %v740, %v766
          %v780 = vadd.f32 %v741, %v766
          %v781 = vadd.f32 %v742, %v766
          %v782 = vadd.f32 %v743, %v766
          %v783 = vadd.f32 %v744, %v766
          %v784 = vadd.f32 %v745, %v766
          %v785 = vadd.f32 %v746, %v766
          %v786 = vadd.f32 %v747, %v766
          %v787 = vadd.f32 %v748, %v766
          %v788 = vadd.f32 %v749, %v766
          %v789 = vadd.f32 %v750, %v766
          %v790 = vadd.f32 %v751, %v766
          %v791 = vadd.f32 %v752, %v766
          %v792 = vadd.f32 %v753, %v766
          %v793 = vadd.f32 %v754, %v766
          %v794 = vadd.f32 %v755, %v766
          %v795 = vadd.f32 %v756, %v766
          %v796 = vadd.f32 %v757, %v766
          %v797 = vadd.f32 %v758, %v766
          %v798 = vadd.f32 %v759, %v766
          %v799 = vadd.f32 %v760, %v766
          %v800 = vmax.f32 %v768, 0.0
          %v801 = vmax.f32 %v769, 0.0
          %v802 = vmax.f32 %v770, 0.0
          %v803 = vmax.f32 %v771, 0.0
          %v804 = vmax.f32 %v772, 0.0
          %v805 = vmax.f32 %v773, 0.0
          %v806 = vmax.f32 %v774, 0.0
          %v807 = vmax.f32 %v775, 0.0
          %v808 = vmax.f32 %v776, 0.0
          %v809 = vmax.f32 %v777, 0.0
          %v810 = vmax.f32 %v778, 0.0
          %v811 = vmax.f32 %v779, 0.0
          %v812 = vmax.f32 %v780, 0.0
          %v813 = vmax.f32 %v781, 0.0
          %v814 = vmax.f32 %v782, 0.0
          %v815 = vmax.f32 %v783, 0.0
          %v816 = vmax.f32 %v784, 0.0
          %v817 = vmax.f32 %v785, 0.0
          %v818 = vmax.f32 %v786, 0.0
          %v819 = vmax.f32 %v787, 0.0
          %v820 = vmax.f32 %v788, 0.0
          %v821 = vmax.f32 %v789, 0.0
          %v822 = vmax.f32 %v790, 0.0
          %v823 = vmax.f32 %v791, 0.0
          %v824 = vmax.f32 %v792, 0.0
          %v825 = vmax.f32 %v793, 0.0
          %v826 = vmax.f32 %v794, 0.0
          %v827 = vmax.f32 %v795, 0.0
          %v828 = vmax.f32 %v796, 0.0
          %v829 = vmax.f32 %v797, 0.0
          %v830 = vmax.f32 %v798, 0.0
          %v831 = vmax.f32 %v799, 0.0
          %832 = vst.msk [vmem:[%s257] sm:$0xff] %vm693, %v800
          %833 = vst.msk [vmem:[%s257 + $0x8] sm:$0xff] %vm693, %v801
          %834 = vst.msk [vmem:[%s257 + $0x10] sm:$0xff] %vm693, %v802
          %835 = vst.msk [vmem:[%s257 + $0x18] sm:$0xff] %vm693, %v803
          %836 = vst.msk [vmem:[%s257 + $0x20] sm:$0xff] %vm693, %v804
          %837 = vst.msk [vmem:[%s257 + $0x28] sm:$0xff] %vm693, %v805
          %838 = vst.msk [vmem:[%s257 + $0x30] sm:$0xff] %vm693, %v806
          %839 = vst.msk [vmem:[%s257 + $0x38] sm:$0xff] %vm693, %v807
          %840 = vst.msk [vmem:[%s257 + $0x40] sm:$0xff] %vm693, %v808
          %841 = vst.msk [vmem:[%s257 + $0x48] sm:$0xff] %vm693, %v809
          %842 = vst.msk [vmem:[%s257 + $0x50] sm:$0xff] %vm693, %v810
          %843 = vst.msk [vmem:[%s257 + $0x58] sm:$0xff] %vm693, %v811
          %844 = vst.msk [vmem:[%s257 + $0x60] sm:$0xff] %vm693, %v812
          %845 = vst.msk [vmem:[%s257 + $0x68] sm:$0xff] %vm693, %v813
          %846 = vst.msk [vmem:[%s257 + $0x70] sm:$0xff] %vm693, %v814
          %847 = vst.msk [vmem:[%s257 + $0x78] sm:$0xff] %vm693, %v815
          %848 = vst.msk [vmem:[%s257 + $0x80] sm:$0xff] %vm693, %v816
          %849 = vst.msk [vmem:[%s257 + $0x88] sm:$0xff] %vm693, %v817
          %850 = vst.msk [vmem:[%s257 + $0x90] sm:$0xff] %vm693, %v818
          %851 = vst.msk [vmem:[%s257 + $0x98] sm:$0xff] %vm693, %v819
          %852 = vst.msk [vmem:[%s257 + $0xa0] sm:$0xff] %vm693, %v820
          %853 = vst.msk [vmem:[%s257 + $0xa8] sm:$0xff] %vm693, %v821
          %854 = vst.msk [vmem:[%s257 + $0xb0] sm:$0xff] %vm693, %v822
          %855 = vst.msk [vmem:[%s257 + $0xb8] sm:$0xff] %vm693, %v823
          %856 = vst.msk [vmem:[%s257 + $0xc0] sm:$0xff] %vm693, %v824
          %857 = vst.msk [vmem:[%s257 + $0xc8] sm:$0xff] %vm693, %v825
          %858 = vst.msk [vmem:[%s257 + $0xd0] sm:$0xff] %vm693, %v826
          %859 = vst.msk [vmem:[%s257 + $0xd8] sm:$0xff] %vm693, %v827
          %860 = vst.msk [vmem:[%s257 + $0xe0] sm:$0xff] %vm693, %v828
          %861 = vst.msk [vmem:[%s257 + $0xe8] sm:$0xff] %vm693, %v829
          %862 = vst.msk [vmem:[%s257 + $0xf0] sm:$0xff] %vm693, %v830
          %863 = vst.msk [vmem:[%s257 + $0xf8] sm:$0xff] %vm693, %v831
        $region52: #{_lambda_.5} parent=31 // pred_fallthru
          _
        %s864 = sand.u32 %s132, 1
        %s865 = scalar_lea.sflag [#allocation5], %s864
        %s866 = sand.u32 %s132, 1
        %s867 = smul.addr %s866, 256
        %s868 = scalar_lea.vmem [#allocation9], %s867
        // Predicated region
        $region53: #{_lambda_.5} parent=31 // pred_check
          %p869 = pneg %p142
        $region54: #{_lambda_.5} parent=31 // pred_check_branch
          %871 = sbr.rel (%p869) target = $region56
        $region55: #{_lambda_.5} parent=31 // pred_region
          %s872 = smul.u32 32, %s26
          %s874 = ssub.s32 4096, 4096
          %875 = vsyncadd %s865, %s874
          %s876 = sadd.s32 %s27, %s872
          %s877 = smul.addr %s876, 128
          %s878 = scalar_lea.hbm %s3, %s877
          %s879 = sshll.u32 %s868, 4
          %s880 = int_to_ptr.vmem [resolvable:$true] %s879
          %885 = dma.vmem_to_hbm [thread:$0]  %s880, 4096, %s878, %s865, 128, 128, 8
        $region56: #{_lambda_.5} parent=31 // pred_fallthru
          _
      $region32: #{_lambda_.5} parent=5 // pred_fallthru
        _
      %p886 = scmp.le.s32.totalorder 2, %s16
      // Predicated region
      $region57: #{_lambda_.5} parent=5 // pred_check
        %p887 = pneg %p886
      $region58: #{_lambda_.5} parent=5 // pred_check_branch
        %889 = sbr.rel (%p887) target = $region60
      $region59: #{_lambda_.5} parent=5 // pred_region
        %s890 = ssub.s32 %s16, 2
        // Predicated region
        $region61: #{_lambda_.5} parent=59 // pred_check
          %p891 = pneg %p148
        $region62: #{_lambda_.5} parent=59 // pred_check_branch
          %893 = sbr.rel (%p891) target = $region64
        $region63: #{_lambda_.5} parent=59 // pred_region
          %s894 = sand.u32 %s133, 1
          %s895 = scalar_lea.sflag [#allocation5], %s894
          %s896 = sand.u32 %s133, 1
          %s897 = smul.addr %s896, 256
          %s898 = scalar_lea.vmem [#allocation9], %s897
          %899 = dma.done %s895, 4096
        $region64: #{_lambda_.5} parent=59 // pred_fallthru
          _
      $region60: #{_lambda_.5} parent=5 // pred_fallthru
        _
    $region6: #{_lambda_.5} parent=1 // loop_footer
      %s20 = sadd.s32 1, %s16
    $region7: #{_lambda_.5} parent=1 // loop_footer_branch
      %15 = sbr.rel target = $region3
    $region8: #{_lambda_.5} parent=1 // loop_exit
      _
    %900 = vsyncpa [#allocation4], 1
    %s901 = scalar_lea.sflag [#allocation4], 1
    %902 = vsyncpa %s901, 1
    %903 = vsyncpa [#allocation7], 1
    %904 = vsyncpa [#allocation5], 1
    %s905 = scalar_lea.sflag [#allocation5], 1
    %906 = vsyncpa %s905, 1

// kernel: _lambda_.3
$region0: #{_lambda_.3}
  #allocation0 [shape = 'u32[]', space=smem, size = 0x4, offset = 0x4, fixed_abs, tag = 'smem constant byte address 0x4 - core index']
  #allocation1 [shape = 'u32[144,128]{1,0:T(1,128)}', space=vmem, size = 0x12000, scoped, tag = 'internal scratch']
  %s0 = inlined_call_operand.hbm [shape: bf16[512,32], index: 0, kind: input, shape index: {}]
  %s1 = inlined_call_operand.hbm [shape: bf16[32,16], index: 1, kind: input, shape index: {}]
  %s2 = inlined_call_operand.hbm [shape: f32[1,16], index: 2, kind: input, shape index: {}]
  %s3 = inlined_call_operand.hbm [shape: bf16[16,16], index: 3, kind: input, shape index: {}]
  %s4 = inlined_call_operand.hbm [shape: f32[1,16], index: 4, kind: input, shape index: {}]
  %s5 = inlined_call_operand.hbm [shape: bf16[512,16], index: 5, kind: output, shape index: {}]
  %s6 = sld [smem:[#allocation0]]
  $region73: #{_lambda_.3} parent=0
    _
  %s8 = ssub.s32 1, %s6
  %s9 = scalar_select 0, %s8, %s6
  $region1: #{_lambda_.3} parent=0
    #allocation2 [shape = 'u8[131072]{0}', space=vmem, size = 0x20000, scoped, tag = 'input window, operand 0']
    #allocation3 [shape = 's32[2]{0}', space=sflag, size = 0x8, scoped, tag = 'scoped memory for _lambda_.3']
    #allocation4 [shape = 's32[2]{0}', space=sflag, size = 0x8, scoped, tag = 'scoped memory for _lambda_.3']
    #allocation5 [shape = 'u8[8192]{0}', space=vmem, size = 0x2000, scoped, tag = 'input window, operand 1, single buffered']
    #allocation6 [shape = 's32[1]{0}', space=sflag, size = 0x4, scoped, tag = 'scoped memory for _lambda_.3']
    #allocation7 [shape = 'u8[512]{0}', space=vmem, size = 0x400, scoped, tag = 'input window, operand 2, single buffered']
    #allocation8 [shape = 'u8[4096]{0}', space=vmem, size = 0x1000, scoped, tag = 'input window, operand 3, single buffered']
    #allocation9 [shape = 's32[1]{0}', space=sflag, size = 0x4, scoped, tag = 'scoped memory for _lambda_.3']
    #allocation10 [shape = 'u8[512]{0}', space=vmem, size = 0x400, scoped, tag = 'input window, operand 4, single buffered']
    #allocation11 [shape = 'u8[131072]{0}', space=vmem, size = 0x20000, scoped, tag = 'output window, operand 0']
    %10 = vsyncpa [#allocation3], 0
    %s11 = scalar_lea.sflag [#allocation3], 1
    %12 = vsyncpa %s11, 0
    %13 = vsyncpa [#allocation6], 0
    %14 = vsyncpa [#allocation9], 0
    %15 = vsyncpa [#allocation4], 0
    %s16 = scalar_lea.sflag [#allocation4], 1
    %17 = vsyncpa %s16, 0
    loop: start=0, step=1, limit=4
    $region2: #{_lambda_.3} parent=1 // loop_pre_header
      _
    $region3: #{_lambda_.3} parent=1 // loop_header
      %s19 = sphi 0, %s23
      %p20 = scmp.ge.s32.totalorder %s19, 4
      %s29 = sphi 0, %s31
      %s32 = sphi 0, %s29
      %s33 = sphi 0, %s32
      %s49 = sphi 0, %s33
      %s53 = sphi 0, %s53
      %s55 = sphi 0, %s53
      %s56 = sphi 0, %s55
      %s70 = sphi 0, %s56
      %s74 = sphi 0, %s74
      %s76 = sphi 0, %s74
      %s77 = sphi 0, %s76
      %s91 = sphi 0, %s77
      %s95 = sphi 0, %s95
      %s97 = sphi 0, %s95
      %s98 = sphi 0, %s97
      %s112 = sphi 0, %s98
      %s116 = sphi 0, %s116
      %s118 = sphi 0, %s116
      %s119 = sphi 0, %s118
      %s133 = sphi 0, %s119
      %s139 = sphi 0, %s141
      %s142 = sphi 0, %s139
      %s143 = sphi 0, %s142
      %s159 = sphi 0, %s143
    $region4: #{_lambda_.3} parent=1 // loop_header_branch
      %22 = sbr.rel (%p20) target = $region8
    $region5: #{_lambda_.3} parent=1 // loop_body
      %s24 = ssub.s32 %s19, 1
      %s25 = ssub.s32 %s19, 2
      %s26 = sadd.s32 %s19, 1
      %s27 = ssub.s32 %s19, %s26
      %p28 = scmp.eq.s32.totalorder %s27, 0
      %s30 = sadd.s32 %s29, 1
      %s31 = scalar_select %p28, %s29, %s30
      %p34 = pneg %p28
      %p35 = scmp.eq.s32.totalorder %s19, 1
      %p36 = por %p34, %p35
      %p37 = scmp.ne.s32.totalorder %s29, %s32
      %p38 = scmp.eq.s32.totalorder %s19, 0
      %p39 = por %p37, %p38
      %p40 = scmp.ne.s32.totalorder %s29, %s32
      %p41 = scmp.eq.s32.totalorder %s24, 1
      %p42 = por %p40, %p41
      %p43 = scmp.ne.s32.totalorder %s32, %s33
      %p44 = scmp.eq.s32.totalorder %s24, 0
      %p45 = por %p43, %p44
      %p46 = scmp.ne.s32.totalorder %s32, %s33
      %p47 = scmp.eq.s32.totalorder %s25, 1
      %p48 = por %p46, %p47
      %p50 = scmp.ne.s32.totalorder %s33, %s49
      %p51 = scmp.eq.s32.totalorder %s25, 0
      %p52 = por %p50, %p51
      %s54 = sadd.s32 %s53, 1
      %p57 = scmp.eq.s32.totalorder %s19, 1
      %p58 = scmp.ne.s32.totalorder %s53, %s55
      %p59 = scmp.eq.s32.totalorder %s19, 0
      %p60 = por %p58, %p59
      %p61 = scmp.ne.s32.totalorder %s53, %s55
      %p62 = scmp.eq.s32.totalorder %s24, 1
      %p63 = por %p61, %p62
      %p64 = scmp.ne.s32.totalorder %s55, %s56
      %p65 = scmp.eq.s32.totalorder %s24, 0
      %p66 = por %p64, %p65
      %p67 = scmp.ne.s32.totalorder %s55, %s56
      %p68 = scmp.eq.s32.totalorder %s25, 1
      %p69 = por %p67, %p68
      %p71 = scmp.ne.s32.totalorder %s56, %s70
      %p72 = scmp.eq.s32.totalorder %s25, 0
      %p73 = por %p71, %p72
      %s75 = sadd.s32 %s74, 1
      %p78 = scmp.eq.s32.totalorder %s19, 1
      %p79 = scmp.ne.s32.totalorder %s74, %s76
      %p80 = scmp.eq.s32.totalorder %s19, 0
      %p81 = por %p79, %p80
      %p82 = scmp.ne.s32.totalorder %s74, %s76
      %p83 = scmp.eq.s32.totalorder %s24, 1
      %p84 = por %p82, %p83
      %p85 = scmp.ne.s32.totalorder %s76, %s77
      %p86 = scmp.eq.s32.totalorder %s24, 0
      %p87 = por %p85, %p86
      %p88 = scmp.ne.s32.totalorder %s76, %s77
      %p89 = scmp.eq.s32.totalorder %s25, 1
      %p90 = por %p88, %p89
      %p92 = scmp.ne.s32.totalorder %s77, %s91
      %p93 = scmp.eq.s32.totalorder %s25, 0
      %p94 = por %p92, %p93
      %s96 = sadd.s32 %s95, 1
      %p99 = scmp.eq.s32.totalorder %s19, 1
      %p100 = scmp.ne.s32.totalorder %s95, %s97
      %p101 = scmp.eq.s32.totalorder %s19, 0
      %p102 = por %p100, %p101
      %p103 = scmp.ne.s32.totalorder %s95, %s97
      %p104 = scmp.eq.s32.totalorder %s24, 1
      %p105 = por %p103, %p104
      %p106 = scmp.ne.s32.totalorder %s97, %s98
      %p107 = scmp.eq.s32.totalorder %s24, 0
      %p108 = por %p106, %p107
      %p109 = scmp.ne.s32.totalorder %s97, %s98
      %p110 = scmp.eq.s32.totalorder %s25, 1
      %p111 = por %p109, %p110
      %p113 = scmp.ne.s32.totalorder %s98, %s112
      %p114 = scmp.eq.s32.totalorder %s25, 0
      %p115 = por %p113, %p114
      %s117 = sadd.s32 %s116, 1
      %p120 = scmp.eq.s32.totalorder %s19, 1
      %p121 = scmp.ne.s32.totalorder %s116, %s118
      %p122 = scmp.eq.s32.totalorder %s19, 0
      %p123 = por %p121, %p122
      %p124 = scmp.ne.s32.totalorder %s116, %s118
      %p125 = scmp.eq.s32.totalorder %s24, 1
      %p126 = por %p124, %p125
      %p127 = scmp.ne.s32.totalorder %s118, %s119
      %p128 = scmp.eq.s32.totalorder %s24, 0
      %p129 = por %p127, %p128
      %p130 = scmp.ne.s32.totalorder %s118, %s119
      %p131 = scmp.eq.s32.totalorder %s25, 1
      %p132 = por %p130, %p131
      %p134 = scmp.ne.s32.totalorder %s119, %s133
      %p135 = scmp.eq.s32.totalorder %s25, 0
      %p136 = por %p134, %p135
      %s137 = ssub.s32 %s19, %s26
      %p138 = scmp.eq.s32.totalorder %s137, 0
      %s140 = sadd.s32 %s139, 1
      %s141 = scalar_select %p138, %s139, %s140
      %p144 = pneg %p138
      %p145 = scmp.eq.s32.totalorder %s19, 1
      %p146 = por %p144, %p145
      %p147 = scmp.ne.s32.totalorder %s139, %s142
      %p148 = scmp.eq.s32.totalorder %s19, 0
      %p149 = por %p147, %p148
      %p150 = scmp.ne.s32.totalorder %s139, %s142
      %p151 = scmp.eq.s32.totalorder %s24, 1
      %p152 = por %p150, %p151
      %p153 = scmp.ne.s32.totalorder %s142, %s143
      %p154 = scmp.eq.s32.totalorder %s24, 0
      %p155 = por %p153, %p154
      %p156 = scmp.ne.s32.totalorder %s142, %s143
      %p157 = scmp.eq.s32.totalorder %s25, 1
      %p158 = por %p156, %p157
      %p160 = scmp.ne.s32.totalorder %s143, %s159
      %p161 = scmp.eq.s32.totalorder %s25, 0
      %p162 = por %p160, %p161
      %p163 = scmp.le.s32.totalorder 1, %s19
      %p164 = scmp.lt.s32.totalorder %s19, 3
      %p165 = pnand %p163, %p164
      %p166 = pneg %p165
      // Predicated region
      $region9: #{_lambda_.3} parent=5 // pred_check
        _
      $region10: #{_lambda_.3} parent=5 // pred_check_branch
        %168 = sbr.rel (%p165) target = $region12
      $region11: #{_lambda_.3} parent=5 // pred_region
        %s169 = ssub.s32 %s19, 1
        // Predicated region
        $region13: #{_lambda_.3} parent=11 // pred_check
          %p170 = pneg %p66
        $region14: #{_lambda_.3} parent=11 // pred_check_branch
          %172 = sbr.rel (%p170) target = $region16
        $region15: #{_lambda_.3} parent=11 // pred_region
          %s174 = ssub.s32 256, 256
          %175 = vsyncadd [#allocation6], %s174
          %s176 = sshll.u32 [#allocation5], 4
          %s177 = int_to_ptr.vmem [resolvable:$true] %s176
          %182 = dma.hbm_to_vmem [thread:$0]  %s1, 256, %s177, [#allocation6], 64, 64, 4
        $region16: #{_lambda_.3} parent=11 // pred_fallthru
          _
        // Predicated region
        $region17: #{_lambda_.3} parent=11 // pred_check
          %p183 = pneg %p87
        $region18: #{_lambda_.3} parent=11 // pred_check_branch
          %185 = sbr.rel (%p183) target = $region20
        $region19: #{_lambda_.3} parent=11 // pred_region
          %s187 = ssub.s32 16, 16
          %188 = vsyncadd [#allocation6], %s187
          %s190 = sshll.u32 [#allocation7], 4
          %s191 = int_to_ptr.vmem [resolvable:$true] %s190
          %193 = dma.hbm_to_vmem [thread:$0]  %s2, 16, %s191, [#allocation6]
        $region20: #{_lambda_.3} parent=11 // pred_fallthru
          _
        // Predicated region
        $region21: #{_lambda_.3} parent=11 // pred_check
          %p194 = pneg %p108
        $region22: #{_lambda_.3} parent=11 // pred_check_branch
          %196 = sbr.rel (%p194) target = $region24
        $region23: #{_lambda_.3} parent=11 // pred_region
          %s198 = ssub.s32 128, 128
          %199 = vsyncadd [#allocation9], %s198
          %s200 = sshll.u32 [#allocation8], 4
          %s201 = int_to_ptr.vmem [resolvable:$true] %s200
          %206 = dma.hbm_to_vmem [thread:$0]  %s3, 128, %s201, [#allocation9], 64, 64, 4
        $region24: #{_lambda_.3} parent=11 // pred_fallthru
          _
        // Predicated region
        $region25: #{_lambda_.3} parent=11 // pred_check
          %p207 = pneg %p129
        $region26: #{_lambda_.3} parent=11 // pred_check_branch
          %209 = sbr.rel (%p207) target = $region28
        $region27: #{_lambda_.3} parent=11 // pred_region
          %s211 = ssub.s32 16, 16
          %212 = vsyncadd [#allocation9], %s211
          %s214 = sshll.u32 [#allocation10], 4
          %s215 = int_to_ptr.vmem [resolvable:$true] %s214
          %217 = dma.hbm_to_vmem [thread:$0]  %s4, 16, %s215, [#allocation9]
        $region28: #{_lambda_.3} parent=11 // pred_fallthru
          _
      $region12: #{_lambda_.3} parent=5 // pred_fallthru
        _
      %p218 = scmp.lt.s32.totalorder %s19, 2
      // Predicated region
      $region29: #{_lambda_.3} parent=5 // pred_check
        %p219 = pneg %p218
      $region30: #{_lambda_.3} parent=5 // pred_check_branch
        %221 = sbr.rel (%p219) target = $region32
      $region31: #{_lambda_.3} parent=5 // pred_region
        // Predicated region
        $region33: #{_lambda_.3} parent=31 // pred_check
          %p222 = pneg %p39
        $region34: #{_lambda_.3} parent=31 // pred_check_branch
          %224 = sbr.rel (%p222) target = $region36
        $region35: #{_lambda_.3} parent=31 // pred_region
          %s225 = sand.u32 %s29, 1
          %s226 = scalar_lea.sflag [#allocation3], %s225
          %s227 = sand.u32 %s29, 1
          %s228 = smul.addr %s227, 128
          %s229 = scalar_lea.vmem [#allocation2], %s228
          %s230 = smul.u32 32, %s19
          %s232 = ssub.s32 2048, 2048
          %233 = vsyncadd %s226, %s232
          %s234 = smul.addr %s230, 64
          %s235 = scalar_lea.hbm %s0, %s234
          %s236 = sshll.u32 %s229, 4
          %s237 = int_to_ptr.vmem [resolvable:$true] %s236
          %242 = dma.hbm_to_vmem [thread:$0]  %s235, 2048, %s237, %s226, 64, 64, 4
        $region36: #{_lambda_.3} parent=31 // pred_fallthru
          _
      $region32: #{_lambda_.3} parent=5 // pred_fallthru
        _
      %p243 = scmp.le.s32.totalorder 1, %s19
      %p244 = scmp.lt.s32.totalorder %s19, 3
      %p245 = pnand %p243, %p244
      %p246 = pneg %p245
      // Predicated region
      $region37: #{_lambda_.3} parent=5 // pred_check
        _
      $region38: #{_lambda_.3} parent=5 // pred_check_branch
        %248 = sbr.rel (%p245) target = $region40
      $region39: #{_lambda_.3} parent=5 // pred_region
        %s249 = ssub.s32 %s19, 1
        %s250 = sand.u32 %s32, 1
        %s251 = scalar_lea.sflag [#allocation3], %s250
        %s252 = sand.u32 %s32, 1
        %s253 = smul.addr %s252, 128
        %s254 = scalar_lea.vmem [#allocation2], %s253
        // Predicated region
        $region41: #{_lambda_.3} parent=39 // pred_check
          %p255 = pneg %p45
        $region42: #{_lambda_.3} parent=39 // pred_check_branch
          %257 = sbr.rel (%p255) target = $region44
        $region43: #{_lambda_.3} parent=39 // pred_region
          %258 = dma.done %s251, 2048
        $region44: #{_lambda_.3} parent=39 // pred_fallthru
          _
        // Predicated region
        $region45: #{_lambda_.3} parent=39 // pred_check
          %p259 = pneg %p66
        $region46: #{_lambda_.3} parent=39 // pred_check_branch
          %261 = sbr.rel (%p259) target = $region48
        $region47: #{_lambda_.3} parent=39 // pred_region
          %262 = dma.done [#allocation6], 256
        $region48: #{_lambda_.3} parent=39 // pred_fallthru
          _
        // Predicated region
        $region49: #{_lambda_.3} parent=39 // pred_check
          %p263 = pneg %p87
        $region50: #{_lambda_.3} parent=39 // pred_check_branch
          %265 = sbr.rel (%p263) target = $region52
        $region51: #{_lambda_.3} parent=39 // pred_region
          %266 = dma.done [#allocation6], 16
        $region52: #{_lambda_.3} parent=39 // pred_fallthru
          _
        // Predicated region
        $region53: #{_lambda_.3} parent=39 // pred_check
          %p267 = pneg %p108
        $region54: #{_lambda_.3} parent=39 // pred_check_branch
          %269 = sbr.rel (%p267) target = $region56
        $region55: #{_lambda_.3} parent=39 // pred_region
          %270 = dma.done [#allocation9], 128
        $region56: #{_lambda_.3} parent=39 // pred_fallthru
          _
        // Predicated region
        $region57: #{_lambda_.3} parent=39 // pred_check
          %p271 = pneg %p129
        $region58: #{_lambda_.3} parent=39 // pred_check_branch
          %273 = sbr.rel (%p271) target = $region60
        $region59: #{_lambda_.3} parent=39 // pred_region
          %274 = dma.done [#allocation9], 16
        $region60: #{_lambda_.3} parent=39 // pred_fallthru
          _
        %s275 = sand.u32 %s32, 1
        %s276 = scalar_lea.sflag [#allocation3], %s275
        %s277 = sand.u32 %s32, 1
        %s278 = smul.addr %s277, 128
        %s279 = scalar_lea.vmem [#allocation2], %s278
        %p280 = pneg %p45
        %p281 = pneg %p42
        %p282 = pneg %p66
        %p283 = pneg %p63
        %p284 = pneg %p87
        %p285 = pneg %p84
        %p286 = pneg %p108
        %p287 = pneg %p105
        %p288 = pneg %p129
        %p289 = pneg %p126
        %p290 = pneg %p155
        %p291 = pneg %p152
        %s292 = sand.u32 %s142, 1
        %s293 = scalar_lea.sflag [#allocation4], %s292
        %s294 = sand.u32 %s142, 1
        %s295 = smul.addr %s294, 128
        %s296 = scalar_lea.vmem [#allocation11], %s295
        %s297 = smul.u32 32, %s24
        %s298 = smul.u32 32, %s24
        %v300 = vld [vmem:[%s254] sm:$0xf]
        %v301 = vld [vmem:[%s254 + $0x4] sm:$0xf]
        %v302 = vld [vmem:[%s254 + $0x8] sm:$0xf]
        %v303 = vld [vmem:[%s254 + $0xc] sm:$0xf]
        %v304 = vld [vmem:[%s254 + $0x10] sm:$0xf]
        %v305 = vld [vmem:[%s254 + $0x14] sm:$0xf]
        %v306 = vld [vmem:[%s254 + $0x18] sm:$0xf]
        %v307 = vld [vmem:[%s254 + $0x1c] sm:$0xf]
        %v308 = vld [vmem:[%s254 + $0x20] sm:$0xf]
        %v309 = vld [vmem:[%s254 + $0x24] sm:$0xf]
        %v310 = vld [vmem:[%s254 + $0x28] sm:$0xf]
        %v311 = vld [vmem:[%s254 + $0x2c] sm:$0xf]
        %v312 = vld [vmem:[%s254 + $0x30] sm:$0xf]
        %v313 = vld [vmem:[%s254 + $0x34] sm:$0xf]
        %v314 = vld [vmem:[%s254 + $0x38] sm:$0xf]
        %v315 = vld [vmem:[%s254 + $0x3c] sm:$0xf]
        %v316 = vld [vmem:[%s254 + $0x40] sm:$0xf]
        %v317 = vld [vmem:[%s254 + $0x44] sm:$0xf]
        %v318 = vld [vmem:[%s254 + $0x48] sm:$0xf]
        %v319 = vld [vmem:[%s254 + $0x4c] sm:$0xf]
        %v320 = vld [vmem:[%s254 + $0x50] sm:$0xf]
        %v321 = vld [vmem:[%s254 + $0x54] sm:$0xf]
        %v322 = vld [vmem:[%s254 + $0x58] sm:$0xf]
        %v323 = vld [vmem:[%s254 + $0x5c] sm:$0xf]
        %v324 = vld [vmem:[%s254 + $0x60] sm:$0xf]
        %v325 = vld [vmem:[%s254 + $0x64] sm:$0xf]
        %v326 = vld [vmem:[%s254 + $0x68] sm:$0xf]
        %v327 = vld [vmem:[%s254 + $0x6c] sm:$0xf]
        %v328 = vld [vmem:[%s254 + $0x70] sm:$0xf]
        %v329 = vld [vmem:[%s254 + $0x74] sm:$0xf]
        %v330 = vld [vmem:[%s254 + $0x78] sm:$0xf]
        %v331 = vld [vmem:[%s254 + $0x7c] sm:$0xf]
        %v332 = vld [vmem:[#allocation5] sm:$0xf]
        %v333 = vld [vmem:[#allocation5 + $0x4] sm:$0xf]
        %v334 = vld [vmem:[#allocation5 + $0x8] sm:$0xf]
        %v335 = vld [vmem:[#allocation5 + $0xc] sm:$0xf]
        %v336 = vld [vmem:[#allocation7] sm:$0x1]
        %v338 = vlaneseq
        %v339 = vshrl.u32 %v338, 7
        %v340 = vsub.s32 0, %v339
        %v341 = vrot.slane %v336, %v340
        %v375 = vunpack.c.l.b16 %v300
        %v376 = vunpack.c.l.b16 %v301
        %v377 = vunpack.c.l.b16 %v302
        %v378 = vunpack.c.l.b16 %v303
        %v379 = vunpack.c.l.b16 %v304
        %v380 = vunpack.c.l.b16 %v305
        %v381 = vunpack.c.l.b16 %v306
        %v382 = vunpack.c.l.b16 %v307
        %v383 = vunpack.c.l.b16 %v308
        %v384 = vunpack.c.l.b16 %v309
        %v385 = vunpack.c.l.b16 %v310
        %v386 = vunpack.c.l.b16 %v311
        %v387 = vunpack.c.l.b16 %v312
        %v388 = vunpack.c.l.b16 %v313
        %v389 = vunpack.c.l.b16 %v314
        %v390 = vunpack.c.l.b16 %v315
        %v391 = vunpack.c.l.b16 %v316
        %v392 = vunpack.c.l.b16 %v317
        %v393 = vunpack.c.l.b16 %v318
        %v394 = vunpack.c.l.b16 %v319
        %v395 = vunpack.c.l.b16 %v320
        %v396 = vunpack.c.l.b16 %v321
        %v397 = vunpack.c.l.b16 %v322
        %v398 = vunpack.c.l.b16 %v323
        %v399 = vunpack.c.l.b16 %v324
        %v400 = vunpack.c.l.b16 %v325
        %v401 = vunpack.c.l.b16 %v326
        %v402 = vunpack.c.l.b16 %v327
        %v403 = vunpack.c.l.b16 %v328
        %v404 = vunpack.c.l.b16 %v329
        %v405 = vunpack.c.l.b16 %v330
        %v406 = vunpack.c.l.b16 %v331
        %v407 = vpack.c.b16 %v376, %v375
        %v408 = vpack.c.b16 %v378, %v377
        %v409 = vpack.c.b16 %v380, %v379
        %v410 = vpack.c.b16 %v382, %v381
        %v411 = vpack.c.b16 %v384, %v383
        %v412 = vpack.c.b16 %v386, %v385
        %v413 = vpack.c.b16 %v388, %v387
        %v414 = vpack.c.b16 %v390, %v389
        %v415 = vpack.c.b16 %v392, %v391
        %v416 = vpack.c.b16 %v394, %v393
        %v417 = vpack.c.b16 %v396, %v395
        %v418 = vpack.c.b16 %v398, %v397
        %v419 = vpack.c.b16 %v400, %v399
        %v420 = vpack.c.b16 %v402, %v401
        %v421 = vpack.c.b16 %v404, %v403
        %v422 = vpack.c.b16 %v406, %v405
        %v427 = vunpack.c.l.b16 %v332
        %v428 = vunpack.c.l.b16 %v333
        %v429 = vunpack.c.l.b16 %v334
        %v430 = vunpack.c.l.b16 %v335
        %v431 = vpack.c.b16 %v428, %v427
        %v432 = vpack.c.b16 %v430, %v429
        %vm435 = vcmask 261120
        %v437 = vsel %vm435, %v407, 0
        %v440 = vsel %vm435, %v408, 0
        %v443 = vsel %vm435, %v409, 0
        %v446 = vsel %vm435, %v410, 0
        %v449 = vsel %vm435, %v411, 0
        %v452 = vsel %vm435, %v412, 0
        %v455 = vsel %vm435, %v413, 0
        %v458 = vsel %vm435, %v414, 0
        %v461 = vsel %vm435, %v415, 0
        %v464 = vsel %vm435, %v416, 0
        %v467 = vsel %vm435, %v417, 0
        %v470 = vsel %vm435, %v418, 0
        %v473 = vsel %vm435, %v419, 0
        %v476 = vsel %vm435, %v420, 0
        %v479 = vsel %vm435, %v421, 0
        %v482 = vsel %vm435, %v422, 0
        %484 = vmatprep.subr.bf16.mxu0 0
        %485 = vmatpush1.bf16.msra.mxu0 %v431
        %486 = vmatprep.subr.bf16.mxu0 0
        %487 = vmatpush1.bf16.msra.mxu0 %v432
        %488 = vmatprep.subr.bf16.mxu0 0
        %489 = vmatpush1.bf16.msra.mxu0 0
        %490 = vmatprep.subr.bf16.mxu0 0
        %491 = vmatpush1.bf16.msra.mxu0 0
        %492 = vmatprep.subr.bf16.mxu0 0
        %493 = vmatpush1.bf16.msra.mxu0 0
        %494 = vmatprep.subr.bf16.mxu0 0
        %495 = vmatpush1.bf16.msra.mxu0 0
        %496 = vmatprep.subr.bf16.mxu0 0
        %497 = vmatpush1.bf16.msra.mxu0 0
        %498 = vmatprep.subr.bf16.mxu0 0
        %499 = vmatpush1.bf16.msra.mxu0 0
        %500 = vmatprep.subr.bf16.mxu0 0
        %501 = vmatpush1.bf16.msra.mxu0 0
        %502 = vmatprep.subr.bf16.mxu0 0
        %503 = vmatpush1.bf16.msra.mxu0 0
        %504 = vmatprep.subr.bf16.mxu0 0
        %505 = vmatpush1.bf16.msra.mxu0 0
        %506 = vmatprep.subr.bf16.mxu0 0
        %507 = vmatpush1.bf16.msra.mxu0 0
        %508 = vmatprep.subr.bf16.mxu0 0
        %509 = vmatpush1.bf16.msra.mxu0 0
        %510 = vmatprep.subr.bf16.mxu0 0
        %511 = vmatpush1.bf16.msra.mxu0 0
        %512 = vmatprep.subr.bf16.mxu0 0
        %513 = vmatpush1.bf16.msra.mxu0 0
        %514 = vmatprep.subr.bf16.mxu0 0
        %515 = vmatpush1.bf16.msra.mxu0 0
        %516 = vmatprep.mubr.bf16.mxu0 0
        %517 = vmatmul.mubr.bf16.gmra.mrb[0].mxu0 %v437
        %v518 = vpop.f32.mrb[0].mxu0
        %v519 = vadd.f32 %v341, %v518
        %v520 = vpop.f32.mrb[0].mxu0
        %v521 = vpop.f32.mrb[0].mxu0
        %v522 = vadd.f32 %v341, %v521
        %v523 = vpop.f32.mrb[0].mxu0
        %524 = vmatprep.mubr.bf16.mxu0 0
        %525 = vmatmul.mubr.bf16.gmra.mrb[0].mxu0 %v440
        %v526 = vpop.f32.mrb[0].mxu0
        %v527 = vadd.f32 %v341, %v526
        %v528 = vpop.f32.mrb[0].mxu0
        %v529 = vpop.f32.mrb[0].mxu0
        %v530 = vadd.f32 %v341, %v529
        %v531 = vpop.f32.mrb[0].mxu0
        %532 = vmatprep.mubr.bf16.mxu0 0
        %533 = vmatmul.mubr.bf16.gmra.mrb[0].mxu0 %v443
        %v534 = vpop.f32.mrb[0].mxu0
        %v535 = vadd.f32 %v341, %v534
        %v536 = vpop.f32.mrb[0].mxu0
        %v537 = vpop.f32.mrb[0].mxu0
        %v538 = vadd.f32 %v341, %v537
        %v539 = vpop.f32.mrb[0].mxu0
        %540 = vmatprep.mubr.bf16.mxu0 0
        %541 = vmatmul.mubr.bf16.gmra.mrb[0].mxu0 %v446
        %v542 = vpop.f32.mrb[0].mxu0
        %v543 = vadd.f32 %v341, %v542
        %v544 = vpop.f32.mrb[0].mxu0
        %v545 = vpop.f32.mrb[0].mxu0
        %v546 = vadd.f32 %v341, %v545
        %v547 = vpop.f32.mrb[0].mxu0
        %548 = vmatprep.mubr.bf16.mxu0 0
        %549 = vmatmul.mubr.bf16.gmra.mrb[0].mxu0 %v449
        %v550 = vpop.f32.mrb[0].mxu0
        %v551 = vadd.f32 %v341, %v550
        %v552 = vpop.f32.mrb[0].mxu0
        %v553 = vpop.f32.mrb[0].mxu0
        %v554 = vadd.f32 %v341, %v553
        %v555 = vpop.f32.mrb[0].mxu0
        %556 = vmatprep.mubr.bf16.mxu0 0
        %557 = vmatmul.mubr.bf16.gmra.mrb[0].mxu0 %v452
        %v558 = vpop.f32.mrb[0].mxu0
        %v559 = vadd.f32 %v341, %v558
        %v560 = vpop.f32.mrb[0].mxu0
        %v561 = vpop.f32.mrb[0].mxu0
        %v562 = vadd.f32 %v341, %v561
        %v563 = vpop.f32.mrb[0].mxu0
        %564 = vmatprep.mubr.bf16.mxu0 0
        %565 = vmatmul.mubr.bf16.gmra.mrb[0].mxu0 %v455
        %v566 = vpop.f32.mrb[0].mxu0
        %v567 = vadd.f32 %v341, %v566
        %v568 = vpop.f32.mrb[0].mxu0
        %v569 = vpop.f32.mrb[0].mxu0
        %v570 = vadd.f32 %v341, %v569
        %v571 = vpop.f32.mrb[0].mxu0
        %572 = vmatprep.mubr.bf16.mxu0 0
        %573 = vmatmul.mubr.bf16.gmra.mrb[0].mxu0 %v458
        %v574 = vpop.f32.mrb[0].mxu0
        %v575 = vadd.f32 %v341, %v574
        %v576 = vpop.f32.mrb[0].mxu0
        %v577 = vpop.f32.mrb[0].mxu0
        %v578 = vadd.f32 %v341, %v577
        %v579 = vpop.f32.mrb[0].mxu0
        %580 = vmatprep.mubr.bf16.mxu0 0
        %581 = vmatmul.mubr.bf16.gmra.mrb[0].mxu0 %v461
        %v582 = vpop.f32.mrb[0].mxu0
        %v583 = vadd.f32 %v341, %v582
        %v584 = vpop.f32.mrb[0].mxu0
        %v585 = vpop.f32.mrb[0].mxu0
        %v586 = vadd.f32 %v341, %v585
        %v587 = vpop.f32.mrb[0].mxu0
        %588 = vmatprep.mubr.bf16.mxu0 0
        %589 = vmatmul.mubr.bf16.gmra.mrb[0].mxu0 %v464
        %v590 = vpop.f32.mrb[0].mxu0
        %v591 = vadd.f32 %v341, %v590
        %v592 = vpop.f32.mrb[0].mxu0
        %v593 = vpop.f32.mrb[0].mxu0
        %v594 = vadd.f32 %v341, %v593
        %v595 = vpop.f32.mrb[0].mxu0
        %596 = vmatprep.mubr.bf16.mxu0 0
        %597 = vmatmul.mubr.bf16.gmra.mrb[0].mxu0 %v467
        %v598 = vpop.f32.mrb[0].mxu0
        %v599 = vadd.f32 %v341, %v598
        %v600 = vpop.f32.mrb[0].mxu0
        %v601 = vpop.f32.mrb[0].mxu0
        %v602 = vadd.f32 %v341, %v601
        %v603 = vpop.f32.mrb[0].mxu0
        %604 = vmatprep.mubr.bf16.mxu0 0
        %605 = vmatmul.mubr.bf16.gmra.mrb[0].mxu0 %v470
        %v606 = vpop.f32.mrb[0].mxu0
        %v607 = vadd.f32 %v341, %v606
        %v608 = vpop.f32.mrb[0].mxu0
        %v609 = vpop.f32.mrb[0].mxu0
        %v610 = vadd.f32 %v341, %v609
        %v611 = vpop.f32.mrb[0].mxu0
        %612 = vmatprep.mubr.bf16.mxu0 0
        %613 = vmatmul.mubr.bf16.gmra.mrb[0].mxu0 %v473
        %v614 = vpop.f32.mrb[0].mxu0
        %v615 = vadd.f32 %v341, %v614
        %v616 = vpop.f32.mrb[0].mxu0
        %v617 = vpop.f32.mrb[0].mxu0
        %v618 = vadd.f32 %v341, %v617
        %v619 = vpop.f32.mrb[0].mxu0
        %620 = vmatprep.mubr.bf16.mxu0 0
        %621 = vmatmul.mubr.bf16.gmra.mrb[0].mxu0 %v476
        %v622 = vpop.f32.mrb[0].mxu0
        %v623 = vadd.f32 %v341, %v622
        %v624 = vpop.f32.mrb[0].mxu0
        %v625 = vpop.f32.mrb[0].mxu0
        %v626 = vadd.f32 %v341, %v625
        %v627 = vpop.f32.mrb[0].mxu0
        %628 = vmatprep.mubr.bf16.mxu0 0
        %629 = vmatmul.mubr.bf16.gmra.mrb[0].mxu0 %v479
        %v630 = vpop.f32.mrb[0].mxu0
        %v631 = vadd.f32 %v341, %v630
        %v632 = vpop.f32.mrb[0].mxu0
        %v633 = vpop.f32.mrb[0].mxu0
        %v634 = vadd.f32 %v341, %v633
        %v635 = vpop.f32.mrb[0].mxu0
        %636 = vmatprep.mubr.bf16.mxu0 0
        %637 = vmatmul.mubr.bf16.gmra.mrb[0].mxu0 %v482
        %v638 = vpop.f32.mrb[0].mxu0
        %v639 = vadd.f32 %v341, %v638
        %v640 = vpop.f32.mrb[0].mxu0
        %v641 = vpop.f32.mrb[0].mxu0
        %v642 = vadd.f32 %v341, %v641
        %v643 = vpop.f32.mrb[0].mxu0
        %644 = vdwg.mxu0
        %v645 = vmax.f32 %v519, 0.0
        %v646 = vmax.f32 %v522, 0.0
        %v647 = vmax.f32 %v527, 0.0
        %v648 = vmax.f32 %v530, 0.0
        %v649 = vmax.f32 %v535, 0.0
        %v650 = vmax.f32 %v538, 0.0
        %v651 = vmax.f32 %v543, 0.0
        %v652 = vmax.f32 %v546, 0.0
        %v653 = vmax.f32 %v551, 0.0
        %v654 = vmax.f32 %v554, 0.0
        %v655 = vmax.f32 %v559, 0.0
        %v656 = vmax.f32 %v562, 0.0
        %v657 = vmax.f32 %v567, 0.0
        %v658 = vmax.f32 %v570, 0.0
        %v659 = vmax.f32 %v575, 0.0
        %v660 = vmax.f32 %v578, 0.0
        %v661 = vmax.f32 %v583, 0.0
        %v662 = vmax.f32 %v586, 0.0
        %v663 = vmax.f32 %v591, 0.0
        %v664 = vmax.f32 %v594, 0.0
        %v665 = vmax.f32 %v599, 0.0
        %v666 = vmax.f32 %v602, 0.0
        %v667 = vmax.f32 %v607, 0.0
        %v668 = vmax.f32 %v610, 0.0
        %v669 = vmax.f32 %v615, 0.0
        %v670 = vmax.f32 %v618, 0.0
        %v671 = vmax.f32 %v623, 0.0
        %v672 = vmax.f32 %v626, 0.0
        %v673 = vmax.f32 %v631, 0.0
        %v674 = vmax.f32 %v634, 0.0
        %v675 = vmax.f32 %v639, 0.0
        %v676 = vmax.f32 %v642, 0.0
        %v677 = vpack.c.bf16 %v646, %v645
        %v678 = vpack.c.bf16 %v648, %v647
        %v679 = vpack.c.bf16 %v650, %v649
        %v680 = vpack.c.bf16 %v652, %v651
        %v681 = vpack.c.bf16 %v654, %v653
        %v682 = vpack.c.bf16 %v656, %v655
        %v683 = vpack.c.bf16 %v658, %v657
        %v684 = vpack.c.bf16 %v660, %v659
        %v685 = vpack.c.bf16 %v662, %v661
        %v686 = vpack.c.bf16 %v664, %v663
        %v687 = vpack.c.bf16 %v666, %v665
        %v688 = vpack.c.bf16 %v668, %v667
        %v689 = vpack.c.bf16 %v670, %v669
        %v690 = vpack.c.bf16 %v672, %v671
        %v691 = vpack.c.bf16 %v674, %v673
        %v692 = vpack.c.bf16 %v676, %v675
        %v693 = vld [vmem:[#allocation8] sm:$0xf]
        %v694 = vld [vmem:[#allocation8 + $0x4] sm:$0xf]
        %v695 = vld [vmem:[#allocation10] sm:$0x1]
        %v697 = vlaneseq
        %v698 = vshrl.u32 %v697, 7
        %v699 = vsub.s32 0, %v698
        %v700 = vrot.slane %v695, %v699
        %v704 = vunpack.c.l.b16 %v693
        %v705 = vunpack.c.l.b16 %v694
        %v706 = vpack.c.b16 %v705, %v704
        %vm708 = vcmask 130048
        %v710 = vsel %vm708, %v677, 0
        %v713 = vsel %vm708, %v678, 0
        %v716 = vsel %vm708, %v679, 0
        %v719 = vsel %vm708, %v680, 0
        %v722 = vsel %vm708, %v681, 0
        %v725 = vsel %vm708, %v682, 0
        %v728 = vsel %vm708, %v683, 0
        %v731 = vsel %vm708, %v684, 0
        %v734 = vsel %vm708, %v685, 0
        %v737 = vsel %vm708, %v686, 0
        %v740 = vsel %vm708, %v687, 0
        %v743 = vsel %vm708, %v688, 0
        %v746 = vsel %vm708, %v689, 0
        %v749 = vsel %vm708, %v690, 0
        %v752 = vsel %vm708, %v691, 0
        %v755 = vsel %vm708, %v692, 0
        %757 = vmatprep.subr.bf16.mxu0 0
        %758 = vmatpush1.bf16.msra.mxu0 %v706
        %759 = vmatprep.subr.bf16.mxu0 0
        %760 = vmatpush1.bf16.msra.mxu0 0
        %761 = vmatprep.subr.bf16.mxu0 0
        %762 = vmatpush1.bf16.msra.mxu0 0
        %763 = vmatprep.subr.bf16.mxu0 0
        %764 = vmatpush1.bf16.msra.mxu0 0
        %765 = vmatprep.subr.bf16.mxu0 0
        %766 = vmatpush1.bf16.msra.mxu0 0
        %767 = vmatprep.subr.bf16.mxu0 0
        %768 = vmatpush1.bf16.msra.mxu0 0
        %769 = vmatprep.subr.bf16.mxu0 0
        %770 = vmatpush1.bf16.msra.mxu0 0
        %771 = vmatprep.subr.bf16.mxu0 0
        %772 = vmatpush1.bf16.msra.mxu0 0
        %773 = vmatprep.subr.bf16.mxu0 0
        %774 = vmatpush1.bf16.msra.mxu0 0
        %775 = vmatprep.subr.bf16.mxu0 0
        %776 = vmatpush1.bf16.msra.mxu0 0
        %777 = vmatprep.subr.bf16.mxu0 0
        %778 = vmatpush1.bf16.msra.mxu0 0
        %779 = vmatprep.subr.bf16.mxu0 0
        %780 = vmatpush1.bf16.msra.mxu0 0
        %781 = vmatprep.subr.bf16.mxu0 0
        %782 = vmatpush1.bf16.msra.mxu0 0
        %783 = vmatprep.subr.bf16.mxu0 0
        %784 = vmatpush1.bf16.msra.mxu0 0
        %785 = vmatprep.subr.bf16.mxu0 0
        %786 = vmatpush1.bf16.msra.mxu0 0
        %787 = vmatprep.subr.bf16.mxu0 0
        %788 = vmatpush1.bf16.msra.mxu0 0
        %789 = vmatprep.mubr.bf16.mxu0 0
        %790 = vmatmul.mubr.bf16.gmra.mrb[0].mxu0 %v710
        %v791 = vpop.f32.mrb[0].mxu0
        %v792 = vadd.f32 %v700, %v791
        %v793 = vpop.f32.mrb[0].mxu0
        %v794 = vpop.f32.mrb[0].mxu0
        %v795 = vadd.f32 %v700, %v794
        %v796 = vpop.f32.mrb[0].mxu0
        %797 = vmatprep.mubr.bf16.mxu0 0
        %798 = vmatmul.mubr.bf16.gmra.mrb[0].mxu0 %v713
        %v799 = vpop.f32.mrb[0].mxu0
        %v800 = vadd.f32 %v700, %v799
        %v801 = vpop.f32.mrb[0].mxu0
        %v802 = vpop.f32.mrb[0].mxu0
        %v803 = vadd.f32 %v700, %v802
        %v804 = vpop.f32.mrb[0].mxu0
        %805 = vmatprep.mubr.bf16.mxu0 0
        %806 = vmatmul.mubr.bf16.gmra.mrb[0].mxu0 %v716
        %v807 = vpop.f32.mrb[0].mxu0
        %v808 = vadd.f32 %v700, %v807
        %v809 = vpop.f32.mrb[0].mxu0
        %v810 = vpop.f32.mrb[0].mxu0
        %v811 = vadd.f32 %v700, %v810
        %v812 = vpop.f32.mrb[0].mxu0
        %813 = vmatprep.mubr.bf16.mxu0 0
        %814 = vmatmul.mubr.bf16.gmra.mrb[0].mxu0 %v719
        %v815 = vpop.f32.mrb[0].mxu0
        %v816 = vadd.f32 %v700, %v815
        %v817 = vpop.f32.mrb[0].mxu0
        %v818 = vpop.f32.mrb[0].mxu0
        %v819 = vadd.f32 %v700, %v818
        %v820 = vpop.f32.mrb[0].mxu0
        %821 = vmatprep.mubr.bf16.mxu0 0
        %822 = vmatmul.mubr.bf16.gmra.mrb[0].mxu0 %v722
        %v823 = vpop.f32.mrb[0].mxu0
        %v824 = vadd.f32 %v700, %v823
        %v825 = vpop.f32.mrb[0].mxu0
        %v826 = vpop.f32.mrb[0].mxu0
        %v827 = vadd.f32 %v700, %v826
        %v828 = vpop.f32.mrb[0].mxu0
        %829 = vmatprep.mubr.bf16.mxu0 0
        %830 = vmatmul.mubr.bf16.gmra.mrb[0].mxu0 %v725
        %v831 = vpop.f32.mrb[0].mxu0
        %v832 = vadd.f32 %v700, %v831
        %v833 = vpop.f32.mrb[0].mxu0
        %v834 = vpop.f32.mrb[0].mxu0
        %v835 = vadd.f32 %v700, %v834
        %v836 = vpop.f32.mrb[0].mxu0
        %837 = vmatprep.mubr.bf16.mxu0 0
        %838 = vmatmul.mubr.bf16.gmra.mrb[0].mxu0 %v728
        %v839 = vpop.f32.mrb[0].mxu0
        %v840 = vadd.f32 %v700, %v839
        %v841 = vpop.f32.mrb[0].mxu0
        %v842 = vpop.f32.mrb[0].mxu0
        %v843 = vadd.f32 %v700, %v842
        %v844 = vpop.f32.mrb[0].mxu0
        %845 = vmatprep.mubr.bf16.mxu0 0
        %846 = vmatmul.mubr.bf16.gmra.mrb[0].mxu0 %v731
        %v847 = vpop.f32.mrb[0].mxu0
        %v848 = vadd.f32 %v700, %v847
        %v849 = vpop.f32.mrb[0].mxu0
        %v850 = vpop.f32.mrb[0].mxu0
        %v851 = vadd.f32 %v700, %v850
        %v852 = vpop.f32.mrb[0].mxu0
        %853 = vmatprep.mubr.bf16.mxu0 0
        %854 = vmatmul.mubr.bf16.gmra.mrb[0].mxu0 %v734
        %v855 = vpop.f32.mrb[0].mxu0
        %v856 = vadd.f32 %v700, %v855
        %v857 = vpop.f32.mrb[0].mxu0
        %v858 = vpop.f32.mrb[0].mxu0
        %v859 = vadd.f32 %v700, %v858
        %v860 = vpop.f32.mrb[0].mxu0
        %861 = vmatprep.mubr.bf16.mxu0 0
        %862 = vmatmul.mubr.bf16.gmra.mrb[0].mxu0 %v737
        %v863 = vpop.f32.mrb[0].mxu0
        %v864 = vadd.f32 %v700, %v863
        %v865 = vpop.f32.mrb[0].mxu0
        %v866 = vpop.f32.mrb[0].mxu0
        %v867 = vadd.f32 %v700, %v866
        %v868 = vpop.f32.mrb[0].mxu0
        %869 = vmatprep.mubr.bf16.mxu0 0
        %870 = vmatmul.mubr.bf16.gmra.mrb[0].mxu0 %v740
        %v871 = vpop.f32.mrb[0].mxu0
        %v872 = vadd.f32 %v700, %v871
        %v873 = vpop.f32.mrb[0].mxu0
        %v874 = vpop.f32.mrb[0].mxu0
        %v875 = vadd.f32 %v700, %v874
        %v876 = vpop.f32.mrb[0].mxu0
        %877 = vmatprep.mubr.bf16.mxu0 0
        %878 = vmatmul.mubr.bf16.gmra.mrb[0].mxu0 %v743
        %v879 = vpop.f32.mrb[0].mxu0
        %v880 = vadd.f32 %v700, %v879
        %v881 = vpop.f32.mrb[0].mxu0
        %v882 = vpop.f32.mrb[0].mxu0
        %v883 = vadd.f32 %v700, %v882
        %v884 = vpop.f32.mrb[0].mxu0
        %885 = vmatprep.mubr.bf16.mxu0 0
        %886 = vmatmul.mubr.bf16.gmra.mrb[0].mxu0 %v746
        %v887 = vpop.f32.mrb[0].mxu0
        %v888 = vadd.f32 %v700, %v887
        %v889 = vpop.f32.mrb[0].mxu0
        %v890 = vpop.f32.mrb[0].mxu0
        %v891 = vadd.f32 %v700, %v890
        %v892 = vpop.f32.mrb[0].mxu0
        %893 = vmatprep.mubr.bf16.mxu0 0
        %894 = vmatmul.mubr.bf16.gmra.mrb[0].mxu0 %v749
        %v895 = vpop.f32.mrb[0].mxu0
        %v896 = vadd.f32 %v700, %v895
        %v897 = vpop.f32.mrb[0].mxu0
        %v898 = vpop.f32.mrb[0].mxu0
        %v899 = vadd.f32 %v700, %v898
        %v900 = vpop.f32.mrb[0].mxu0
        %901 = vmatprep.mubr.bf16.mxu0 0
        %902 = vmatmul.mubr.bf16.gmra.mrb[0].mxu0 %v752
        %v903 = vpop.f32.mrb[0].mxu0
        %v904 = vadd.f32 %v700, %v903
        %v905 = vpop.f32.mrb[0].mxu0
        %v906 = vpop.f32.mrb[0].mxu0
        %v907 = vadd.f32 %v700, %v906
        %v908 = vpop.f32.mrb[0].mxu0
        %909 = vmatprep.mubr.bf16.mxu0 0
        %910 = vmatmul.mubr.bf16.gmra.mrb[0].mxu0 %v755
        %v911 = vpop.f32.mrb[0].mxu0
        %v912 = vadd.f32 %v700, %v911
        %v913 = vpop.f32.mrb[0].mxu0
        %v914 = vpop.f32.mrb[0].mxu0
        %v915 = vadd.f32 %v700, %v914
        %v916 = vpop.f32.mrb[0].mxu0
        %917 = vdwg.mxu0
        %v918 = vmax.f32 %v792, 0.0
        %v919 = vmax.f32 %v795, 0.0
        %v920 = vmax.f32 %v800, 0.0
        %v921 = vmax.f32 %v803, 0.0
        %v922 = vmax.f32 %v808, 0.0
        %v923 = vmax.f32 %v811, 0.0
        %v924 = vmax.f32 %v816, 0.0
        %v925 = vmax.f32 %v819, 0.0
        %v926 = vmax.f32 %v824, 0.0
        %v927 = vmax.f32 %v827, 0.0
        %v928 = vmax.f32 %v832, 0.0
        %v929 = vmax.f32 %v835, 0.0
        %v930 = vmax.f32 %v840, 0.0
        %v931 = vmax.f32 %v843, 0.0
        %v932 = vmax.f32 %v848, 0.0
        %v933 = vmax.f32 %v851, 0.0
        %v934 = vmax.f32 %v856, 0.0
        %v935 = vmax.f32 %v859, 0.0
        %v936 = vmax.f32 %v864, 0.0
        %v937 = vmax.f32 %v867, 0.0
        %v938 = vmax.f32 %v872, 0.0
        %v939 = vmax.f32 %v875, 0.0
        %v940 = vmax.f32 %v880, 0.0
        %v941 = vmax.f32 %v883, 0.0
        %v942 = vmax.f32 %v888, 0.0
        %v943 = vmax.f32 %v891, 0.0
        %v944 = vmax.f32 %v896, 0.0
        %v945 = vmax.f32 %v899, 0.0
        %v946 = vmax.f32 %v904, 0.0
        %v947 = vmax.f32 %v907, 0.0
        %v948 = vmax.f32 %v912, 0.0
        %v949 = vmax.f32 %v915, 0.0
        %v950 = vpack.c.bf16 %v919, %v918
        %v951 = vpack.c.bf16 %v921, %v920
        %v952 = vpack.c.bf16 %v923, %v922
        %v953 = vpack.c.bf16 %v925, %v924
        %v954 = vpack.c.bf16 %v927, %v926
        %v955 = vpack.c.bf16 %v929, %v928
        %v956 = vpack.c.bf16 %v931, %v930
        %v957 = vpack.c.bf16 %v933, %v932
        %v958 = vpack.c.bf16 %v935, %v934
        %v959 = vpack.c.bf16 %v937, %v936
        %v960 = vpack.c.bf16 %v939, %v938
        %v961 = vpack.c.bf16 %v941, %v940
        %v962 = vpack.c.bf16 %v943, %v942
        %v963 = vpack.c.bf16 %v945, %v944
        %v964 = vpack.c.bf16 %v947, %v946
        %v965 = vpack.c.bf16 %v949, %v948
        %v982 = vunpack.c.l.b16 %v950
        %v983 = vunpack.c.h.b16 %v950
        %v984 = vunpack.c.l.b16 %v951
        %v985 = vunpack.c.h.b16 %v951
        %v986 = vunpack.c.l.b16 %v952
        %v987 = vunpack.c.h.b16 %v952
        %v988 = vunpack.c.l.b16 %v953
        %v989 = vunpack.c.h.b16 %v953
        %v990 = vunpack.c.l.b16 %v954
        %v991 = vunpack.c.h.b16 %v954
        %v992 = vunpack.c.l.b16 %v955
        %v993 = vunpack.c.h.b16 %v955
        %v994 = vunpack.c.l.b16 %v956
        %v995 = vunpack.c.h.b16 %v956
        %v996 = vunpack.c.l.b16 %v957
        %v997 = vunpack.c.h.b16 %v957
        %v998 = vunpack.c.l.b16 %v958
        %v999 = vunpack.c.h.b16 %v958
        %v1000 = vunpack.c.l.b16 %v959
        %v1001 = vunpack.c.h.b16 %v959
        %v1002 = vunpack.c.l.b16 %v960
        %v1003 = vunpack.c.h.b16 %v960
        %v1004 = vunpack.c.l.b16 %v961
        %v1005 = vunpack.c.h.b16 %v961
        %v1006 = vunpack.c.l.b16 %v962
        %v1007 = vunpack.c.h.b16 %v962
        %v1008 = vunpack.c.l.b16 %v963
        %v1009 = vunpack.c.h.b16 %v963
        %v1010 = vunpack.c.l.b16 %v964
        %v1011 = vunpack.c.h.b16 %v964
        %v1012 = vunpack.c.l.b16 %v965
        %v1013 = vunpack.c.h.b16 %v965
        %v1014 = vpack.c.b16 %v982, %v982
        %v1015 = vpack.c.b16 %v983, %v983
        %v1016 = vpack.c.b16 %v984, %v984
        %v1017 = vpack.c.b16 %v985, %v985
        %v1018 = vpack.c.b16 %v986, %v986
        %v1019 = vpack.c.b16 %v987, %v987
        %v1020 = vpack.c.b16 %v988, %v988
        %v1021 = vpack.c.b16 %v989, %v989
        %v1022 = vpack.c.b16 %v990, %v990
        %v1023 = vpack.c.b16 %v991, %v991
        %v1024 = vpack.c.b16 %v992, %v992
        %v1025 = vpack.c.b16 %v993, %v993
        %v1026 = vpack.c.b16 %v994, %v994
        %v1027 = vpack.c.b16 %v995, %v995
        %v1028 = vpack.c.b16 %v996, %v996
        %v1029 = vpack.c.b16 %v997, %v997
        %v1030 = vpack.c.b16 %v998, %v998
        %v1031 = vpack.c.b16 %v999, %v999
        %v1032 = vpack.c.b16 %v1000, %v1000
        %v1033 = vpack.c.b16 %v1001, %v1001
        %v1034 = vpack.c.b16 %v1002, %v1002
        %v1035 = vpack.c.b16 %v1003, %v1003
        %v1036 = vpack.c.b16 %v1004, %v1004
        %v1037 = vpack.c.b16 %v1005, %v1005
        %v1038 = vpack.c.b16 %v1006, %v1006
        %v1039 = vpack.c.b16 %v1007, %v1007
        %v1040 = vpack.c.b16 %v1008, %v1008
        %v1041 = vpack.c.b16 %v1009, %v1009
        %v1042 = vpack.c.b16 %v1010, %v1010
        %v1043 = vpack.c.b16 %v1011, %v1011
        %v1044 = vpack.c.b16 %v1012, %v1012
        %v1045 = vpack.c.b16 %v1013, %v1013
        %vm1078 = vcmask 125952
        %1079 = vst.msk [vmem:[%s296] sm:$0xf] %vm1078, %v1014
        %1080 = vst.msk [vmem:[%s296 + $0x4] sm:$0xf] %vm1078, %v1015
        %1081 = vst.msk [vmem:[%s296 + $0x8] sm:$0xf] %vm1078, %v1016
        %1082 = vst.msk [vmem:[%s296 + $0xc] sm:$0xf] %vm1078, %v1017
        %1083 = vst.msk [vmem:[%s296 + $0x10] sm:$0xf] %vm1078, %v1018
        %1084 = vst.msk [vmem:[%s296 + $0x14] sm:$0xf] %vm1078, %v1019
        %1085 = vst.msk [vmem:[%s296 + $0x18] sm:$0xf] %vm1078, %v1020
        %1086 = vst.msk [vmem:[%s296 + $0x1c] sm:$0xf] %vm1078, %v1021
        %1087 = vst.msk [vmem:[%s296 + $0x20] sm:$0xf] %vm1078, %v1022
        %1088 = vst.msk [vmem:[%s296 + $0x24] sm:$0xf] %vm1078, %v1023
        %1089 = vst.msk [vmem:[%s296 + $0x28] sm:$0xf] %vm1078, %v1024
        %1090 = vst.msk [vmem:[%s296 + $0x2c] sm:$0xf] %vm1078, %v1025
        %1091 = vst.msk [vmem:[%s296 + $0x30] sm:$0xf] %vm1078, %v1026
        %1092 = vst.msk [vmem:[%s296 + $0x34] sm:$0xf] %vm1078, %v1027
        %1093 = vst.msk [vmem:[%s296 + $0x38] sm:$0xf] %vm1078, %v1028
        %1094 = vst.msk [vmem:[%s296 + $0x3c] sm:$0xf] %vm1078, %v1029
        %1095 = vst.msk [vmem:[%s296 + $0x40] sm:$0xf] %vm1078, %v1030
        %1096 = vst.msk [vmem:[%s296 + $0x44] sm:$0xf] %vm1078, %v1031
        %1097 = vst.msk [vmem:[%s296 + $0x48] sm:$0xf] %vm1078, %v1032
        %1098 = vst.msk [vmem:[%s296 + $0x4c] sm:$0xf] %vm1078, %v1033
        %1099 = vst.msk [vmem:[%s296 + $0x50] sm:$0xf] %vm1078, %v1034
        %1100 = vst.msk [vmem:[%s296 + $0x54] sm:$0xf] %vm1078, %v1035
        %1101 = vst.msk [vmem:[%s296 + $0x58] sm:$0xf] %vm1078, %v1036
        %1102 = vst.msk [vmem:[%s296 + $0x5c] sm:$0xf] %vm1078, %v1037
        %1103 = vst.msk [vmem:[%s296 + $0x60] sm:$0xf] %vm1078, %v1038
        %1104 = vst.msk [vmem:[%s296 + $0x64] sm:$0xf] %vm1078, %v1039
        %1105 = vst.msk [vmem:[%s296 + $0x68] sm:$0xf] %vm1078, %v1040
        %1106 = vst.msk [vmem:[%s296 + $0x6c] sm:$0xf] %vm1078, %v1041
        %1107 = vst.msk [vmem:[%s296 + $0x70] sm:$0xf] %vm1078, %v1042
        %1108 = vst.msk [vmem:[%s296 + $0x74] sm:$0xf] %vm1078, %v1043
        %1109 = vst.msk [vmem:[%s296 + $0x78] sm:$0xf] %vm1078, %v1044
        %1110 = vst.msk [vmem:[%s296 + $0x7c] sm:$0xf] %vm1078, %v1045
        %s1111 = sand.u32 %s142, 1
        %s1112 = scalar_lea.sflag [#allocation4], %s1111
        %s1113 = sand.u32 %s142, 1
        %s1114 = smul.addr %s1113, 128
        %s1115 = scalar_lea.vmem [#allocation11], %s1114
        // Predicated region
        $region61: #{_lambda_.3} parent=39 // pred_check
          %p1116 = pneg %p152
        $region62: #{_lambda_.3} parent=39 // pred_check_branch
          %1118 = sbr.rel (%p1116) target = $region64
        $region63: #{_lambda_.3} parent=39 // pred_region
          %s1119 = smul.u32 32, %s24
          %s1121 = ssub.s32 2048, 2048
          %1122 = vsyncadd %s1112, %s1121
          %s1123 = smul.addr %s1119, 64
          %s1124 = scalar_lea.hbm %s5, %s1123
          %s1125 = sshll.u32 %s1115, 4
          %s1126 = int_to_ptr.vmem [resolvable:$true] %s1125
          %1131 = dma.vmem_to_hbm [thread:$0]  %s1126, 2048, %s1124, %s1112, 64, 64, 4
        $region64: #{_lambda_.3} parent=39 // pred_fallthru
          _
      $region40: #{_lambda_.3} parent=5 // pred_fallthru
        _
      %p1132 = scmp.le.s32.totalorder 2, %s19
      // Predicated region
      $region65: #{_lambda_.3} parent=5 // pred_check
        %p1133 = pneg %p1132
      $region66: #{_lambda_.3} parent=5 // pred_check_branch
        %1135 = sbr.rel (%p1133) target = $region68
      $region67: #{_lambda_.3} parent=5 // pred_region
        %s1136 = ssub.s32 %s19, 2
        // Predicated region
        $region69: #{_lambda_.3} parent=67 // pred_check
          %p1137 = pneg %p158
        $region70: #{_lambda_.3} parent=67 // pred_check_branch
          %1139 = sbr.rel (%p1137) target = $region72
        $region71: #{_lambda_.3} parent=67 // pred_region
          %s1140 = sand.u32 %s143, 1
          %s1141 = scalar_lea.sflag [#allocation4], %s1140
          %s1142 = sand.u32 %s143, 1
          %s1143 = smul.addr %s1142, 128
          %s1144 = scalar_lea.vmem [#allocation11], %s1143
          %1145 = dma.done %s1141, 2048
        $region72: #{_lambda_.3} parent=67 // pred_fallthru
          _
      $region68: #{_lambda_.3} parent=5 // pred_fallthru
        _
    $region6: #{_lambda_.3} parent=1 // loop_footer
      %s23 = sadd.s32 1, %s19
    $region7: #{_lambda_.3} parent=1 // loop_footer_branch
      %18 = sbr.rel target = $region3
    $region8: #{_lambda_.3} parent=1 // loop_exit
      _
    %1146 = vsyncpa [#allocation3], 1
    %s1147 = scalar_lea.sflag [#allocation3], 1
    %1148 = vsyncpa %s1147, 1
    %1149 = vsyncpa [#allocation6], 1
    %1150 = vsyncpa [#allocation9], 1
    %1151 = vsyncpa [#allocation4], 1
    %s1152 = scalar_lea.sflag [#allocation4], 1
    %1153 = vsyncpa %s1152, 1

// kernel: _lambda_.4
$region0: #{_lambda_.4}
  #allocation0 [shape = 'u32[]', space=smem, size = 0x4, offset = 0x4, fixed_abs, tag = 'smem constant byte address 0x4 - core index']
  #allocation1 [shape = 'u32[144,128]{1,0:T(1,128)}', space=vmem, size = 0x12000, scoped, tag = 'internal scratch']
  %s0 = inlined_call_operand.hbm [shape: bf16[2,256,16], index: 0, kind: input, shape index: {}]
  %s1 = inlined_call_operand.hbm [shape: bf16[2,8,32], index: 1, kind: input, shape index: {}]
  %s2 = inlined_call_operand.hbm [shape: bf16[32,16], index: 2, kind: input, shape index: {}]
  %s3 = inlined_call_operand.hbm [shape: bf16[32,16], index: 3, kind: input, shape index: {}]
  %s4 = inlined_call_operand.hbm [shape: bf16[2,256,16], index: 4, kind: output, shape index: {}]
  %s5 = sld [smem:[#allocation0]]
  $region65: #{_lambda_.4} parent=0
    _
  %s7 = ssub.s32 1, %s5
  %s8 = scalar_select 0, %s7, %s5
  $region1: #{_lambda_.4} parent=0
    #allocation2 [shape = 'u8[131072]{0}', space=vmem, size = 0x20000, scoped, tag = 'input window, operand 0']
    #allocation3 [shape = 's32[2]{0}', space=sflag, size = 0x8, scoped, tag = 'scoped memory for _lambda_.4']
    #allocation4 [shape = 's32[2]{0}', space=sflag, size = 0x8, scoped, tag = 'scoped memory for _lambda_.4']
    #allocation5 [shape = 'u8[4096]{0}', space=vmem, size = 0x1000, scoped, tag = 'input window, operand 1']
    #allocation6 [shape = 's32[2]{0}', space=sflag, size = 0x8, scoped, tag = 'scoped memory for _lambda_.4']
    #allocation7 [shape = 'u8[8192]{0}', space=vmem, size = 0x2000, scoped, tag = 'input window, operand 2, single buffered']
    #allocation8 [shape = 'u8[8192]{0}', space=vmem, size = 0x2000, scoped, tag = 'input window, operand 3, single buffered']
    #allocation9 [shape = 's32[1]{0}', space=sflag, size = 0x4, scoped, tag = 'scoped memory for _lambda_.4']
    #allocation10 [shape = 'u8[131072]{0}', space=vmem, size = 0x20000, scoped, tag = 'output window, operand 0']
    %9 = vsyncpa [#allocation3], 0
    %s10 = scalar_lea.sflag [#allocation3], 1
    %11 = vsyncpa %s10, 0
    %12 = vsyncpa [#allocation6], 0
    %s13 = scalar_lea.sflag [#allocation6], 1
    %14 = vsyncpa %s13, 0
    %15 = vsyncpa [#allocation9], 0
    %16 = vsyncpa [#allocation4], 0
    %s17 = scalar_lea.sflag [#allocation4], 1
    %18 = vsyncpa %s17, 0
    loop: start=0, step=1, limit=4
    $region2: #{_lambda_.4} parent=1 // loop_pre_header
      _
    $region3: #{_lambda_.4} parent=1 // loop_header
      %s20 = sphi 0, %s24
      %p21 = scmp.ge.s32.totalorder %s20, 4
      %s30 = sphi 0, %s32
      %s33 = sphi 0, %s30
      %s34 = sphi 0, %s33
      %s50 = sphi 0, %s34
      %s56 = sphi 0, %s58
      %s59 = sphi 0, %s56
      %s60 = sphi 0, %s59
      %s76 = sphi 0, %s60
      %s80 = sphi 0, %s80
      %s82 = sphi 0, %s80
      %s83 = sphi 0, %s82
      %s97 = sphi 0, %s83
      %s101 = sphi 0, %s101
      %s103 = sphi 0, %s101
      %s104 = sphi 0, %s103
      %s118 = sphi 0, %s104
      %s124 = sphi 0, %s126
      %s127 = sphi 0, %s124
      %s128 = sphi 0, %s127
      %s144 = sphi 0, %s128
    $region4: #{_lambda_.4} parent=1 // loop_header_branch
      %23 = sbr.rel (%p21) target = $region8
    $region5: #{_lambda_.4} parent=1 // loop_body
      %s25 = ssub.s32 %s20, 1
      %s26 = ssub.s32 %s20, 2
      %s27 = sadd.s32 %s20, 1
      %s28 = ssub.s32 %s20, %s27
      %p29 = scmp.eq.s32.totalorder %s28, 0
      %s31 = sadd.s32 %s30, 1
      %s32 = scalar_select %p29, %s30, %s31
      %p35 = pneg %p29
      %p36 = scmp.eq.s32.totalorder %s20, 1
      %p37 = por %p35, %p36
      %p38 = scmp.ne.s32.totalorder %s30, %s33
      %p39 = scmp.eq.s32.totalorder %s20, 0
      %p40 = por %p38, %p39
      %p41 = scmp.ne.s32.totalorder %s30, %s33
      %p42 = scmp.eq.s32.totalorder %s25, 1
      %p43 = por %p41, %p42
      %p44 = scmp.ne.s32.totalorder %s33, %s34
      %p45 = scmp.eq.s32.totalorder %s25, 0
      %p46 = por %p44, %p45
      %p47 = scmp.ne.s32.totalorder %s33, %s34
      %p48 = scmp.eq.s32.totalorder %s26, 1
      %p49 = por %p47, %p48
      %p51 = scmp.ne.s32.totalorder %s34, %s50
      %p52 = scmp.eq.s32.totalorder %s26, 0
      %p53 = por %p51, %p52
      %s54 = ssub.s32 %s20, %s27
      %p55 = scmp.eq.s32.totalorder %s54, 0
      %s57 = sadd.s32 %s56, 1
      %s58 = scalar_select %p55, %s56, %s57
      %p61 = pneg %p55
      %p62 = scmp.eq.s32.totalorder %s20, 1
      %p63 = por %p61, %p62
      %p64 = scmp.ne.s32.totalorder %s56, %s59
      %p65 = scmp.eq.s32.totalorder %s20, 0
      %p66 = por %p64, %p65
      %p67 = scmp.ne.s32.totalorder %s56, %s59
      %p68 = scmp.eq.s32.totalorder %s25, 1
      %p69 = por %p67, %p68
      %p70 = scmp.ne.s32.totalorder %s59, %s60
      %p71 = scmp.eq.s32.totalorder %s25, 0
      %p72 = por %p70, %p71
      %p73 = scmp.ne.s32.totalorder %s59, %s60
      %p74 = scmp.eq.s32.totalorder %s26, 1
      %p75 = por %p73, %p74
      %p77 = scmp.ne.s32.totalorder %s60, %s76
      %p78 = scmp.eq.s32.totalorder %s26, 0
      %p79 = por %p77, %p78
      %s81 = sadd.s32 %s80, 1
      %p84 = scmp.eq.s32.totalorder %s20, 1
      %p85 = scmp.ne.s32.totalorder %s80, %s82
      %p86 = scmp.eq.s32.totalorder %s20, 0
      %p87 = por %p85, %p86
      %p88 = scmp.ne.s32.totalorder %s80, %s82
      %p89 = scmp.eq.s32.totalorder %s25, 1
      %p90 = por %p88, %p89
      %p91 = scmp.ne.s32.totalorder %s82, %s83
      %p92 = scmp.eq.s32.totalorder %s25, 0
      %p93 = por %p91, %p92
      %p94 = scmp.ne.s32.totalorder %s82, %s83
      %p95 = scmp.eq.s32.totalorder %s26, 1
      %p96 = por %p94, %p95
      %p98 = scmp.ne.s32.totalorder %s83, %s97
      %p99 = scmp.eq.s32.totalorder %s26, 0
      %p100 = por %p98, %p99
      %s102 = sadd.s32 %s101, 1
      %p105 = scmp.eq.s32.totalorder %s20, 1
      %p106 = scmp.ne.s32.totalorder %s101, %s103
      %p107 = scmp.eq.s32.totalorder %s20, 0
      %p108 = por %p106, %p107
      %p109 = scmp.ne.s32.totalorder %s101, %s103
      %p110 = scmp.eq.s32.totalorder %s25, 1
      %p111 = por %p109, %p110
      %p112 = scmp.ne.s32.totalorder %s103, %s104
      %p113 = scmp.eq.s32.totalorder %s25, 0
      %p114 = por %p112, %p113
      %p115 = scmp.ne.s32.totalorder %s103, %s104
      %p116 = scmp.eq.s32.totalorder %s26, 1
      %p117 = por %p115, %p116
      %p119 = scmp.ne.s32.totalorder %s104, %s118
      %p120 = scmp.eq.s32.totalorder %s26, 0
      %p121 = por %p119, %p120
      %s122 = ssub.s32 %s20, %s27
      %p123 = scmp.eq.s32.totalorder %s122, 0
      %s125 = sadd.s32 %s124, 1
      %s126 = scalar_select %p123, %s124, %s125
      %p129 = pneg %p123
      %p130 = scmp.eq.s32.totalorder %s20, 1
      %p131 = por %p129, %p130
      %p132 = scmp.ne.s32.totalorder %s124, %s127
      %p133 = scmp.eq.s32.totalorder %s20, 0
      %p134 = por %p132, %p133
      %p135 = scmp.ne.s32.totalorder %s124, %s127
      %p136 = scmp.eq.s32.totalorder %s25, 1
      %p137 = por %p135, %p136
      %p138 = scmp.ne.s32.totalorder %s127, %s128
      %p139 = scmp.eq.s32.totalorder %s25, 0
      %p140 = por %p138, %p139
      %p141 = scmp.ne.s32.totalorder %s127, %s128
      %p142 = scmp.eq.s32.totalorder %s26, 1
      %p143 = por %p141, %p142
      %p145 = scmp.ne.s32.totalorder %s128, %s144
      %p146 = scmp.eq.s32.totalorder %s26, 0
      %p147 = por %p145, %p146
      %p148 = scmp.le.s32.totalorder 1, %s20
      %p149 = scmp.lt.s32.totalorder %s20, 3
      %p150 = pnand %p148, %p149
      %p151 = pneg %p150
      // Predicated region
      $region9: #{_lambda_.4} parent=5 // pred_check
        _
      $region10: #{_lambda_.4} parent=5 // pred_check_branch
        %153 = sbr.rel (%p150) target = $region12
      $region11: #{_lambda_.4} parent=5 // pred_region
        %s154 = ssub.s32 %s20, 1
        // Predicated region
        $region13: #{_lambda_.4} parent=11 // pred_check
          %p155 = pneg %p93
        $region14: #{_lambda_.4} parent=11 // pred_check_branch
          %157 = sbr.rel (%p155) target = $region16
        $region15: #{_lambda_.4} parent=11 // pred_region
          %s159 = ssub.s32 256, 256
          %160 = vsyncadd [#allocation6], %s159
          %s161 = sshll.u32 [#allocation7], 4
          %s162 = int_to_ptr.vmem [resolvable:$true] %s161
          %167 = dma.hbm_to_vmem [thread:$0]  %s2, 256, %s162, [#allocation6], 64, 64, 4
        $region16: #{_lambda_.4} parent=11 // pred_fallthru
          _
        // Predicated region
        $region17: #{_lambda_.4} parent=11 // pred_check
          %p168 = pneg %p114
        $region18: #{_lambda_.4} parent=11 // pred_check_branch
          %170 = sbr.rel (%p168) target = $region20
        $region19: #{_lambda_.4} parent=11 // pred_region
          %s172 = ssub.s32 256, 256
          %173 = vsyncadd [#allocation9], %s172
          %s174 = sshll.u32 [#allocation8], 4
          %s175 = int_to_ptr.vmem [resolvable:$true] %s174
          %180 = dma.hbm_to_vmem [thread:$0]  %s3, 256, %s175, [#allocation9], 64, 64, 4
        $region20: #{_lambda_.4} parent=11 // pred_fallthru
          _
      $region12: #{_lambda_.4} parent=5 // pred_fallthru
        _
      %p181 = scmp.lt.s32.totalorder %s20, 2
      // Predicated region
      $region21: #{_lambda_.4} parent=5 // pred_check
        %p182 = pneg %p181
      $region22: #{_lambda_.4} parent=5 // pred_check_branch
        %184 = sbr.rel (%p182) target = $region24
      $region23: #{_lambda_.4} parent=5 // pred_region
        // Predicated region
        $region25: #{_lambda_.4} parent=23 // pred_check
          %p185 = pneg %p40
        $region26: #{_lambda_.4} parent=23 // pred_check_branch
          %187 = sbr.rel (%p185) target = $region28
        $region27: #{_lambda_.4} parent=23 // pred_region
          %s188 = sand.u32 %s30, 1
          %s189 = scalar_lea.sflag [#allocation3], %s188
          %s190 = sand.u32 %s30, 1
          %s191 = smul.addr %s190, 128
          %s192 = scalar_lea.vmem [#allocation2], %s191
          %s194 = ssub.s32 2048, 2048
          %195 = vsyncadd %s189, %s194
          %s196 = smul.addr %s20, 32
          %s197 = smul.addr %s196, 64
          %s198 = scalar_lea.hbm %s0, %s197
          %s199 = sshll.u32 %s192, 4
          %s200 = int_to_ptr.vmem [resolvable:$true] %s199
          %205 = dma.hbm_to_vmem [thread:$0]  %s198, 2048, %s200, %s189, 64, 64, 4
        $region28: #{_lambda_.4} parent=23 // pred_fallthru
          _
        // Predicated region
        $region29: #{_lambda_.4} parent=23 // pred_check
          %p206 = pneg %p66
        $region30: #{_lambda_.4} parent=23 // pred_check_branch
          %208 = sbr.rel (%p206) target = $region32
        $region31: #{_lambda_.4} parent=23 // pred_region
          %s209 = sand.u32 %s20, 1
          %s210 = scalar_lea.sflag [#allocation6], %s209
          %s211 = sand.u32 %s56, 1
          %s212 = smul.addr %s211, 4
          %s213 = scalar_lea.vmem [#allocation5], %s212
          %s215 = ssub.s32 64, 64
          %216 = vsyncadd %s210, %s215
          %s217 = smul.addr %s20, 64
          %s218 = scalar_lea.hbm %s1, %s217
          %s220 = sshll.u32 %s213, 4
          %s221 = int_to_ptr.vmem [resolvable:$true] %s220
          %223 = dma.hbm_to_vmem [thread:$0]  %s218, 64, %s221, %s210
        $region32: #{_lambda_.4} parent=23 // pred_fallthru
          _
      $region24: #{_lambda_.4} parent=5 // pred_fallthru
        _
      %p224 = scmp.le.s32.totalorder 1, %s20
      %p225 = scmp.lt.s32.totalorder %s20, 3
      %p226 = pnand %p224, %p225
      %p227 = pneg %p226
      // Predicated region
      $region33: #{_lambda_.4} parent=5 // pred_check
        _
      $region34: #{_lambda_.4} parent=5 // pred_check_branch
        %229 = sbr.rel (%p226) target = $region36
      $region35: #{_lambda_.4} parent=5 // pred_region
        %s230 = ssub.s32 %s20, 1
        %s231 = sand.u32 %s33, 1
        %s232 = scalar_lea.sflag [#allocation3], %s231
        %s233 = sand.u32 %s33, 1
        %s234 = smul.addr %s233, 128
        %s235 = scalar_lea.vmem [#allocation2], %s234
        // Predicated region
        $region37: #{_lambda_.4} parent=35 // pred_check
          %p236 = pneg %p46
        $region38: #{_lambda_.4} parent=35 // pred_check_branch
          %238 = sbr.rel (%p236) target = $region40
        $region39: #{_lambda_.4} parent=35 // pred_region
          %239 = dma.done %s232, 2048
        $region40: #{_lambda_.4} parent=35 // pred_fallthru
          _
        %s240 = sand.u32 %s25, 1
        %s241 = scalar_lea.sflag [#allocation6], %s240
        %s242 = sand.u32 %s59, 1
        %s243 = smul.addr %s242, 4
        %s244 = scalar_lea.vmem [#allocation5], %s243
        // Predicated region
        $region41: #{_lambda_.4} parent=35 // pred_check
          %p245 = pneg %p72
        $region42: #{_lambda_.4} parent=35 // pred_check_branch
          %247 = sbr.rel (%p245) target = $region44
        $region43: #{_lambda_.4} parent=35 // pred_region
          %248 = dma.done %s241, 64
        $region44: #{_lambda_.4} parent=35 // pred_fallthru
          _
        // Predicated region
        $region45: #{_lambda_.4} parent=35 // pred_check
          %p249 = pneg %p93
        $region46: #{_lambda_.4} parent=35 // pred_check_branch
          %251 = sbr.rel (%p249) target = $region48
        $region47: #{_lambda_.4} parent=35 // pred_region
          %252 = dma.done [#allocation6], 256
        $region48: #{_lambda_.4} parent=35 // pred_fallthru
          _
        // Predicated region
        $region49: #{_lambda_.4} parent=35 // pred_check
          %p253 = pneg %p114
        $region50: #{_lambda_.4} parent=35 // pred_check_branch
          %255 = sbr.rel (%p253) target = $region52
        $region51: #{_lambda_.4} parent=35 // pred_region
          %256 = dma.done [#allocation9], 256
        $region52: #{_lambda_.4} parent=35 // pred_fallthru
          _
        %s257 = sand.u32 %s33, 1
        %s258 = scalar_lea.sflag [#allocation3], %s257
        %s259 = sand.u32 %s33, 1
        %s260 = smul.addr %s259, 128
        %s261 = scalar_lea.vmem [#allocation2], %s260
        %p262 = pneg %p46
        %p263 = pneg %p43
        %s264 = sand.u32 %s25, 1
        %s265 = scalar_lea.sflag [#allocation6], %s264
        %s266 = sand.u32 %s59, 1
        %s267 = smul.addr %s266, 4
        %s268 = scalar_lea.vmem [#allocation5], %s267
        %p269 = pneg %p72
        %p270 = pneg %p69
        %p271 = pneg %p93
        %p272 = pneg %p90
        %p273 = pneg %p114
        %p274 = pneg %p111
        %p275 = pneg %p140
        %p276 = pneg %p137
        %s277 = sand.u32 %s127, 1
        %s278 = scalar_lea.sflag [#allocation4], %s277
        %s279 = sand.u32 %s127, 1
        %s280 = smul.addr %s279, 128
        %s281 = scalar_lea.vmem [#allocation10], %s280
        %v283 = vld [vmem:[%s235] sm:$0xf]
        %v284 = vld [vmem:[%s235 + $0x4] sm:$0xf]
        %v285 = vld [vmem:[%s235 + $0x8] sm:$0xf]
        %v286 = vld [vmem:[%s235 + $0xc] sm:$0xf]
        %v287 = vld [vmem:[%s235 + $0x10] sm:$0xf]
        %v288 = vld [vmem:[%s235 + $0x14] sm:$0xf]
        %v289 = vld [vmem:[%s235 + $0x18] sm:$0xf]
        %v290 = vld [vmem:[%s235 + $0x1c] sm:$0xf]
        %v291 = vld [vmem:[%s235 + $0x20] sm:$0xf]
        %v292 = vld [vmem:[%s235 + $0x24] sm:$0xf]
        %v293 = vld [vmem:[%s235 + $0x28] sm:$0xf]
        %v294 = vld [vmem:[%s235 + $0x2c] sm:$0xf]
        %v295 = vld [vmem:[%s235 + $0x30] sm:$0xf]
        %v296 = vld [vmem:[%s235 + $0x34] sm:$0xf]
        %v297 = vld [vmem:[%s235 + $0x38] sm:$0xf]
        %v298 = vld [vmem:[%s235 + $0x3c] sm:$0xf]
        %v299 = vld [vmem:[%s235 + $0x40] sm:$0xf]
        %v300 = vld [vmem:[%s235 + $0x44] sm:$0xf]
        %v301 = vld [vmem:[%s235 + $0x48] sm:$0xf]
        %v302 = vld [vmem:[%s235 + $0x4c] sm:$0xf]
        %v303 = vld [vmem:[%s235 + $0x50] sm:$0xf]
        %v304 = vld [vmem:[%s235 + $0x54] sm:$0xf]
        %v305 = vld [vmem:[%s235 + $0x58] sm:$0xf]
        %v306 = vld [vmem:[%s235 + $0x5c] sm:$0xf]
        %v307 = vld [vmem:[%s235 + $0x60] sm:$0xf]
        %v308 = vld [vmem:[%s235 + $0x64] sm:$0xf]
        %v309 = vld [vmem:[%s235 + $0x68] sm:$0xf]
        %v310 = vld [vmem:[%s235 + $0x6c] sm:$0xf]
        %v311 = vld [vmem:[%s235 + $0x70] sm:$0xf]
        %v312 = vld [vmem:[%s235 + $0x74] sm:$0xf]
        %v313 = vld [vmem:[%s235 + $0x78] sm:$0xf]
        %v314 = vld [vmem:[%s235 + $0x7c] sm:$0xf]
        %v315 = vld [vmem:[%s244] sm:$0xf]
        %v316 = vld [vmem:[#allocation7] sm:$0xf]
        %v317 = vld [vmem:[#allocation7 + $0x4] sm:$0xf]
        %v318 = vld [vmem:[#allocation7 + $0x8] sm:$0xf]
        %v319 = vld [vmem:[#allocation7 + $0xc] sm:$0xf]
        %v324 = vunpack.c.l.b16 %v316
        %v325 = vunpack.c.l.b16 %v317
        %v326 = vunpack.c.l.b16 %v318
        %v327 = vunpack.c.l.b16 %v319
        %v328 = vpack.c.b16 %v325, %v324
        %v329 = vpack.c.b16 %v327, %v326
        %vm332 = vcmask 261120
        %v334 = vsel %vm332, %v315, 0
        %336 = vmatprep.subr.bf16.mxu0 0
        %337 = vmatpush1.bf16.msra.mxu0 %v328
        %338 = vmatprep.subr.bf16.mxu0 0
        %339 = vmatpush1.bf16.msra.mxu0 %v329
        %340 = vmatprep.subr.bf16.mxu0 0
        %341 = vmatpush1.bf16.msra.mxu0 0
        %342 = vmatprep.subr.bf16.mxu0 0
        %343 = vmatpush1.bf16.msra.mxu0 0
        %344 = vmatprep.subr.bf16.mxu0 0
        %345 = vmatpush1.bf16.msra.mxu0 0
        %346 = vmatprep.subr.bf16.mxu0 0
        %347 = vmatpush1.bf16.msra.mxu0 0
        %348 = vmatprep.subr.bf16.mxu0 0
        %349 = vmatpush1.bf16.msra.mxu0 0
        %350 = vmatprep.subr.bf16.mxu0 0
        %351 = vmatpush1.bf16.msra.mxu0 0
        %352 = vmatprep.subr.bf16.mxu0 0
        %353 = vmatpush1.bf16.msra.mxu0 0
        %354 = vmatprep.subr.bf16.mxu0 0
        %355 = vmatpush1.bf16.msra.mxu0 0
        %356 = vmatprep.subr.bf16.mxu0 0
        %357 = vmatpush1.bf16.msra.mxu0 0
        %358 = vmatprep.subr.bf16.mxu0 0
        %359 = vmatpush1.bf16.msra.mxu0 0
        %360 = vmatprep.subr.bf16.mxu0 0
        %361 = vmatpush1.bf16.msra.mxu0 0
        %362 = vmatprep.subr.bf16.mxu0 0
        %363 = vmatpush1.bf16.msra.mxu0 0
        %364 = vmatprep.subr.bf16.mxu0 0
        %365 = vmatpush1.bf16.msra.mxu0 0
        %366 = vmatprep.subr.bf16.mxu0 0
        %367 = vmatpush1.bf16.msra.mxu0 0
        %368 = vmatprep.mubr.bf16.mxu0 0
        %369 = vmatmul.mubr.bf16.gmra.mrb[0].mxu0 %v334
        %v370 = vpop.f32.mrb[0].mxu0
        %v371 = vadd.f32 0.0, %v370
        %v372 = vpop.f32.mrb[0].mxu0
        %v373 = vpop.f32.mrb[0].mxu0
        %v374 = vpop.f32.mrb[0].mxu0
        %375 = vdwg.mxu0
        %v376 = vld [vmem:[#allocation8] sm:$0xf]
        %v377 = vld [vmem:[#allocation8 + $0x4] sm:$0xf]
        %v378 = vld [vmem:[#allocation8 + $0x8] sm:$0xf]
        %v379 = vld [vmem:[#allocation8 + $0xc] sm:$0xf]
        %v384 = vunpack.c.l.b16 %v376
        %v385 = vunpack.c.l.b16 %v377
        %v386 = vunpack.c.l.b16 %v378
        %v387 = vunpack.c.l.b16 %v379
        %v388 = vpack.c.b16 %v385, %v384
        %v389 = vpack.c.b16 %v387, %v386
        %392 = vmatprep.subr.bf16.mxu0 0
        %393 = vmatpush1.bf16.msra.mxu0 %v388
        %394 = vmatprep.subr.bf16.mxu0 0
        %395 = vmatpush1.bf16.msra.mxu0 %v389
        %396 = vmatprep.subr.bf16.mxu0 0
        %397 = vmatpush1.bf16.msra.mxu0 0
        %398 = vmatprep.subr.bf16.mxu0 0
        %399 = vmatpush1.bf16.msra.mxu0 0
        %400 = vmatprep.subr.bf16.mxu0 0
        %401 = vmatpush1.bf16.msra.mxu0 0
        %402 = vmatprep.subr.bf16.mxu0 0
        %403 = vmatpush1.bf16.msra.mxu0 0
        %404 = vmatprep.subr.bf16.mxu0 0
        %405 = vmatpush1.bf16.msra.mxu0 0
        %406 = vmatprep.subr.bf16.mxu0 0
        %407 = vmatpush1.bf16.msra.mxu0 0
        %408 = vmatprep.subr.bf16.mxu0 0
        %409 = vmatpush1.bf16.msra.mxu0 0
        %410 = vmatprep.subr.bf16.mxu0 0
        %411 = vmatpush1.bf16.msra.mxu0 0
        %412 = vmatprep.subr.bf16.mxu0 0
        %413 = vmatpush1.bf16.msra.mxu0 0
        %414 = vmatprep.subr.bf16.mxu0 0
        %415 = vmatpush1.bf16.msra.mxu0 0
        %416 = vmatprep.subr.bf16.mxu0 0
        %417 = vmatpush1.bf16.msra.mxu0 0
        %418 = vmatprep.subr.bf16.mxu0 0
        %419 = vmatpush1.bf16.msra.mxu0 0
        %420 = vmatprep.subr.bf16.mxu0 0
        %421 = vmatpush1.bf16.msra.mxu0 0
        %422 = vmatprep.subr.bf16.mxu0 0
        %423 = vmatpush1.bf16.msra.mxu0 0
        %424 = vmatprep.mubr.bf16.mxu0 0
        %425 = vmatmul.mubr.bf16.gmra.mrb[0].mxu0 %v334
        %v426 = vpop.f32.mrb[0].mxu0
        %v427 = vadd.f32 0.0, %v426
        %v428 = vpop.f32.mrb[0].mxu0
        %v429 = vpop.f32.mrb[0].mxu0
        %v430 = vpop.f32.mrb[0].mxu0
        %431 = vdwg.mxu0
        %v432 = vmul.f32 %v371, 0.25
        %v433 = vpack.c.bf16 %v432, %v432
        %v466 = vunpack.c.l.b16 %v283
        %v467 = vunpack.c.l.b16 %v284
        %v468 = vunpack.c.l.b16 %v285
        %v469 = vunpack.c.l.b16 %v286
        %v470 = vunpack.c.l.b16 %v287
        %v471 = vunpack.c.l.b16 %v288
        %v472 = vunpack.c.l.b16 %v289
        %v473 = vunpack.c.l.b16 %v290
        %v474 = vunpack.c.l.b16 %v291
        %v475 = vunpack.c.l.b16 %v292
        %v476 = vunpack.c.l.b16 %v293
        %v477 = vunpack.c.l.b16 %v294
        %v478 = vunpack.c.l.b16 %v295
        %v479 = vunpack.c.l.b16 %v296
        %v480 = vunpack.c.l.b16 %v297
        %v481 = vunpack.c.l.b16 %v298
        %v482 = vunpack.c.l.b16 %v299
        %v483 = vunpack.c.l.b16 %v300
        %v484 = vunpack.c.l.b16 %v301
        %v485 = vunpack.c.l.b16 %v302
        %v486 = vunpack.c.l.b16 %v303
        %v487 = vunpack.c.l.b16 %v304
        %v488 = vunpack.c.l.b16 %v305
        %v489 = vunpack.c.l.b16 %v306
        %v490 = vunpack.c.l.b16 %v307
        %v491 = vunpack.c.l.b16 %v308
        %v492 = vunpack.c.l.b16 %v309
        %v493 = vunpack.c.l.b16 %v310
        %v494 = vunpack.c.l.b16 %v311
        %v495 = vunpack.c.l.b16 %v312
        %v496 = vunpack.c.l.b16 %v313
        %v497 = vunpack.c.l.b16 %v314
        %v498 = vpack.c.b16 %v467, %v466
        %v499 = vpack.c.b16 %v469, %v468
        %v500 = vpack.c.b16 %v471, %v470
        %v501 = vpack.c.b16 %v473, %v472
        %v502 = vpack.c.b16 %v475, %v474
        %v503 = vpack.c.b16 %v477, %v476
        %v504 = vpack.c.b16 %v479, %v478
        %v505 = vpack.c.b16 %v481, %v480
        %v506 = vpack.c.b16 %v483, %v482
        %v507 = vpack.c.b16 %v485, %v484
        %v508 = vpack.c.b16 %v487, %v486
        %v509 = vpack.c.b16 %v489, %v488
        %v510 = vpack.c.b16 %v491, %v490
        %v511 = vpack.c.b16 %v493, %v492
        %v512 = vpack.c.b16 %v495, %v494
        %v513 = vpack.c.b16 %v497, %v496
        %vm514 = vcmask 130048
        %v516 = vsel %vm514, %v433, 0
        %v519 = vsel %vm514, %v498, 0
        %v522 = vsel %vm514, %v499, 0
        %v525 = vsel %vm514, %v500, 0
        %v528 = vsel %vm514, %v501, 0
        %v531 = vsel %vm514, %v502, 0
        %v534 = vsel %vm514, %v503, 0
        %v537 = vsel %vm514, %v504, 0
        %v540 = vsel %vm514, %v505, 0
        %v543 = vsel %vm514, %v506, 0
        %v546 = vsel %vm514, %v507, 0
        %v549 = vsel %vm514, %v508, 0
        %v552 = vsel %vm514, %v509, 0
        %v555 = vsel %vm514, %v510, 0
        %v558 = vsel %vm514, %v511, 0
        %v561 = vsel %vm514, %v512, 0
        %v564 = vsel %vm514, %v513, 0
        %566 = vmatprep.subr.bf16.mxu0 0
        %567 = vmatpush1.bf16.xpose.msra.mxu0 %v519
        %568 = vmatprep.subr.bf16.mxu0 0
        %569 = vmatpush1.bf16.xpose.msra.mxu0 %v522
        %570 = vmatprep.subr.bf16.mxu0 0
        %571 = vmatpush1.bf16.xpose.msra.mxu0 %v525
        %572 = vmatprep.subr.bf16.mxu0 0
        %573 = vmatpush1.bf16.xpose.msra.mxu0 %v528
        %574 = vmatprep.subr.bf16.mxu0 0
        %575 = vmatpush1.bf16.xpose.msra.mxu0 %v531
        %576 = vmatprep.subr.bf16.mxu0 0
        %577 = vmatpush1.bf16.xpose.msra.mxu0 %v534
        %578 = vmatprep.subr.bf16.mxu0 0
        %579 = vmatpush1.bf16.xpose.msra.mxu0 %v537
        %580 = vmatprep.subr.bf16.mxu0 0
        %581 = vmatpush1.bf16.xpose.msra.mxu0 %v540
        %582 = vmatprep.subr.bf16.mxu0 0
        %583 = vmatpush1.bf16.xpose.msra.mxu0 %v543
        %584 = vmatprep.subr.bf16.mxu0 0
        %585 = vmatpush1.bf16.xpose.msra.mxu0 %v546
        %586 = vmatprep.subr.bf16.mxu0 0
        %587 = vmatpush1.bf16.xpose.msra.mxu0 %v549
        %588 = vmatprep.subr.bf16.mxu0 0
        %589 = vmatpush1.bf16.xpose.msra.mxu0 %v552
        %590 = vmatprep.subr.bf16.mxu0 0
        %591 = vmatpush1.bf16.xpose.msra.mxu0 %v555
        %592 = vmatprep.subr.bf16.mxu0 0
        %593 = vmatpush1.bf16.xpose.msra.mxu0 %v558
        %594 = vmatprep.subr.bf16.mxu0 0
        %595 = vmatpush1.bf16.xpose.msra.mxu0 %v561
        %596 = vmatprep.subr.bf16.mxu0 0
        %597 = vmatpush1.bf16.xpose.msra.mxu0 %v564
        %598 = vmatprep.mubr.bf16.mxu0 0
        %599 = vmatmul.mubr.bf16.gmra.mrb[0].mxu0 %v516
        %v600 = vpop.f32.mrb[0].mxu0
        %v601 = vadd.f32 0.0, %v600
        %v602 = vpop.f32.mrb[0].mxu0
        %v603 = vadd.f32 0.0, %v602
        %v604 = vpop.f32.mrb[0].mxu0
        %v605 = vpop.f32.mrb[0].mxu0
        %606 = vdwg.mxu0
        %v607 = vmax.f32 %v601, %v603
        %608 = vmax.xlane.f32.xlu0 %v607
        %v609 = vpop.xlane.xlu0 %608
        %v610 = vsub.f32 %v601, %v609
        %v611 = vsub.f32 %v603, %v609
        %v612 = vmul.f32 %v610, 1.442695
        %v613 = vpow.pop %v612
        %v614 = vmul.f32 %v611, 1.442695
        %v615 = vpow.pop %v614
        %v616 = vadd.f32 %v613, %v615
        %617 = vadd.xlane.f32.xlu0 %v616
        %v618 = vpop.xlane.xlu0 %617
        %v619 = vrcp.pop %v618
        %v620 = vmul.f32 %v427, %v619
        %v621 = vpack.c.bf16 %v613, %v613
        %v622 = vpack.c.bf16 %v615, %v615
        %v623 = vpack.c.bf16 %v620, %v620
        %624 = vxpose.xlu0.c.b16.start [1/8] %v621, 128
        %625 = vxpose.xlu0.c.b16.cont [2/8] 0, 128
        %626 = vxpose.xlu0.c.b16.cont [3/8] 0, 128
        %627 = vxpose.xlu0.c.b16.cont [4/8] 0, 128
        %628 = vxpose.xlu0.c.b16.cont [5/8] 0, 128
        %629 = vxpose.xlu0.c.b16.cont [6/8] 0, 128
        %630 = vxpose.xlu0.c.b16.cont [7/8] 0, 128
        %631 = vxpose.xlu0.c.b16.end [8/8] 0, 128
        %v632 = vpop.trf.xlu0
        %v633 = vpop.trf.xlu0
        %v634 = vpop.trf.xlu0
        %v635 = vpop.trf.xlu0
        %v636 = vpop.trf.xlu0
        %v637 = vpop.trf.xlu0
        %v638 = vpop.trf.xlu0
        %v639 = vpop.trf.xlu0
        %640 = vxpose.xlu0.c.b16.start [1/8] %v622, 128
        %641 = vxpose.xlu0.c.b16.cont [2/8] 0, 128
        %642 = vxpose.xlu0.c.b16.cont [3/8] 0, 128
        %643 = vxpose.xlu0.c.b16.cont [4/8] 0, 128
        %644 = vxpose.xlu0.c.b16.cont [5/8] 0, 128
        %645 = vxpose.xlu0.c.b16.cont [6/8] 0, 128
        %646 = vxpose.xlu0.c.b16.cont [7/8] 0, 128
        %647 = vxpose.xlu0.c.b16.end [8/8] 0, 128
        %v648 = vpop.trf.xlu0
        %v649 = vpop.trf.xlu0
        %v650 = vpop.trf.xlu0
        %v651 = vpop.trf.xlu0
        %v652 = vpop.trf.xlu0
        %v653 = vpop.trf.xlu0
        %v654 = vpop.trf.xlu0
        %v655 = vpop.trf.xlu0
        %vm656 = vcmask 64512
        %v658 = vsel %vm656, %v632, 0
        %v661 = vsel %vm656, %v633, 0
        %v664 = vsel %vm656, %v634, 0
        %v667 = vsel %vm656, %v635, 0
        %v670 = vsel %vm656, %v636, 0
        %v673 = vsel %vm656, %v637, 0
        %v676 = vsel %vm656, %v638, 0
        %v679 = vsel %vm656, %v639, 0
        %v682 = vsel %vm656, %v648, 0
        %v685 = vsel %vm656, %v649, 0
        %v688 = vsel %vm656, %v650, 0
        %v691 = vsel %vm656, %v651, 0
        %v694 = vsel %vm656, %v652, 0
        %v697 = vsel %vm656, %v653, 0
        %v700 = vsel %vm656, %v654, 0
        %v703 = vsel %vm656, %v655, 0
        %vm705 = vcmask 1043456
        %v707 = vsel %vm705, %v623, 0
        %709 = vmatprep.subr.bf16.mxu0 0
        %710 = vmatpush1.bf16.msra.mxu0 %v707
        %711 = vmatprep.subr.bf16.mxu0 0
        %712 = vmatpush1.bf16.msra.mxu0 0
        %713 = vmatprep.subr.bf16.mxu0 0
        %714 = vmatpush1.bf16.msra.mxu0 0
        %715 = vmatprep.subr.bf16.mxu0 0
        %716 = vmatpush1.bf16.msra.mxu0 0
        %717 = vmatprep.subr.bf16.mxu0 0
        %718 = vmatpush1.bf16.msra.mxu0 0
        %719 = vmatprep.subr.bf16.mxu0 0
        %720 = vmatpush1.bf16.msra.mxu0 0
        %721 = vmatprep.subr.bf16.mxu0 0
        %722 = vmatpush1.bf16.msra.mxu0 0
        %723 = vmatprep.subr.bf16.mxu0 0
        %724 = vmatpush1.bf16.msra.mxu0 0
        %725 = vmatprep.subr.bf16.mxu0 0
        %726 = vmatpush1.bf16.msra.mxu0 0
        %727 = vmatprep.subr.bf16.mxu0 0
        %728 = vmatpush1.bf16.msra.mxu0 0
        %729 = vmatprep.subr.bf16.mxu0 0
        %730 = vmatpush1.bf16.msra.mxu0 0
        %731 = vmatprep.subr.bf16.mxu0 0
        %732 = vmatpush1.bf16.msra.mxu0 0
        %733 = vmatprep.subr.bf16.mxu0 0
        %734 = vmatpush1.bf16.msra.mxu0 0
        %735 = vmatprep.subr.bf16.mxu0 0
        %736 = vmatpush1.bf16.msra.mxu0 0
        %737 = vmatprep.subr.bf16.mxu0 0
        %738 = vmatpush1.bf16.msra.mxu0 0
        %739 = vmatprep.subr.bf16.mxu0 0
        %740 = vmatpush1.bf16.msra.mxu0 0
        %741 = vmatprep.mubr.bf16.mxu0 0
        %742 = vmatmul.mubr.bf16.gmra.mrb[0].mxu0 %v658
        %v743 = vpop.f32.mrb[0].mxu0
        %v744 = vadd.f32 0.0, %v743
        %v745 = vpop.f32.mrb[0].mxu0
        %v746 = vpop.f32.mrb[0].mxu0
        %v747 = vadd.f32 0.0, %v746
        %v748 = vpop.f32.mrb[0].mxu0
        %749 = vmatprep.mubr.bf16.mxu0 0
        %750 = vmatmul.mubr.bf16.gmra.mrb[0].mxu0 %v661
        %v751 = vpop.f32.mrb[0].mxu0
        %v752 = vadd.f32 0.0, %v751
        %v753 = vpop.f32.mrb[0].mxu0
        %v754 = vpop.f32.mrb[0].mxu0
        %v755 = vadd.f32 0.0, %v754
        %v756 = vpop.f32.mrb[0].mxu0
        %757 = vmatprep.mubr.bf16.mxu0 0
        %758 = vmatmul.mubr.bf16.gmra.mrb[0].mxu0 %v664
        %v759 = vpop.f32.mrb[0].mxu0
        %v760 = vadd.f32 0.0, %v759
        %v761 = vpop.f32.mrb[0].mxu0
        %v762 = vpop.f32.mrb[0].mxu0
        %v763 = vadd.f32 0.0, %v762
        %v764 = vpop.f32.mrb[0].mxu0
        %765 = vmatprep.mubr.bf16.mxu0 0
        %766 = vmatmul.mubr.bf16.gmra.mrb[0].mxu0 %v667
        %v767 = vpop.f32.mrb[0].mxu0
        %v768 = vadd.f32 0.0, %v767
        %v769 = vpop.f32.mrb[0].mxu0
        %v770 = vpop.f32.mrb[0].mxu0
        %v771 = vadd.f32 0.0, %v770
        %v772 = vpop.f32.mrb[0].mxu0
        %773 = vmatprep.mubr.bf16.mxu0 0
        %774 = vmatmul.mubr.bf16.gmra.mrb[0].mxu0 %v670
        %v775 = vpop.f32.mrb[0].mxu0
        %v776 = vadd.f32 0.0, %v775
        %v777 = vpop.f32.mrb[0].mxu0
        %v778 = vpop.f32.mrb[0].mxu0
        %v779 = vadd.f32 0.0, %v778
        %v780 = vpop.f32.mrb[0].mxu0
        %781 = vmatprep.mubr.bf16.mxu0 0
        %782 = vmatmul.mubr.bf16.gmra.mrb[0].mxu0 %v673
        %v783 = vpop.f32.mrb[0].mxu0
        %v784 = vadd.f32 0.0, %v783
        %v785 = vpop.f32.mrb[0].mxu0
        %v786 = vpop.f32.mrb[0].mxu0
        %v787 = vadd.f32 0.0, %v786
        %v788 = vpop.f32.mrb[0].mxu0
        %789 = vmatprep.mubr.bf16.mxu0 0
        %790 = vmatmul.mubr.bf16.gmra.mrb[0].mxu0 %v676
        %v791 = vpop.f32.mrb[0].mxu0
        %v792 = vadd.f32 0.0, %v791
        %v793 = vpop.f32.mrb[0].mxu0
        %v794 = vpop.f32.mrb[0].mxu0
        %v795 = vadd.f32 0.0, %v794
        %v796 = vpop.f32.mrb[0].mxu0
        %797 = vmatprep.mubr.bf16.mxu0 0
        %798 = vmatmul.mubr.bf16.gmra.mrb[0].mxu0 %v679
        %v799 = vpop.f32.mrb[0].mxu0
        %v800 = vadd.f32 0.0, %v799
        %v801 = vpop.f32.mrb[0].mxu0
        %v802 = vpop.f32.mrb[0].mxu0
        %v803 = vadd.f32 0.0, %v802
        %v804 = vpop.f32.mrb[0].mxu0
        %805 = vmatprep.mubr.bf16.mxu0 0
        %806 = vmatmul.mubr.bf16.gmra.mrb[0].mxu0 %v682
        %v807 = vpop.f32.mrb[0].mxu0
        %v808 = vadd.f32 0.0, %v807
        %v809 = vpop.f32.mrb[0].mxu0
        %v810 = vpop.f32.mrb[0].mxu0
        %v811 = vadd.f32 0.0, %v810
        %v812 = vpop.f32.mrb[0].mxu0
        %813 = vmatprep.mubr.bf16.mxu0 0
        %814 = vmatmul.mubr.bf16.gmra.mrb[0].mxu0 %v685
        %v815 = vpop.f32.mrb[0].mxu0
        %v816 = vadd.f32 0.0, %v815
        %v817 = vpop.f32.mrb[0].mxu0
        %v818 = vpop.f32.mrb[0].mxu0
        %v819 = vadd.f32 0.0, %v818
        %v820 = vpop.f32.mrb[0].mxu0
        %821 = vmatprep.mubr.bf16.mxu0 0
        %822 = vmatmul.mubr.bf16.gmra.mrb[0].mxu0 %v688
        %v823 = vpop.f32.mrb[0].mxu0
        %v824 = vadd.f32 0.0, %v823
        %v825 = vpop.f32.mrb[0].mxu0
        %v826 = vpop.f32.mrb[0].mxu0
        %v827 = vadd.f32 0.0, %v826
        %v828 = vpop.f32.mrb[0].mxu0
        %829 = vmatprep.mubr.bf16.mxu0 0
        %830 = vmatmul.mubr.bf16.gmra.mrb[0].mxu0 %v691
        %v831 = vpop.f32.mrb[0].mxu0
        %v832 = vadd.f32 0.0, %v831
        %v833 = vpop.f32.mrb[0].mxu0
        %v834 = vpop.f32.mrb[0].mxu0
        %v835 = vadd.f32 0.0, %v834
        %v836 = vpop.f32.mrb[0].mxu0
        %837 = vmatprep.mubr.bf16.mxu0 0
        %838 = vmatmul.mubr.bf16.gmra.mrb[0].mxu0 %v694
        %v839 = vpop.f32.mrb[0].mxu0
        %v840 = vadd.f32 0.0, %v839
        %v841 = vpop.f32.mrb[0].mxu0
        %v842 = vpop.f32.mrb[0].mxu0
        %v843 = vadd.f32 0.0, %v842
        %v844 = vpop.f32.mrb[0].mxu0
        %845 = vmatprep.mubr.bf16.mxu0 0
        %846 = vmatmul.mubr.bf16.gmra.mrb[0].mxu0 %v697
        %v847 = vpop.f32.mrb[0].mxu0
        %v848 = vadd.f32 0.0, %v847
        %v849 = vpop.f32.mrb[0].mxu0
        %v850 = vpop.f32.mrb[0].mxu0
        %v851 = vadd.f32 0.0, %v850
        %v852 = vpop.f32.mrb[0].mxu0
        %853 = vmatprep.mubr.bf16.mxu0 0
        %854 = vmatmul.mubr.bf16.gmra.mrb[0].mxu0 %v700
        %v855 = vpop.f32.mrb[0].mxu0
        %v856 = vadd.f32 0.0, %v855
        %v857 = vpop.f32.mrb[0].mxu0
        %v858 = vpop.f32.mrb[0].mxu0
        %v859 = vadd.f32 0.0, %v858
        %v860 = vpop.f32.mrb[0].mxu0
        %861 = vmatprep.mubr.bf16.mxu0 0
        %862 = vmatmul.mubr.bf16.gmra.mrb[0].mxu0 %v703
        %v863 = vpop.f32.mrb[0].mxu0
        %v864 = vadd.f32 0.0, %v863
        %v865 = vpop.f32.mrb[0].mxu0
        %v866 = vpop.f32.mrb[0].mxu0
        %v867 = vadd.f32 0.0, %v866
        %v868 = vpop.f32.mrb[0].mxu0
        %869 = vdwg.mxu0
        %v870 = vpack.c.bf16 %v747, %v744
        %v871 = vpack.c.bf16 %v755, %v752
        %v872 = vpack.c.bf16 %v763, %v760
        %v873 = vpack.c.bf16 %v771, %v768
        %v874 = vpack.c.bf16 %v779, %v776
        %v875 = vpack.c.bf16 %v787, %v784
        %v876 = vpack.c.bf16 %v795, %v792
        %v877 = vpack.c.bf16 %v803, %v800
        %v878 = vpack.c.bf16 %v811, %v808
        %v879 = vpack.c.bf16 %v819, %v816
        %v880 = vpack.c.bf16 %v827, %v824
        %v881 = vpack.c.bf16 %v835, %v832
        %v882 = vpack.c.bf16 %v843, %v840
        %v883 = vpack.c.bf16 %v851, %v848
        %v884 = vpack.c.bf16 %v859, %v856
        %v885 = vpack.c.bf16 %v867, %v864
        %v902 = vunpack.c.l.b16 %v870
        %v903 = vunpack.c.h.b16 %v870
        %v904 = vunpack.c.l.b16 %v871
        %v905 = vunpack.c.h.b16 %v871
        %v906 = vunpack.c.l.b16 %v872
        %v907 = vunpack.c.h.b16 %v872
        %v908 = vunpack.c.l.b16 %v873
        %v909 = vunpack.c.h.b16 %v873
        %v910 = vunpack.c.l.b16 %v874
        %v911 = vunpack.c.h.b16 %v874
        %v912 = vunpack.c.l.b16 %v875
        %v913 = vunpack.c.h.b16 %v875
        %v914 = vunpack.c.l.b16 %v876
        %v915 = vunpack.c.h.b16 %v876
        %v916 = vunpack.c.l.b16 %v877
        %v917 = vunpack.c.h.b16 %v877
        %v918 = vunpack.c.l.b16 %v878
        %v919 = vunpack.c.h.b16 %v878
        %v920 = vunpack.c.l.b16 %v879
        %v921 = vunpack.c.h.b16 %v879
        %v922 = vunpack.c.l.b16 %v880
        %v923 = vunpack.c.h.b16 %v880
        %v924 = vunpack.c.l.b16 %v881
        %v925 = vunpack.c.h.b16 %v881
        %v926 = vunpack.c.l.b16 %v882
        %v927 = vunpack.c.h.b16 %v882
        %v928 = vunpack.c.l.b16 %v883
        %v929 = vunpack.c.h.b16 %v883
        %v930 = vunpack.c.l.b16 %v884
        %v931 = vunpack.c.h.b16 %v884
        %v932 = vunpack.c.l.b16 %v885
        %v933 = vunpack.c.h.b16 %v885
        %v934 = vpack.c.b16 %v902, %v902
        %v935 = vpack.c.b16 %v903, %v903
        %v936 = vpack.c.b16 %v904, %v904
        %v937 = vpack.c.b16 %v905, %v905
        %v938 = vpack.c.b16 %v906, %v906
        %v939 = vpack.c.b16 %v907, %v907
        %v940 = vpack.c.b16 %v908, %v908
        %v941 = vpack.c.b16 %v909, %v909
        %v942 = vpack.c.b16 %v910, %v910
        %v943 = vpack.c.b16 %v911, %v911
        %v944 = vpack.c.b16 %v912, %v912
        %v945 = vpack.c.b16 %v913, %v913
        %v946 = vpack.c.b16 %v914, %v914
        %v947 = vpack.c.b16 %v915, %v915
        %v948 = vpack.c.b16 %v916, %v916
        %v949 = vpack.c.b16 %v917, %v917
        %v950 = vpack.c.b16 %v918, %v918
        %v951 = vpack.c.b16 %v919, %v919
        %v952 = vpack.c.b16 %v920, %v920
        %v953 = vpack.c.b16 %v921, %v921
        %v954 = vpack.c.b16 %v922, %v922
        %v955 = vpack.c.b16 %v923, %v923
        %v956 = vpack.c.b16 %v924, %v924
        %v957 = vpack.c.b16 %v925, %v925
        %v958 = vpack.c.b16 %v926, %v926
        %v959 = vpack.c.b16 %v927, %v927
        %v960 = vpack.c.b16 %v928, %v928
        %v961 = vpack.c.b16 %v929, %v929
        %v962 = vpack.c.b16 %v930, %v930
        %v963 = vpack.c.b16 %v931, %v931
        %v964 = vpack.c.b16 %v932, %v932
        %v965 = vpack.c.b16 %v933, %v933
        %vm998 = vcmask 125952
        %999 = vst.msk [vmem:[%s281] sm:$0xf] %vm998, %v934
        %1000 = vst.msk [vmem:[%s281 + $0x4] sm:$0xf] %vm998, %v935
        %1001 = vst.msk [vmem:[%s281 + $0x8] sm:$0xf] %vm998, %v936
        %1002 = vst.msk [vmem:[%s281 + $0xc] sm:$0xf] %vm998, %v937
        %1003 = vst.msk [vmem:[%s281 + $0x10] sm:$0xf] %vm998, %v938
        %1004 = vst.msk [vmem:[%s281 + $0x14] sm:$0xf] %vm998, %v939
        %1005 = vst.msk [vmem:[%s281 + $0x18] sm:$0xf] %vm998, %v940
        %1006 = vst.msk [vmem:[%s281 + $0x1c] sm:$0xf] %vm998, %v941
        %1007 = vst.msk [vmem:[%s281 + $0x20] sm:$0xf] %vm998, %v942
        %1008 = vst.msk [vmem:[%s281 + $0x24] sm:$0xf] %vm998, %v943
        %1009 = vst.msk [vmem:[%s281 + $0x28] sm:$0xf] %vm998, %v944
        %1010 = vst.msk [vmem:[%s281 + $0x2c] sm:$0xf] %vm998, %v945
        %1011 = vst.msk [vmem:[%s281 + $0x30] sm:$0xf] %vm998, %v946
        %1012 = vst.msk [vmem:[%s281 + $0x34] sm:$0xf] %vm998, %v947
        %1013 = vst.msk [vmem:[%s281 + $0x38] sm:$0xf] %vm998, %v948
        %1014 = vst.msk [vmem:[%s281 + $0x3c] sm:$0xf] %vm998, %v949
        %1015 = vst.msk [vmem:[%s281 + $0x40] sm:$0xf] %vm998, %v950
        %1016 = vst.msk [vmem:[%s281 + $0x44] sm:$0xf] %vm998, %v951
        %1017 = vst.msk [vmem:[%s281 + $0x48] sm:$0xf] %vm998, %v952
        %1018 = vst.msk [vmem:[%s281 + $0x4c] sm:$0xf] %vm998, %v953
        %1019 = vst.msk [vmem:[%s281 + $0x50] sm:$0xf] %vm998, %v954
        %1020 = vst.msk [vmem:[%s281 + $0x54] sm:$0xf] %vm998, %v955
        %1021 = vst.msk [vmem:[%s281 + $0x58] sm:$0xf] %vm998, %v956
        %1022 = vst.msk [vmem:[%s281 + $0x5c] sm:$0xf] %vm998, %v957
        %1023 = vst.msk [vmem:[%s281 + $0x60] sm:$0xf] %vm998, %v958
        %1024 = vst.msk [vmem:[%s281 + $0x64] sm:$0xf] %vm998, %v959
        %1025 = vst.msk [vmem:[%s281 + $0x68] sm:$0xf] %vm998, %v960
        %1026 = vst.msk [vmem:[%s281 + $0x6c] sm:$0xf] %vm998, %v961
        %1027 = vst.msk [vmem:[%s281 + $0x70] sm:$0xf] %vm998, %v962
        %1028 = vst.msk [vmem:[%s281 + $0x74] sm:$0xf] %vm998, %v963
        %1029 = vst.msk [vmem:[%s281 + $0x78] sm:$0xf] %vm998, %v964
        %1030 = vst.msk [vmem:[%s281 + $0x7c] sm:$0xf] %vm998, %v965
        %s1031 = sand.u32 %s127, 1
        %s1032 = scalar_lea.sflag [#allocation4], %s1031
        %s1033 = sand.u32 %s127, 1
        %s1034 = smul.addr %s1033, 128
        %s1035 = scalar_lea.vmem [#allocation10], %s1034
        // Predicated region
        $region53: #{_lambda_.4} parent=35 // pred_check
          %p1036 = pneg %p137
        $region54: #{_lambda_.4} parent=35 // pred_check_branch
          %1038 = sbr.rel (%p1036) target = $region56
        $region55: #{_lambda_.4} parent=35 // pred_region
          %s1040 = ssub.s32 2048, 2048
          %1041 = vsyncadd %s1032, %s1040
          %s1042 = smul.addr %s25, 32
          %s1043 = smul.addr %s1042, 64
          %s1044 = scalar_lea.hbm %s4, %s1043
          %s1045 = sshll.u32 %s1035, 4
          %s1046 = int_to_ptr.vmem [resolvable:$true] %s1045
          %1051 = dma.vmem_to_hbm [thread:$0]  %s1046, 2048, %s1044, %s1032, 64, 64, 4
        $region56: #{_lambda_.4} parent=35 // pred_fallthru
          _
      $region36: #{_lambda_.4} parent=5 // pred_fallthru
        _
      %p1052 = scmp.le.s32.totalorder 2, %s20
      // Predicated region
      $region57: #{_lambda_.4} parent=5 // pred_check
        %p1053 = pneg %p1052
      $region58: #{_lambda_.4} parent=5 // pred_check_branch
        %1055 = sbr.rel (%p1053) target = $region60
      $region59: #{_lambda_.4} parent=5 // pred_region
        %s1056 = ssub.s32 %s20, 2
        // Predicated region
        $region61: #{_lambda_.4} parent=59 // pred_check
          %p1057 = pneg %p143
        $region62: #{_lambda_.4} parent=59 // pred_check_branch
          %1059 = sbr.rel (%p1057) target = $region64
        $region63: #{_lambda_.4} parent=59 // pred_region
          %s1060 = sand.u32 %s128, 1
          %s1061 = scalar_lea.sflag [#allocation4], %s1060
          %s1062 = sand.u32 %s128, 1
          %s1063 = smul.addr %s1062, 128
          %s1064 = scalar_lea.vmem [#allocation10], %s1063
          %1065 = dma.done %s1061, 2048
        $region64: #{_lambda_.4} parent=59 // pred_fallthru
          _
      $region60: #{_lambda_.4} parent=5 // pred_fallthru
        _
    $region6: #{_lambda_.4} parent=1 // loop_footer
      %s24 = sadd.s32 1, %s20
    $region7: #{_lambda_.4} parent=1 // loop_footer_branch
      %19 = sbr.rel target = $region3
    $region8: #{_lambda_.4} parent=1 // loop_exit
      _
    %1066 = vsyncpa [#allocation3], 1
    %s1067 = scalar_lea.sflag [#allocation3], 1
    %1068 = vsyncpa %s1067, 1
    %1069 = vsyncpa [#allocation6], 1
    %s1070 = scalar_lea.sflag [#allocation6], 1
    %1071 = vsyncpa %s1070, 1
    %1072 = vsyncpa [#allocation9], 1
    %1073 = vsyncpa [#allocation4], 1
    %s1074 = scalar_lea.sflag [#allocation4], 1
    %1075 = vsyncpa %s1074, 1

</llo_original>
